<compile_context>
chip_gen: v7x
topology: tpu7x:2x2x1
jax: 0.10.0
libtpu: 0.0.40
codegen_flags: <defaults>
</compile_context>

<pallas_src>
import functools
import math

import jax
import jax.numpy as jnp
from jax.experimental import pallas as pl
from jax.experimental.pallas import tpu as pltpu


def conv_out_len(n, k, s, p=0):
    return math.floor((n + 2 * p - k) / s + 1)


# ----------------------------- fused Pallas kernel --------------------------------


def _wake_word_kernel(xcol_ref, w1_ref, s1_ref, sel1_ref, w2_ref, s2_ref,
                      rsel_ref, wfc1_ref, bfc1_ref, wfc2_ref, bfc2_ref,
                      out_ref, *, B, T, T1, T2):
    NT = B * T              # conv1 output rows (batch concatenated along time)
    NP = B * (T1 + 2)       # pool1 output rows, zero-pad row per sample boundary
    NH2 = NP - 2            # conv2 output rows
    NM2 = NH2 - 2           # pool2 window-max rows

    # ---- Conv1 (BN scale folded into weights) + shift + ReLU : (NT, 64) ----
    h1 = jnp.dot(xcol_ref[...], w1_ref[...], preferred_element_type=jnp.float32)
    h1 = jnp.maximum(h1 + s1_ref[...], 0.0)

    # ---- MaxPool1: window max over time (rows) ----
    m1 = jnp.maximum(jnp.maximum(h1[0:NT - 2, :], h1[1:NT - 1, :]), h1[2:NT, :])

    # ---- stride-2 downsample + per-sample zero-pad row insertion (exact 0/1 matmul) ----
    p1p = jnp.dot(sel1_ref[...], m1, preferred_element_type=jnp.float32)      # (NP, 64)

    # ---- Conv2: 3-tap accumulation on pre-padded rows (no in-kernel jnp.pad) ----
    h2 = jnp.dot(p1p[0:NH2, :], w2_ref[0], preferred_element_type=jnp.float32)
    h2 = h2 + jnp.dot(p1p[1:NH2 + 1, :], w2_ref[1], preferred_element_type=jnp.float32)
    h2 = h2 + jnp.dot(p1p[2:NH2 + 2, :], w2_ref[2], preferred_element_type=jnp.float32)
    h2 = jnp.maximum(h2 + s2_ref[...], 0.0)                                    # (NH2, 64)

    # ---- MaxPool2: window max ----
    m2 = jnp.maximum(jnp.maximum(h2[0:NM2, :], h2[1:NM2 + 1, :]), h2[2:NM2 + 2, :])

    # ---- Pool2 stride-2 selection + channel-major flatten + FC1, fused ----
    # acc[b, o] = sum_t sum_c m2[b*(T1+2)+2t, c] * fc1_w[o, c*T2 + t]
    acc = jnp.zeros((B, 128), jnp.float32)
    for t in range(T2):
        rows_t = jnp.dot(rsel_ref[t], m2, preferred_element_type=jnp.float32)      # (B, 64)
        acc = acc + jnp.dot(rows_t, wfc1_ref[t], preferred_element_type=jnp.float32)
    h = jnp.maximum(acc + bfc1_ref[...], 0.0)                                       # (B, 128)

    # ---- FC2 as VPU multiply + lane reduction, then sigmoid ----
    logits = jnp.sum(h * wfc2_ref[...], axis=1, keepdims=True) + bfc2_ref[...]      # (B, 1)
    out_ref[...] = 1.0 / (1.0 + jnp.exp(-logits))


# ----------------------------- wrapper --------------------------------------------


def wake_word_forward(x, params):
    B, C_in, T = x.shape
    T1 = conv_out_len(T, 3, 2)
    T2 = conv_out_len(T1, 3, 2)
    eps = 1e-5
    f32 = jnp.float32

    # Fold BatchNorm (eval mode) into conv weights + per-channel shift.
    s1 = params["g1"] / jnp.sqrt(params["v1"] + eps)
    shift1 = (params["be1"] + s1 * (params["b1"] - params["m1"])).reshape(1, 64).astype(f32)
    w1f = (params["w1"] * s1[:, None, None]).astype(f32)                 # (64, C_in, 3)
    w1col = jnp.transpose(w1f, (2, 1, 0)).reshape(3 * C_in, 64)          # [k*C_in+c, o]

    s2 = params["g2"] / jnp.sqrt(params["v2"] + eps)
    shift2 = (params["be2"] + s2 * (params["b2"] - params["m2"])).reshape(1, 64).astype(f32)
    w2f = (params["w2"] * s2[:, None, None]).astype(f32)                 # (64, 64, 3)
    w2taps = jnp.transpose(w2f, (2, 1, 0))                               # (3, c_in, c_out)

    # Conv1 im2col (per-sample zero pad), batch concatenated along time rows.
    xpad = jnp.pad(x.astype(f32), ((0, 0), (0, 0), (1, 1)))              # (B, C_in, T+2)
    cols = jnp.stack([xpad[:, :, k:k + T] for k in range(3)], axis=1)    # (B, 3, C_in, T)
    xcol = jnp.transpose(cols, (0, 3, 1, 2)).reshape(B * T, 3 * C_in)    # [b*T+t, k*C_in+c]

    # Pool1 selection matrix: stride-2 pick of window maxes, zero-pad rows at each
    # sample boundary so conv2 reads already-padded rows.
    np_rows = B * (T1 + 2)
    j = jnp.arange(np_rows)
    b_of_j = j // (T1 + 2)
    u = j % (T1 + 2)
    valid = (u >= 1) & (u <= T1)
    target = b_of_j * T + 2 * (u - 1)
    r = jnp.arange(B * T - 2)
    sel1 = (valid[:, None] & (r[None, :] == target[:, None])).astype(f32)   # (NP, B*T-2)

    # Pool2 row-selection: rsel[t, b, k] = 1 iff k == b*(T1+2) + 2*t.
    nm2 = np_rows - 4
    tt = jnp.arange(T2)[:, None, None]
    bb = jnp.arange(B)[None, :, None]
    kk = jnp.arange(nm2)[None, None, :]
    rsel = (kk == bb * (T1 + 2) + 2 * tt).astype(f32)                       # (T2, B, nm2)

    # FC1 weights regrouped per pooled time step: wfc1[t, c, o] = fc1_w[o, c*T2 + t]
    # (matches torch's channel-major flatten of the pooled activations).
    wfc1 = jnp.transpose(params["fc1_w"].astype(f32).reshape(128, 64, T2), (2, 1, 0))
    bfc1 = params["fc1_b"].reshape(1, 128).astype(f32)
    wfc2 = params["fc2_w"].reshape(1, 128).astype(f32)
    bfc2 = params["fc2_b"].reshape(1, 1).astype(f32)

    kernel = functools.partial(_wake_word_kernel, B=B, T=T, T1=T1, T2=T2)

    return pl.pallas_call(
        kernel,
        out_shape=jax.ShapeDtypeStruct((B, 1), jnp.float32),
        grid=(1,),
        in_specs=[
            pl.BlockSpec((B * T, 3 * C_in), lambda i: (0, 0)),
            pl.BlockSpec((3 * C_in, 64), lambda i: (0, 0)),
            pl.BlockSpec((1, 64), lambda i: (0, 0)),
            pl.BlockSpec((np_rows, B * T - 2), lambda i: (0, 0)),
            pl.BlockSpec((3, 64, 64), lambda i: (0, 0, 0)),
            pl.BlockSpec((1, 64), lambda i: (0, 0)),
            pl.BlockSpec((T2, B, nm2), lambda i: (0, 0, 0)),
            pl.BlockSpec((T2, 64, 128), lambda i: (0, 0, 0)),
            pl.BlockSpec((1, 128), lambda i: (0, 0)),
            pl.BlockSpec((1, 128), lambda i: (0, 0)),
            pl.BlockSpec((1, 1), lambda i: (0, 0)),
        ],
        out_specs=pl.BlockSpec((B, 1), lambda i: (0, 0)),
        compiler_params=pltpu.CompilerParams(dimension_semantics=("arbitrary",)),
    )(xcol, w1col, shift1, sel1, w2taps, shift2, rsel, wfc1, bfc1, wfc2, bfc2)


# ----------------------------- pure-JAX reference ----------------------------------


def reference_forward(x, p):
    eps = 1e-5

    def conv1d(x, w, b):
        B, Ci, T = x.shape
        xp = jnp.pad(x, ((0, 0), (0, 0), (1, 1)))
        out = jnp.zeros((B, w.shape[0], T), jnp.float32)
        for k in range(3):
            out = out + jnp.einsum("oc,bct->bot", w[:, :, k], xp[:, :, k:k + T])
        return out + b[None, :, None]

    def bn(x, g, be, m, v):
        return g[None, :, None] * (x - m[None, :, None]) / jnp.sqrt(v[None, :, None] + eps) + be[None, :, None]

    def maxpool(x):
        T = x.shape[-1]
        To = (T - 3) // 2 + 1
        return jnp.stack([x[..., 2 * t:2 * t + 3].max(-1) for t in range(To)], axis=-1)

    h = maxpool(jax.nn.relu(bn(conv1d(x, p["w1"], p["b1"]), p["g1"], p["be1"], p["m1"], p["v1"])))
    h = maxpool(jax.nn.relu(bn(conv1d(h, p["w2"], p["b2"]), p["g2"], p["be2"], p["m2"], p["v2"])))
    h = h.reshape(x.shape[0], -1)
    h = jax.nn.relu(h @ p["fc1_w"].T + p["fc1_b"])
    o = h @ p["fc2_w"].T + p["fc2_b"]
    return jax.nn.sigmoid(o)


# ----------------------------- main -------------------------------------------------

if __name__ == "__main__":
    B, n_mfcc, num_frames = 2, 13, 49
    T1 = conv_out_len(num_frames, 3, 2)
    T2 = conv_out_len(T1, 3, 2)
    fc_in = 64 * T2

    key = jax.random.PRNGKey(0)
    ks = jax.random.split(key, 16)

    params = {
        "w1": 0.1 * jax.random.normal(ks[0], (64, n_mfcc, 3), jnp.float32),
        "b1": 0.05 * jax.random.normal(ks[1], (64,), jnp.float32),
        "g1": 1.0 + 0.1 * jax.random.normal(ks[2], (64,), jnp.float32),
        "be1": 0.05 * jax.random.normal(ks[3], (64,), jnp.float32),
        "m1": 0.05 * jax.random.normal(ks[4], (64,), jnp.float32),
        "v1": jax.random.uniform(ks[5], (64,), jnp.float32, 0.5, 1.5),
        "w2": 0.1 * jax.random.normal(ks[6], (64, 64, 3), jnp.float32),
        "b2": 0.05 * jax.random.normal(ks[7], (64,), jnp.float32),
        "g2": 1.0 + 0.1 * jax.random.normal(ks[8], (64,), jnp.float32),
        "be2": 0.05 * jax.random.normal(ks[9], (64,), jnp.float32),
        "m2": 0.05 * jax.random.normal(ks[10], (64,), jnp.float32),
        "v2": jax.random.uniform(ks[11], (64,), jnp.float32, 0.5, 1.5),
        "fc1_w": 0.05 * jax.random.normal(ks[12], (128, fc_in), jnp.float32),
        "fc1_b": 0.05 * jax.random.normal(ks[13], (128,), jnp.float32),
        "fc2_w": 0.05 * jax.random.normal(ks[14], (1, 128), jnp.float32),
        "fc2_b": 0.05 * jax.random.normal(ks[15], (1,), jnp.float32),
    }

    x = jax.random.normal(jax.random.PRNGKey(42), (B, n_mfcc, num_frames), jnp.float32)

    out = jax.block_until_ready(wake_word_forward(x, params))
    ref = jax.block_until_ready(reference_forward(x, params))

    assert out.shape == (B, 1), out.shape
    assert jnp.allclose(out, ref, rtol=1e-4, atol=1e-5), (out, ref)
    print("KERNEL_OK")
</pallas_src>

<mosaic_0001>
module attributes {stable_mosaic.version = 11 : i64} {
  func.func @_wake_word_kernel(%arg0: i32, %arg1: memref<98x39xf32, #tpu.memory_space<vmem>>, %arg2: memref<39x64xf32, #tpu.memory_space<vmem>>, %arg3: memref<1x64xf32, #tpu.memory_space<vmem>>, %arg4: memref<52x96xf32, #tpu.memory_space<vmem>>, %arg5: memref<3x64x64xf32, #tpu.memory_space<vmem>>, %arg6: memref<1x64xf32, #tpu.memory_space<vmem>>, %arg7: memref<11x2x48xf32, #tpu.memory_space<vmem>>, %arg8: memref<11x64x128xf32, #tpu.memory_space<vmem>>, %arg9: memref<1x128xf32, #tpu.memory_space<vmem>>, %arg10: memref<1x128xf32, #tpu.memory_space<vmem>>, %arg11: memref<1x1xf32, #tpu.memory_space<vmem>>, %arg12: memref<2x1xf32, #tpu.memory_space<vmem>>) attributes {dimension_semantics = [#tpu.dimension_semantics<arbitrary>], iteration_bounds = array<i64: 1>, scalar_prefetch = 0 : i64, scratch_operands = 0 : i64, tpu.core_type = #tpu.core_type<tc>, window_params = [{pipeline_mode = #tpu.pipeline_mode<synchronous>, transform_indices = @transform_0, window_bounds = array<i64: 98, 39>}, {pipeline_mode = #tpu.pipeline_mode<synchronous>, transform_indices = @transform_1, window_bounds = array<i64: 39, 64>}, {pipeline_mode = #tpu.pipeline_mode<synchronous>, transform_indices = @transform_2, window_bounds = array<i64: 1, 64>}, {pipeline_mode = #tpu.pipeline_mode<synchronous>, transform_indices = @transform_3, window_bounds = array<i64: 52, 96>}, {pipeline_mode = #tpu.pipeline_mode<synchronous>, transform_indices = @transform_4, window_bounds = array<i64: 3, 64, 64>}, {pipeline_mode = #tpu.pipeline_mode<synchronous>, transform_indices = @transform_5, window_bounds = array<i64: 1, 64>}, {pipeline_mode = #tpu.pipeline_mode<synchronous>, transform_indices = @transform_6, window_bounds = array<i64: 11, 2, 48>}, {pipeline_mode = #tpu.pipeline_mode<synchronous>, transform_indices = @transform_7, window_bounds = array<i64: 11, 64, 128>}, {pipeline_mode = #tpu.pipeline_mode<synchronous>, transform_indices = @transform_8, window_bounds = array<i64: 1, 128>}, {pipeline_mode = #tpu.pipeline_mode<synchronous>, transform_indices = @transform_9, window_bounds = array<i64: 1, 128>}, {pipeline_mode = #tpu.pipeline_mode<synchronous>, transform_indices = @transform_10, window_bounds = array<i64: 1, 1>}, {pipeline_mode = #tpu.pipeline_mode<synchronous>, transform_indices = @transform_11, window_bounds = array<i64: 2, 1>}]} {
    %c0 = arith.constant 0 : index
    %c0_0 = arith.constant 0 : index
    %0 = vector.load %arg1[%c0, %c0_0] : memref<98x39xf32, #tpu.memory_space<vmem>>, vector<98x39xf32>
    %c0_1 = arith.constant 0 : index
    %c0_2 = arith.constant 0 : index
    %1 = vector.load %arg2[%c0_1, %c0_2] : memref<39x64xf32, #tpu.memory_space<vmem>>, vector<39x64xf32>
    %cst = arith.constant dense<0.000000e+00> : vector<98x64xf32>
    %2 = tpu.matmul %0, %1, %cst {dimension_numbers = #tpu.dot_dimension_numbers<[1], [0], [0], [1], [0, 0, 1, 1], [], []>} : vector<98x39xf32>, vector<39x64xf32>, vector<98x64xf32> -> vector<98x64xf32>
    %c0_3 = arith.constant 0 : index
    %c0_4 = arith.constant 0 : index
    %3 = vector.load %arg3[%c0_3, %c0_4] : memref<1x64xf32, #tpu.memory_space<vmem>>, vector<1x64xf32>
    %4 = vector.broadcast %3 : vector<1x64xf32> to vector<98x64xf32>
    %5 = arith.addf %2, %4 : vector<98x64xf32>
    %cst_5 = arith.constant 0.000000e+00 : f32
    %6 = vector.broadcast %cst_5 : f32 to vector<98x64xf32>
    %7 = arith.maximumf %5, %6 : vector<98x64xf32>
    %8 = vector.extract_strided_slice %7 {offsets = [0, 0], sizes = [96, 64], strides = [1, 1]} : vector<98x64xf32> to vector<96x64xf32>
    %9 = vector.extract_strided_slice %7 {offsets = [1, 0], sizes = [96, 64], strides = [1, 1]} : vector<98x64xf32> to vector<96x64xf32>
    %10 = arith.maximumf %8, %9 : vector<96x64xf32>
    %11 = vector.extract_strided_slice %7 {offsets = [2, 0], sizes = [96, 64], strides = [1, 1]} : vector<98x64xf32> to vector<96x64xf32>
    %12 = arith.maximumf %10, %11 : vector<96x64xf32>
    %c0_6 = arith.constant 0 : index
    %c0_7 = arith.constant 0 : index
    %13 = vector.load %arg4[%c0_6, %c0_7] : memref<52x96xf32, #tpu.memory_space<vmem>>, vector<52x96xf32>
    %cst_8 = arith.constant dense<0.000000e+00> : vector<52x64xf32>
    %14 = tpu.matmul %13, %12, %cst_8 {dimension_numbers = #tpu.dot_dimension_numbers<[1], [0], [0], [1], [0, 0, 1, 1], [], []>} : vector<52x96xf32>, vector<96x64xf32>, vector<52x64xf32> -> vector<52x64xf32>
    %15 = vector.extract_strided_slice %14 {offsets = [0, 0], sizes = [50, 64], strides = [1, 1]} : vector<52x64xf32> to vector<50x64xf32>
    %c0_9 = arith.constant 0 : index
    %c0_10 = arith.constant 0 : index
    %c0_11 = arith.constant 0 : index
    %16 = vector.load %arg5[%c0_9, %c0_10, %c0_11] : memref<3x64x64xf32, #tpu.memory_space<vmem>>, vector<1x64x64xf32>
    %17 = vector.shape_cast %16 : vector<1x64x64xf32> to vector<64x64xf32>
    %cst_12 = arith.constant dense<0.000000e+00> : vector<50x64xf32>
    %18 = tpu.matmul %15, %17, %cst_12 {dimension_numbers = #tpu.dot_dimension_numbers<[1], [0], [0], [1], [0, 0, 1, 1], [], []>} : vector<50x64xf32>, vector<64x64xf32>, vector<50x64xf32> -> vector<50x64xf32>
    %19 = vector.extract_strided_slice %14 {offsets = [1, 0], sizes = [50, 64], strides = [1, 1]} : vector<52x64xf32> to vector<50x64xf32>
    %c1 = arith.constant 1 : index
    %c0_13 = arith.constant 0 : index
    %c0_14 = arith.constant 0 : index
    %20 = vector.load %arg5[%c1, %c0_13, %c0_14] : memref<3x64x64xf32, #tpu.memory_space<vmem>>, vector<1x64x64xf32>
    %21 = vector.shape_cast %20 : vector<1x64x64xf32> to vector<64x64xf32>
    %cst_15 = arith.constant dense<0.000000e+00> : vector<50x64xf32>
    %22 = tpu.matmul %19, %21, %cst_15 {dimension_numbers = #tpu.dot_dimension_numbers<[1], [0], [0], [1], [0, 0, 1, 1], [], []>} : vector<50x64xf32>, vector<64x64xf32>, vector<50x64xf32> -> vector<50x64xf32>
    %23 = arith.addf %18, %22 : vector<50x64xf32>
    %24 = vector.extract_strided_slice %14 {offsets = [2, 0], sizes = [50, 64], strides = [1, 1]} : vector<52x64xf32> to vector<50x64xf32>
    %c2 = arith.constant 2 : index
    %c0_16 = arith.constant 0 : index
    %c0_17 = arith.constant 0 : index
    %25 = vector.load %arg5[%c2, %c0_16, %c0_17] : memref<3x64x64xf32, #tpu.memory_space<vmem>>, vector<1x64x64xf32>
    %26 = vector.shape_cast %25 : vector<1x64x64xf32> to vector<64x64xf32>
    %cst_18 = arith.constant dense<0.000000e+00> : vector<50x64xf32>
    %27 = tpu.matmul %24, %26, %cst_18 {dimension_numbers = #tpu.dot_dimension_numbers<[1], [0], [0], [1], [0, 0, 1, 1], [], []>} : vector<50x64xf32>, vector<64x64xf32>, vector<50x64xf32> -> vector<50x64xf32>
    %28 = arith.addf %23, %27 : vector<50x64xf32>
    %c0_19 = arith.constant 0 : index
    %c0_20 = arith.constant 0 : index
    %29 = vector.load %arg6[%c0_19, %c0_20] : memref<1x64xf32, #tpu.memory_space<vmem>>, vector<1x64xf32>
    %30 = vector.broadcast %29 : vector<1x64xf32> to vector<50x64xf32>
    %31 = arith.addf %28, %30 : vector<50x64xf32>
    %cst_21 = arith.constant 0.000000e+00 : f32
    %32 = vector.broadcast %cst_21 : f32 to vector<50x64xf32>
    %33 = arith.maximumf %31, %32 : vector<50x64xf32>
    %34 = vector.extract_strided_slice %33 {offsets = [0, 0], sizes = [48, 64], strides = [1, 1]} : vector<50x64xf32> to vector<48x64xf32>
    %35 = vector.extract_strided_slice %33 {offsets = [1, 0], sizes = [48, 64], strides = [1, 1]} : vector<50x64xf32> to vector<48x64xf32>
    %36 = arith.maximumf %34, %35 : vector<48x64xf32>
    %37 = vector.extract_strided_slice %33 {offsets = [2, 0], sizes = [48, 64], strides = [1, 1]} : vector<50x64xf32> to vector<48x64xf32>
    %38 = arith.maximumf %36, %37 : vector<48x64xf32>
    %cst_22 = arith.constant 0.000000e+00 : f32
    %39 = vector.broadcast %cst_22 : f32 to vector<2x128xf32>
    %c0_23 = arith.constant 0 : index
    %c0_24 = arith.constant 0 : index
    %c0_25 = arith.constant 0 : index
    %40 = vector.load %arg7[%c0_23, %c0_24, %c0_25] : memref<11x2x48xf32, #tpu.memory_space<vmem>>, vector<1x2x48xf32>
    %41 = vector.shape_cast %40 : vector<1x2x48xf32> to vector<2x48xf32>
    %cst_26 = arith.constant dense<0.000000e+00> : vector<2x64xf32>
    %42 = tpu.matmul %41, %38, %cst_26 {dimension_numbers = #tpu.dot_dimension_numbers<[1], [0], [0], [1], [0, 0, 1, 1], [], []>} : vector<2x48xf32>, vector<48x64xf32>, vector<2x64xf32> -> vector<2x64xf32>
    %c0_27 = arith.constant 0 : index
    %c0_28 = arith.constant 0 : index
    %c0_29 = arith.constant 0 : index
    %43 = vector.load %arg8[%c0_27, %c0_28, %c0_29] : memref<11x64x128xf32, #tpu.memory_space<vmem>>, vector<1x64x128xf32>
    %44 = vector.shape_cast %43 : vector<1x64x128xf32> to vector<64x128xf32>
    %cst_30 = arith.constant dense<0.000000e+00> : vector<2x128xf32>
    %45 = tpu.matmul %42, %44, %cst_30 {dimension_numbers = #tpu.dot_dimension_numbers<[1], [0], [0], [1], [0, 0, 1, 1], [], []>} : vector<2x64xf32>, vector<64x128xf32>, vector<2x128xf32> -> vector<2x128xf32>
    %46 = arith.addf %39, %45 : vector<2x128xf32>
    %c1_31 = arith.constant 1 : index
    %c0_32 = arith.constant 0 : index
    %c0_33 = arith.constant 0 : index
    %47 = vector.load %arg7[%c1_31, %c0_32, %c0_33] : memref<11x2x48xf32, #tpu.memory_space<vmem>>, vector<1x2x48xf32>
    %48 = vector.shape_cast %47 : vector<1x2x48xf32> to vector<2x48xf32>
    %cst_34 = arith.constant dense<0.000000e+00> : vector<2x64xf32>
    %49 = tpu.matmul %48, %38, %cst_34 {dimension_numbers = #tpu.dot_dimension_numbers<[1], [0], [0], [1], [0, 0, 1, 1], [], []>} : vector<2x48xf32>, vector<48x64xf32>, vector<2x64xf32> -> vector<2x64xf32>
    %c1_35 = arith.constant 1 : index
    %c0_36 = arith.constant 0 : index
    %c0_37 = arith.constant 0 : index
    %50 = vector.load %arg8[%c1_35, %c0_36, %c0_37] : memref<11x64x128xf32, #tpu.memory_space<vmem>>, vector<1x64x128xf32>
    %51 = vector.shape_cast %50 : vector<1x64x128xf32> to vector<64x128xf32>
    %cst_38 = arith.constant dense<0.000000e+00> : vector<2x128xf32>
    %52 = tpu.matmul %49, %51, %cst_38 {dimension_numbers = #tpu.dot_dimension_numbers<[1], [0], [0], [1], [0, 0, 1, 1], [], []>} : vector<2x64xf32>, vector<64x128xf32>, vector<2x128xf32> -> vector<2x128xf32>
    %53 = arith.addf %46, %52 : vector<2x128xf32>
    %c2_39 = arith.constant 2 : index
    %c0_40 = arith.constant 0 : index
    %c0_41 = arith.constant 0 : index
    %54 = vector.load %arg7[%c2_39, %c0_40, %c0_41] : memref<11x2x48xf32, #tpu.memory_space<vmem>>, vector<1x2x48xf32>
    %55 = vector.shape_cast %54 : vector<1x2x48xf32> to vector<2x48xf32>
    %cst_42 = arith.constant dense<0.000000e+00> : vector<2x64xf32>
    %56 = tpu.matmul %55, %38, %cst_42 {dimension_numbers = #tpu.dot_dimension_numbers<[1], [0], [0], [1], [0, 0, 1, 1], [], []>} : vector<2x48xf32>, vector<48x64xf32>, vector<2x64xf32> -> vector<2x64xf32>
    %c2_43 = arith.constant 2 : index
    %c0_44 = arith.constant 0 : index
    %c0_45 = arith.constant 0 : index
    %57 = vector.load %arg8[%c2_43, %c0_44, %c0_45] : memref<11x64x128xf32, #tpu.memory_space<vmem>>, vector<1x64x128xf32>
    %58 = vector.shape_cast %57 : vector<1x64x128xf32> to vector<64x128xf32>
    %cst_46 = arith.constant dense<0.000000e+00> : vector<2x128xf32>
    %59 = tpu.matmul %56, %58, %cst_46 {dimension_numbers = #tpu.dot_dimension_numbers<[1], [0], [0], [1], [0, 0, 1, 1], [], []>} : vector<2x64xf32>, vector<64x128xf32>, vector<2x128xf32> -> vector<2x128xf32>
    %60 = arith.addf %53, %59 : vector<2x128xf32>
    %c3 = arith.constant 3 : index
    %c0_47 = arith.constant 0 : index
    %c0_48 = arith.constant 0 : index
    %61 = vector.load %arg7[%c3, %c0_47, %c0_48] : memref<11x2x48xf32, #tpu.memory_space<vmem>>, vector<1x2x48xf32>
    %62 = vector.shape_cast %61 : vector<1x2x48xf32> to vector<2x48xf32>
    %cst_49 = arith.constant dense<0.000000e+00> : vector<2x64xf32>
    %63 = tpu.matmul %62, %38, %cst_49 {dimension_numbers = #tpu.dot_dimension_numbers<[1], [0], [0], [1], [0, 0, 1, 1], [], []>} : vector<2x48xf32>, vector<48x64xf32>, vector<2x64xf32> -> vector<2x64xf32>
    %c3_50 = arith.constant 3 : index
    %c0_51 = arith.constant 0 : index
    %c0_52 = arith.constant 0 : index
    %64 = vector.load %arg8[%c3_50, %c0_51, %c0_52] : memref<11x64x128xf32, #tpu.memory_space<vmem>>, vector<1x64x128xf32>
    %65 = vector.shape_cast %64 : vector<1x64x128xf32> to vector<64x128xf32>
    %cst_53 = arith.constant dense<0.000000e+00> : vector<2x128xf32>
    %66 = tpu.matmul %63, %65, %cst_53 {dimension_numbers = #tpu.dot_dimension_numbers<[1], [0], [0], [1], [0, 0, 1, 1], [], []>} : vector<2x64xf32>, vector<64x128xf32>, vector<2x128xf32> -> vector<2x128xf32>
    %67 = arith.addf %60, %66 : vector<2x128xf32>
    %c4 = arith.constant 4 : index
    %c0_54 = arith.constant 0 : index
    %c0_55 = arith.constant 0 : index
    %68 = vector.load %arg7[%c4, %c0_54, %c0_55] : memref<11x2x48xf32, #tpu.memory_space<vmem>>, vector<1x2x48xf32>
    %69 = vector.shape_cast %68 : vector<1x2x48xf32> to vector<2x48xf32>
    %cst_56 = arith.constant dense<0.000000e+00> : vector<2x64xf32>
    %70 = tpu.matmul %69, %38, %cst_56 {dimension_numbers = #tpu.dot_dimension_numbers<[1], [0], [0], [1], [0, 0, 1, 1], [], []>} : vector<2x48xf32>, vector<48x64xf32>, vector<2x64xf32> -> vector<2x64xf32>
    %c4_57 = arith.constant 4 : index
    %c0_58 = arith.constant 0 : index
    %c0_59 = arith.constant 0 : index
    %71 = vector.load %arg8[%c4_57, %c0_58, %c0_59] : memref<11x64x128xf32, #tpu.memory_space<vmem>>, vector<1x64x128xf32>
    %72 = vector.shape_cast %71 : vector<1x64x128xf32> to vector<64x128xf32>
    %cst_60 = arith.constant dense<0.000000e+00> : vector<2x128xf32>
    %73 = tpu.matmul %70, %72, %cst_60 {dimension_numbers = #tpu.dot_dimension_numbers<[1], [0], [0], [1], [0, 0, 1, 1], [], []>} : vector<2x64xf32>, vector<64x128xf32>, vector<2x128xf32> -> vector<2x128xf32>
    %74 = arith.addf %67, %73 : vector<2x128xf32>
    %c5 = arith.constant 5 : index
    %c0_61 = arith.constant 0 : index
    %c0_62 = arith.constant 0 : index
    %75 = vector.load %arg7[%c5, %c0_61, %c0_62] : memref<11x2x48xf32, #tpu.memory_space<vmem>>, vector<1x2x48xf32>
    %76 = vector.shape_cast %75 : vector<1x2x48xf32> to vector<2x48xf32>
    %cst_63 = arith.constant dense<0.000000e+00> : vector<2x64xf32>
    %77 = tpu.matmul %76, %38, %cst_63 {dimension_numbers = #tpu.dot_dimension_numbers<[1], [0], [0], [1], [0, 0, 1, 1], [], []>} : vector<2x48xf32>, vector<48x64xf32>, vector<2x64xf32> -> vector<2x64xf32>
    %c5_64 = arith.constant 5 : index
    %c0_65 = arith.constant 0 : index
    %c0_66 = arith.constant 0 : index
    %78 = vector.load %arg8[%c5_64, %c0_65, %c0_66] : memref<11x64x128xf32, #tpu.memory_space<vmem>>, vector<1x64x128xf32>
    %79 = vector.shape_cast %78 : vector<1x64x128xf32> to vector<64x128xf32>
    %cst_67 = arith.constant dense<0.000000e+00> : vector<2x128xf32>
    %80 = tpu.matmul %77, %79, %cst_67 {dimension_numbers = #tpu.dot_dimension_numbers<[1], [0], [0], [1], [0, 0, 1, 1], [], []>} : vector<2x64xf32>, vector<64x128xf32>, vector<2x128xf32> -> vector<2x128xf32>
    %81 = arith.addf %74, %80 : vector<2x128xf32>
    %c6 = arith.constant 6 : index
    %c0_68 = arith.constant 0 : index
    %c0_69 = arith.constant 0 : index
    %82 = vector.load %arg7[%c6, %c0_68, %c0_69] : memref<11x2x48xf32, #tpu.memory_space<vmem>>, vector<1x2x48xf32>
    %83 = vector.shape_cast %82 : vector<1x2x48xf32> to vector<2x48xf32>
    %cst_70 = arith.constant dense<0.000000e+00> : vector<2x64xf32>
    %84 = tpu.matmul %83, %38, %cst_70 {dimension_numbers = #tpu.dot_dimension_numbers<[1], [0], [0], [1], [0, 0, 1, 1], [], []>} : vector<2x48xf32>, vector<48x64xf32>, vector<2x64xf32> -> vector<2x64xf32>
    %c6_71 = arith.constant 6 : index
    %c0_72 = arith.constant 0 : index
    %c0_73 = arith.constant 0 : index
    %85 = vector.load %arg8[%c6_71, %c0_72, %c0_73] : memref<11x64x128xf32, #tpu.memory_space<vmem>>, vector<1x64x128xf32>
    %86 = vector.shape_cast %85 : vector<1x64x128xf32> to vector<64x128xf32>
    %cst_74 = arith.constant dense<0.000000e+00> : vector<2x128xf32>
    %87 = tpu.matmul %84, %86, %cst_74 {dimension_numbers = #tpu.dot_dimension_numbers<[1], [0], [0], [1], [0, 0, 1, 1], [], []>} : vector<2x64xf32>, vector<64x128xf32>, vector<2x128xf32> -> vector<2x128xf32>
    %88 = arith.addf %81, %87 : vector<2x128xf32>
    %c7 = arith.constant 7 : index
    %c0_75 = arith.constant 0 : index
    %c0_76 = arith.constant 0 : index
    %89 = vector.load %arg7[%c7, %c0_75, %c0_76] : memref<11x2x48xf32, #tpu.memory_space<vmem>>, vector<1x2x48xf32>
    %90 = vector.shape_cast %89 : vector<1x2x48xf32> to vector<2x48xf32>
    %cst_77 = arith.constant dense<0.000000e+00> : vector<2x64xf32>
    %91 = tpu.matmul %90, %38, %cst_77 {dimension_numbers = #tpu.dot_dimension_numbers<[1], [0], [0], [1], [0, 0, 1, 1], [], []>} : vector<2x48xf32>, vector<48x64xf32>, vector<2x64xf32> -> vector<2x64xf32>
    %c7_78 = arith.constant 7 : index
    %c0_79 = arith.constant 0 : index
    %c0_80 = arith.constant 0 : index
    %92 = vector.load %arg8[%c7_78, %c0_79, %c0_80] : memref<11x64x128xf32, #tpu.memory_space<vmem>>, vector<1x64x128xf32>
    %93 = vector.shape_cast %92 : vector<1x64x128xf32> to vector<64x128xf32>
    %cst_81 = arith.constant dense<0.000000e+00> : vector<2x128xf32>
    %94 = tpu.matmul %91, %93, %cst_81 {dimension_numbers = #tpu.dot_dimension_numbers<[1], [0], [0], [1], [0, 0, 1, 1], [], []>} : vector<2x64xf32>, vector<64x128xf32>, vector<2x128xf32> -> vector<2x128xf32>
    %95 = arith.addf %88, %94 : vector<2x128xf32>
    %c8 = arith.constant 8 : index
    %c0_82 = arith.constant 0 : index
    %c0_83 = arith.constant 0 : index
    %96 = vector.load %arg7[%c8, %c0_82, %c0_83] : memref<11x2x48xf32, #tpu.memory_space<vmem>>, vector<1x2x48xf32>
    %97 = vector.shape_cast %96 : vector<1x2x48xf32> to vector<2x48xf32>
    %cst_84 = arith.constant dense<0.000000e+00> : vector<2x64xf32>
    %98 = tpu.matmul %97, %38, %cst_84 {dimension_numbers = #tpu.dot_dimension_numbers<[1], [0], [0], [1], [0, 0, 1, 1], [], []>} : vector<2x48xf32>, vector<48x64xf32>, vector<2x64xf32> -> vector<2x64xf32>
    %c8_85 = arith.constant 8 : index
    %c0_86 = arith.constant 0 : index
    %c0_87 = arith.constant 0 : index
    %99 = vector.load %arg8[%c8_85, %c0_86, %c0_87] : memref<11x64x128xf32, #tpu.memory_space<vmem>>, vector<1x64x128xf32>
    %100 = vector.shape_cast %99 : vector<1x64x128xf32> to vector<64x128xf32>
    %cst_88 = arith.constant dense<0.000000e+00> : vector<2x128xf32>
    %101 = tpu.matmul %98, %100, %cst_88 {dimension_numbers = #tpu.dot_dimension_numbers<[1], [0], [0], [1], [0, 0, 1, 1], [], []>} : vector<2x64xf32>, vector<64x128xf32>, vector<2x128xf32> -> vector<2x128xf32>
    %102 = arith.addf %95, %101 : vector<2x128xf32>
    %c9 = arith.constant 9 : index
    %c0_89 = arith.constant 0 : index
    %c0_90 = arith.constant 0 : index
    %103 = vector.load %arg7[%c9, %c0_89, %c0_90] : memref<11x2x48xf32, #tpu.memory_space<vmem>>, vector<1x2x48xf32>
    %104 = vector.shape_cast %103 : vector<1x2x48xf32> to vector<2x48xf32>
    %cst_91 = arith.constant dense<0.000000e+00> : vector<2x64xf32>
    %105 = tpu.matmul %104, %38, %cst_91 {dimension_numbers = #tpu.dot_dimension_numbers<[1], [0], [0], [1], [0, 0, 1, 1], [], []>} : vector<2x48xf32>, vector<48x64xf32>, vector<2x64xf32> -> vector<2x64xf32>
    %c9_92 = arith.constant 9 : index
    %c0_93 = arith.constant 0 : index
    %c0_94 = arith.constant 0 : index
    %106 = vector.load %arg8[%c9_92, %c0_93, %c0_94] : memref<11x64x128xf32, #tpu.memory_space<vmem>>, vector<1x64x128xf32>
    %107 = vector.shape_cast %106 : vector<1x64x128xf32> to vector<64x128xf32>
    %cst_95 = arith.constant dense<0.000000e+00> : vector<2x128xf32>
    %108 = tpu.matmul %105, %107, %cst_95 {dimension_numbers = #tpu.dot_dimension_numbers<[1], [0], [0], [1], [0, 0, 1, 1], [], []>} : vector<2x64xf32>, vector<64x128xf32>, vector<2x128xf32> -> vector<2x128xf32>
    %109 = arith.addf %102, %108 : vector<2x128xf32>
    %c10 = arith.constant 10 : index
    %c0_96 = arith.constant 0 : index
    %c0_97 = arith.constant 0 : index
    %110 = vector.load %arg7[%c10, %c0_96, %c0_97] : memref<11x2x48xf32, #tpu.memory_space<vmem>>, vector<1x2x48xf32>
    %111 = vector.shape_cast %110 : vector<1x2x48xf32> to vector<2x48xf32>
    %cst_98 = arith.constant dense<0.000000e+00> : vector<2x64xf32>
    %112 = tpu.matmul %111, %38, %cst_98 {dimension_numbers = #tpu.dot_dimension_numbers<[1], [0], [0], [1], [0, 0, 1, 1], [], []>} : vector<2x48xf32>, vector<48x64xf32>, vector<2x64xf32> -> vector<2x64xf32>
    %c10_99 = arith.constant 10 : index
    %c0_100 = arith.constant 0 : index
    %c0_101 = arith.constant 0 : index
    %113 = vector.load %arg8[%c10_99, %c0_100, %c0_101] : memref<11x64x128xf32, #tpu.memory_space<vmem>>, vector<1x64x128xf32>
    %114 = vector.shape_cast %113 : vector<1x64x128xf32> to vector<64x128xf32>
    %cst_102 = arith.constant dense<0.000000e+00> : vector<2x128xf32>
    %115 = tpu.matmul %112, %114, %cst_102 {dimension_numbers = #tpu.dot_dimension_numbers<[1], [0], [0], [1], [0, 0, 1, 1], [], []>} : vector<2x64xf32>, vector<64x128xf32>, vector<2x128xf32> -> vector<2x128xf32>
    %116 = arith.addf %109, %115 : vector<2x128xf32>
    %c0_103 = arith.constant 0 : index
    %c0_104 = arith.constant 0 : index
    %117 = vector.load %arg9[%c0_103, %c0_104] : memref<1x128xf32, #tpu.memory_space<vmem>>, vector<1x128xf32>
    %118 = vector.broadcast %117 : vector<1x128xf32> to vector<2x128xf32>
    %119 = arith.addf %116, %118 : vector<2x128xf32>
    %cst_105 = arith.constant 0.000000e+00 : f32
    %120 = vector.broadcast %cst_105 : f32 to vector<2x128xf32>
    %121 = arith.maximumf %119, %120 : vector<2x128xf32>
    %c0_106 = arith.constant 0 : index
    %c0_107 = arith.constant 0 : index
    %122 = vector.load %arg10[%c0_106, %c0_107] : memref<1x128xf32, #tpu.memory_space<vmem>>, vector<1x128xf32>
    %123 = vector.broadcast %122 : vector<1x128xf32> to vector<2x128xf32>
    %124 = arith.mulf %121, %123 : vector<2x128xf32>
    %cst_108 = arith.constant dense<0.000000e+00> : vector<2xf32>
    %125 = vector.multi_reduction <add>, %124, %cst_108 [1] : vector<2x128xf32> to vector<2xf32>
    %126 = vector.shape_cast %125 : vector<2xf32> to vector<2x1xf32>
    %c0_109 = arith.constant 0 : index
    %c0_110 = arith.constant 0 : index
    %127 = vector.load %arg11[%c0_109, %c0_110] : memref<1x1xf32, #tpu.memory_space<vmem>>, vector<1x1xf32>
    %128 = vector.broadcast %127 : vector<1x1xf32> to vector<2x1xf32>
    %129 = arith.addf %126, %128 : vector<2x1xf32>
    %cst_111 = arith.constant 0.000000e+00 : f32
    %130 = vector.broadcast %cst_111 : f32 to vector<2x1xf32>
    %131 = arith.subf %130, %129 : vector<2x1xf32>
    %132 = math.exp %131 : vector<2x1xf32>
    %cst_112 = arith.constant 1.000000e+00 : f32
    %133 = vector.broadcast %cst_112 : f32 to vector<2x1xf32>
    %134 = arith.addf %133, %132 : vector<2x1xf32>
    %cst_113 = arith.constant 1.000000e+00 : f32
    %135 = vector.broadcast %cst_113 : f32 to vector<2x1xf32>
    %136 = arith.divf %135, %134 : vector<2x1xf32>
    %c0_114 = arith.constant 0 : index
    %c0_115 = arith.constant 0 : index
    %137 = vector.load %arg12[%c0_114, %c0_115] : memref<2x1xf32, #tpu.memory_space<vmem>>, vector<2x1xf32>
    tpu.vector_store %arg12[%c0_114, %c0_115], %136 {strides = array<i32>} : memref<2x1xf32, #tpu.memory_space<vmem>>, vector<2x1xf32>,
    return
  }
  func.func @transform_0(%arg0: i32) -> (i32, i32) {
    %c0_i32 = arith.constant 0 : i32
    %c0_i32_0 = arith.constant 0 : i32
    %c0_i32_1 = arith.constant 0 : i32
    return %c0_i32, %c0_i32_0 : i32, i32
  }
  func.func @transform_1(%arg0: i32) -> (i32, i32) {
    %c0_i32 = arith.constant 0 : i32
    %c0_i32_0 = arith.constant 0 : i32
    %c0_i32_1 = arith.constant 0 : i32
    return %c0_i32, %c0_i32_0 : i32, i32
  }
  func.func @transform_2(%arg0: i32) -> (i32, i32) {
    %c0_i32 = arith.constant 0 : i32
    %c0_i32_0 = arith.constant 0 : i32
    %c0_i32_1 = arith.constant 0 : i32
    return %c0_i32, %c0_i32_0 : i32, i32
  }
  func.func @transform_3(%arg0: i32) -> (i32, i32) {
    %c0_i32 = arith.constant 0 : i32
    %c0_i32_0 = arith.constant 0 : i32
    %c0_i32_1 = arith.constant 0 : i32
    return %c0_i32, %c0_i32_0 : i32, i32
  }
  func.func @transform_4(%arg0: i32) -> (i32, i32, i32) {
    %c0_i32 = arith.constant 0 : i32
    %c0_i32_0 = arith.constant 0 : i32
    %c0_i32_1 = arith.constant 0 : i32
    %c0_i32_2 = arith.constant 0 : i32
    return %c0_i32, %c0_i32_0, %c0_i32_1 : i32, i32, i32
  }
  func.func @transform_5(%arg0: i32) -> (i32, i32) {
    %c0_i32 = arith.constant 0 : i32
    %c0_i32_0 = arith.constant 0 : i32
    %c0_i32_1 = arith.constant 0 : i32
    return %c0_i32, %c0_i32_0 : i32, i32
  }
  func.func @transform_6(%arg0: i32) -> (i32, i32, i32) {
    %c0_i32 = arith.constant 0 : i32
    %c0_i32_0 = arith.constant 0 : i32
    %c0_i32_1 = arith.constant 0 : i32
    %c0_i32_2 = arith.constant 0 : i32
    return %c0_i32, %c0_i32_0, %c0_i32_1 : i32, i32, i32
  }
  func.func @transform_7(%arg0: i32) -> (i32, i32, i32) {
    %c0_i32 = arith.constant 0 : i32
    %c0_i32_0 = arith.constant 0 : i32
    %c0_i32_1 = arith.constant 0 : i32
    %c0_i32_2 = arith.constant 0 : i32
    return %c0_i32, %c0_i32_0, %c0_i32_1 : i32, i32, i32
  }
  func.func @transform_8(%arg0: i32) -> (i32, i32) {
    %c0_i32 = arith.constant 0 : i32
    %c0_i32_0 = arith.constant 0 : i32
    %c0_i32_1 = arith.constant 0 : i32
    return %c0_i32, %c0_i32_0 : i32, i32
  }
  func.func @transform_9(%arg0: i32) -> (i32, i32) {
    %c0_i32 = arith.constant 0 : i32
    %c0_i32_0 = arith.constant 0 : i32
    %c0_i32_1 = arith.constant 0 : i32
    return %c0_i32, %c0_i32_0 : i32, i32
  }
  func.func @transform_10(%arg0: i32) -> (i32, i32) {
    %c0_i32 = arith.constant 0 : i32
    %c0_i32_0 = arith.constant 0 : i32
    %c0_i32_1 = arith.constant 0 : i32
    return %c0_i32, %c0_i32_0 : i32, i32
  }
  func.func @transform_11(%arg0: i32) -> (i32, i32) {
    %c0_i32 = arith.constant 0 : i32
    %c0_i32_0 = arith.constant 0 : i32
    %c0_i32_1 = arith.constant 0 : i32
    return %c0_i32, %c0_i32_0 : i32, i32
  }
}

</mosaic_0001>

<llo_original>
// kernel: tpu_custom_call.1
$region0: #{tpu_custom_call.1}
  #allocation0 [shape = 'u32[]', space=smem, size = 0x4, offset = 0x4, fixed_abs, tag = 'smem constant byte address 0x4 - core index']
  #allocation1 [shape = 'u32[144,128]{1,0:T(1,128)}', space=vmem, size = 0x12000, scoped, tag = 'internal scratch']
  #allocation2 [shape = 'f32[1,1]{1,0:T(1,128)S(1)}', space=vmem, size = 0x200, scoped, tag = 'scoped memory for tpu_custom_call.1']
  %s0 = inlined_call_operand.vmem [shape: f32[98,39], index: 0, kind: input, shape index: {}]
  %s1 = inlined_call_operand.vmem [shape: f32[39,64], index: 1, kind: input, shape index: {}]
  %s2 = inlined_call_operand.vmem [shape: f32[1,64], index: 2, kind: input, shape index: {}]
  %s3 = inlined_call_operand.vmem [shape: f32[52,96], index: 3, kind: input, shape index: {}]
  %s4 = inlined_call_operand.hbm [shape: f32[3,64,64], index: 4, kind: input, shape index: {}]
  %s5 = inlined_call_operand.vmem [shape: f32[1,64], index: 5, kind: input, shape index: {}]
  %s6 = inlined_call_operand.vmem [shape: f32[11,2,48], index: 6, kind: input, shape index: {}]
  %s7 = inlined_call_operand.hbm [shape: f32[11,64,128], index: 7, kind: input, shape index: {}]
  %s8 = inlined_call_operand.vmem [shape: f32[1,128], index: 8, kind: input, shape index: {}]
  %s9 = inlined_call_operand.vmem [shape: f32[1,128], index: 9, kind: input, shape index: {}]
  %s10 = inlined_call_operand.<no memory space> [shape: f32[1,1], index: 10, kind: input, shape index: {}]
  %s11 = inlined_call_operand.vmem [shape: f32[2,1], index: 11, kind: output, shape index: {}]
  %s12 = sld [smem:[#allocation0]]
  $region62: #{tpu_custom_call.1} parent=0
    _
  %s14 = ssub.s32 1, %s12
  %s15 = scalar_select 0, %s14, %s12
  %v16 = vstv %s10
  %17 = vst [vmem:[#allocation2] sm:$0x1] %v16
  $region1: #{tpu_custom_call.1} parent=0
    #allocation3 [shape = 'u8[98304]{0}', space=vmem, size = 0x18000, scoped, tag = 'input window, operand 4, single buffered']
    #allocation4 [shape = 's32[1]{0}', space=sflag, size = 0x4, scoped, tag = 'scoped memory for tpu_custom_call.1']
    #allocation5 [shape = 'u8[360448]{0}', space=vmem, size = 0x58000, scoped, tag = 'input window, operand 7, single buffered']
    #allocation6 [shape = 's32[1]{0}', space=sflag, size = 0x4, scoped, tag = 'scoped memory for tpu_custom_call.1']
    %18 = vsyncpa [#allocation4], 0
    %19 = vsyncpa [#allocation6], 0
    // Predicated region
    $region2: #{tpu_custom_call.1} parent=1 // pred_check
      _
    $region3: #{tpu_custom_call.1} parent=1 // pred_check_branch
      %21 = sbr.rel (0) target = $region5
    $region4: #{tpu_custom_call.1} parent=1 // pred_region
      _
    $region5: #{tpu_custom_call.1} parent=1 // pred_fallthru
      _
    // Predicated region
    $region6: #{tpu_custom_call.1} parent=1 // pred_check
      _
    $region7: #{tpu_custom_call.1} parent=1 // pred_check_branch
      %23 = sbr.rel (0) target = $region9
    $region8: #{tpu_custom_call.1} parent=1 // pred_region
      _
    $region9: #{tpu_custom_call.1} parent=1 // pred_fallthru
      _
    // Predicated region
    $region10: #{tpu_custom_call.1} parent=1 // pred_check
      _
    $region11: #{tpu_custom_call.1} parent=1 // pred_check_branch
      %25 = sbr.rel (0) target = $region13
    $region12: #{tpu_custom_call.1} parent=1 // pred_region
      _
    $region13: #{tpu_custom_call.1} parent=1 // pred_fallthru
      _
    // Predicated region
    $region14: #{tpu_custom_call.1} parent=1 // pred_check
      _
    $region15: #{tpu_custom_call.1} parent=1 // pred_check_branch
      %27 = sbr.rel (0) target = $region17
    $region16: #{tpu_custom_call.1} parent=1 // pred_region
      _
    $region17: #{tpu_custom_call.1} parent=1 // pred_fallthru
      _
    // Predicated region
    $region18: #{tpu_custom_call.1} parent=1 // pred_check
      _
    $region19: #{tpu_custom_call.1} parent=1 // pred_check_branch
      %29 = sbr.rel (0) target = $region21
    $region20: #{tpu_custom_call.1} parent=1 // pred_region
      %s31 = ssub.s32 3072, 3072
      %32 = vsyncadd [#allocation4], %s31
      %s33 = sshll.u32 [#allocation3], 4
      %s34 = int_to_ptr.vmem [resolvable:$true] %s33
      %39 = dma.hbm_to_vmem [thread:$0]  %s4, 3072, %s34, [#allocation4], 128, 128, 8
    $region21: #{tpu_custom_call.1} parent=1 // pred_fallthru
      _
    // Predicated region
    $region22: #{tpu_custom_call.1} parent=1 // pred_check
      _
    $region23: #{tpu_custom_call.1} parent=1 // pred_check_branch
      %41 = sbr.rel (0) target = $region25
    $region24: #{tpu_custom_call.1} parent=1 // pred_region
      _
    $region25: #{tpu_custom_call.1} parent=1 // pred_fallthru
      _
    // Predicated region
    $region26: #{tpu_custom_call.1} parent=1 // pred_check
      _
    $region27: #{tpu_custom_call.1} parent=1 // pred_check_branch
      %43 = sbr.rel (0) target = $region29
    $region28: #{tpu_custom_call.1} parent=1 // pred_region
      _
    $region29: #{tpu_custom_call.1} parent=1 // pred_fallthru
      _
    // Predicated region
    $region30: #{tpu_custom_call.1} parent=1 // pred_check
      _
    $region31: #{tpu_custom_call.1} parent=1 // pred_check_branch
      %45 = sbr.rel (0) target = $region33
    $region32: #{tpu_custom_call.1} parent=1 // pred_region
      %s47 = ssub.s32 11264, 11264
      %48 = vsyncadd [#allocation6], %s47
      %s49 = sshll.u32 [#allocation5], 4
      %s50 = int_to_ptr.vmem [resolvable:$true] %s49
      %55 = dma.hbm_to_vmem [thread:$0]  %s7, 11264, %s50, [#allocation6], 128, 128, 8
    $region33: #{tpu_custom_call.1} parent=1 // pred_fallthru
      _
    // Predicated region
    $region34: #{tpu_custom_call.1} parent=1 // pred_check
      _
    $region35: #{tpu_custom_call.1} parent=1 // pred_check_branch
      %57 = sbr.rel (0) target = $region37
    $region36: #{tpu_custom_call.1} parent=1 // pred_region
      _
    $region37: #{tpu_custom_call.1} parent=1 // pred_fallthru
      _
    // Predicated region
    $region38: #{tpu_custom_call.1} parent=1 // pred_check
      _
    $region39: #{tpu_custom_call.1} parent=1 // pred_check_branch
      %59 = sbr.rel (0) target = $region41
    $region40: #{tpu_custom_call.1} parent=1 // pred_region
      _
    $region41: #{tpu_custom_call.1} parent=1 // pred_fallthru
      _
    // Predicated region
    $region42: #{tpu_custom_call.1} parent=1 // pred_check
      _
    $region43: #{tpu_custom_call.1} parent=1 // pred_check_branch
      %61 = sbr.rel (0) target = $region45
    $region44: #{tpu_custom_call.1} parent=1 // pred_region
      _
    $region45: #{tpu_custom_call.1} parent=1 // pred_fallthru
      _
    // Predicated region
    $region46: #{tpu_custom_call.1} parent=1 // pred_check
      _
    $region47: #{tpu_custom_call.1} parent=1 // pred_check_branch
      %63 = sbr.rel (0) target = $region49
    $region48: #{tpu_custom_call.1} parent=1 // pred_region
      %64 = dma.done [#allocation4], 3072
    $region49: #{tpu_custom_call.1} parent=1 // pred_fallthru
      _
    // Predicated region
    $region50: #{tpu_custom_call.1} parent=1 // pred_check
      _
    $region51: #{tpu_custom_call.1} parent=1 // pred_check_branch
      %66 = sbr.rel (0) target = $region53
    $region52: #{tpu_custom_call.1} parent=1 // pred_region
      %67 = dma.done [#allocation6], 11264
    $region53: #{tpu_custom_call.1} parent=1 // pred_fallthru
      _
    %v68 = vld [vmem:[%s0] sm:$0xff]
    %v69 = vld [vmem:[%s0 + $0x8] sm:$0xff]
    %v70 = vld [vmem:[%s0 + $0x10] sm:$0xff]
    %v71 = vld [vmem:[%s0 + $0x18] sm:$0xff]
    %v72 = vld [vmem:[%s0 + $0x20] sm:$0xff]
    %v73 = vld [vmem:[%s0 + $0x28] sm:$0xff]
    %v74 = vld [vmem:[%s0 + $0x30] sm:$0xff]
    %v75 = vld [vmem:[%s0 + $0x38] sm:$0xff]
    %v76 = vld [vmem:[%s0 + $0x40] sm:$0xff]
    %v77 = vld [vmem:[%s0 + $0x48] sm:$0xff]
    %v78 = vld [vmem:[%s0 + $0x50] sm:$0xff]
    %v79 = vld [vmem:[%s0 + $0x58] sm:$0xff]
    %v80 = vld [vmem:[%s0 + $0x60] sm:$0x3]
    %v81 = vld [vmem:[%s1] sm:$0xff]
    %v82 = vld [vmem:[%s1 + $0x8] sm:$0xff]
    %v83 = vld [vmem:[%s1 + $0x10] sm:$0xff]
    %v84 = vld [vmem:[%s1 + $0x18] sm:$0xff]
    %v85 = vld [vmem:[%s1 + $0x20] sm:$0x7f]
    %v86 = vld [vmem:[%s2] sm:$0x1]
    %v88 = vlaneseq
    %v89 = vshrl.u32 %v88, 7
    %v90 = vsub.s32 0, %v89
    %v91 = vrot.slane %v86, %v90
    %vm93 = vcmask 318464
    %v95 = vsel %vm93, %v68, 0
    %v98 = vsel %vm93, %v69, 0
    %v101 = vsel %vm93, %v70, 0
    %v104 = vsel %vm93, %v71, 0
    %v107 = vsel %vm93, %v72, 0
    %v110 = vsel %vm93, %v73, 0
    %v113 = vsel %vm93, %v74, 0
    %v116 = vsel %vm93, %v75, 0
    %v119 = vsel %vm93, %v76, 0
    %v122 = vsel %vm93, %v77, 0
    %v125 = vsel %vm93, %v78, 0
    %v128 = vsel %vm93, %v79, 0
    %v131 = vsel %vm93, %v80, 0
    %vm133 = vcmask 1046528
    %v135 = vsel %vm133, %v85, 0
    %137 = vmatprep.subr.mxu0 0.0
    %138 = vmatpush1.msra.mxu0 %v81
    %139 = vmatprep.subr.mxu0 0.0
    %140 = vmatpush1.msra.mxu0 %v82
    %141 = vmatprep.subr.mxu0 0.0
    %142 = vmatpush1.msra.mxu0 %v83
    %143 = vmatprep.subr.mxu0 0.0
    %144 = vmatpush1.msra.mxu0 %v84
    %145 = vmatprep.subr.mxu0 0.0
    %146 = vmatpush1.msra.mxu0 %v135
    %147 = vmatprep.subr.mxu0 0.0
    %148 = vmatpush1.msra.mxu0 0.0
    %149 = vmatprep.subr.mxu0 0.0
    %150 = vmatpush1.msra.mxu0 0.0
    %151 = vmatprep.subr.mxu0 0.0
    %152 = vmatpush1.msra.mxu0 0.0
    %153 = vmatprep.subr.mxu0 0.0
    %154 = vmatpush1.msra.mxu0 0.0
    %155 = vmatprep.subr.mxu0 0.0
    %156 = vmatpush1.msra.mxu0 0.0
    %157 = vmatprep.subr.mxu0 0.0
    %158 = vmatpush1.msra.mxu0 0.0
    %159 = vmatprep.subr.mxu0 0.0
    %160 = vmatpush1.msra.mxu0 0.0
    %161 = vmatprep.subr.mxu0 0.0
    %162 = vmatpush1.msra.mxu0 0.0
    %163 = vmatprep.subr.mxu0 0.0
    %164 = vmatpush1.msra.mxu0 0.0
    %165 = vmatprep.subr.mxu0 0.0
    %166 = vmatpush1.msra.mxu0 0.0
    %167 = vmatprep.subr.mxu0 0.0
    %168 = vmatpush1.msra.mxu0 0.0
    %169 = vmatprep.subr.mxu0 0.0
    %170 = vmatpush1.msra.mxu0 0.0
    %171 = vmatprep.subr.mxu0 0.0
    %172 = vmatpush1.msra.mxu0 0.0
    %173 = vmatprep.subr.mxu0 0.0
    %174 = vmatpush1.msra.mxu0 0.0
    %175 = vmatprep.subr.mxu0 0.0
    %176 = vmatpush1.msra.mxu0 0.0
    %177 = vmatprep.subr.mxu0 0.0
    %178 = vmatpush1.msra.mxu0 0.0
    %179 = vmatprep.subr.mxu0 0.0
    %180 = vmatpush1.msra.mxu0 0.0
    %181 = vmatprep.subr.mxu0 0.0
    %182 = vmatpush1.msra.mxu0 0.0
    %183 = vmatprep.subr.mxu0 0.0
    %184 = vmatpush1.msra.mxu0 0.0
    %185 = vmatprep.subr.mxu0 0.0
    %186 = vmatpush1.msra.mxu0 0.0
    %187 = vmatprep.subr.mxu0 0.0
    %188 = vmatpush1.msra.mxu0 0.0
    %189 = vmatprep.subr.mxu0 0.0
    %190 = vmatpush1.msra.mxu0 0.0
    %191 = vmatprep.subr.mxu0 0.0
    %192 = vmatpush1.msra.mxu0 0.0
    %193 = vmatprep.subr.mxu0 0.0
    %194 = vmatpush1.msra.mxu0 0.0
    %195 = vmatprep.subr.mxu0 0.0
    %196 = vmatpush1.msra.mxu0 0.0
    %197 = vmatprep.subr.mxu0 0.0
    %198 = vmatpush1.msra.mxu0 0.0
    %199 = vmatprep.subr.mxu0 0.0
    %200 = vmatpush1.msra.mxu0 0.0
    %201 = vmatprep.mubr.f32.mxu0 0.0
    %202 = vmatmul.mubr.f32.gmra.mrb[0].mxu0 %v95
    %v203 = vpop.f32.mrb[0].mxu0
    %v204 = vadd.f32 %v91, %v203
    %v205 = vpop.f32.mrb[0].mxu0
    %206 = vmatprep.mubr.f32.mxu0 0.0
    %207 = vmatmul.mubr.f32.gmra.mrb[0].mxu0 %v98
    %v208 = vpop.f32.mrb[0].mxu0
    %v209 = vadd.f32 %v91, %v208
    %v210 = vpop.f32.mrb[0].mxu0
    %211 = vmatprep.mubr.f32.mxu0 0.0
    %212 = vmatmul.mubr.f32.gmra.mrb[0].mxu0 %v101
    %v213 = vpop.f32.mrb[0].mxu0
    %v214 = vadd.f32 %v91, %v213
    %v215 = vpop.f32.mrb[0].mxu0
    %216 = vmatprep.mubr.f32.mxu0 0.0
    %217 = vmatmul.mubr.f32.gmra.mrb[0].mxu0 %v104
    %v218 = vpop.f32.mrb[0].mxu0
    %v219 = vadd.f32 %v91, %v218
    %v220 = vpop.f32.mrb[0].mxu0
    %221 = vmatprep.mubr.f32.mxu0 0.0
    %222 = vmatmul.mubr.f32.gmra.mrb[0].mxu0 %v107
    %v223 = vpop.f32.mrb[0].mxu0
    %v224 = vadd.f32 %v91, %v223
    %v225 = vpop.f32.mrb[0].mxu0
    %226 = vmatprep.mubr.f32.mxu0 0.0
    %227 = vmatmul.mubr.f32.gmra.mrb[0].mxu0 %v110
    %v228 = vpop.f32.mrb[0].mxu0
    %v229 = vadd.f32 %v91, %v228
    %v230 = vpop.f32.mrb[0].mxu0
    %231 = vmatprep.mubr.f32.mxu0 0.0
    %232 = vmatmul.mubr.f32.gmra.mrb[0].mxu0 %v113
    %v233 = vpop.f32.mrb[0].mxu0
    %v234 = vadd.f32 %v91, %v233
    %v235 = vpop.f32.mrb[0].mxu0
    %236 = vmatprep.mubr.f32.mxu0 0.0
    %237 = vmatmul.mubr.f32.gmra.mrb[0].mxu0 %v116
    %v238 = vpop.f32.mrb[0].mxu0
    %v239 = vadd.f32 %v91, %v238
    %v240 = vpop.f32.mrb[0].mxu0
    %241 = vmatprep.mubr.f32.mxu0 0.0
    %242 = vmatmul.mubr.f32.gmra.mrb[0].mxu0 %v119
    %v243 = vpop.f32.mrb[0].mxu0
    %v244 = vadd.f32 %v91, %v243
    %v245 = vpop.f32.mrb[0].mxu0
    %246 = vmatprep.mubr.f32.mxu0 0.0
    %247 = vmatmul.mubr.f32.gmra.mrb[0].mxu0 %v122
    %v248 = vpop.f32.mrb[0].mxu0
    %v249 = vadd.f32 %v91, %v248
    %v250 = vpop.f32.mrb[0].mxu0
    %251 = vmatprep.mubr.f32.mxu0 0.0
    %252 = vmatmul.mubr.f32.gmra.mrb[0].mxu0 %v125
    %v253 = vpop.f32.mrb[0].mxu0
    %v254 = vadd.f32 %v91, %v253
    %v255 = vpop.f32.mrb[0].mxu0
    %256 = vmatprep.mubr.f32.mxu0 0.0
    %257 = vmatmul.mubr.f32.gmra.mrb[0].mxu0 %v128
    %v258 = vpop.f32.mrb[0].mxu0
    %v259 = vadd.f32 %v91, %v258
    %v260 = vpop.f32.mrb[0].mxu0
    %261 = vmatprep.mubr.f32.mxu0 0.0
    %262 = vmatmul.mubr.f32.gmra.mrb[0].mxu0 %v131
    %v263 = vpop.f32.mrb[0].mxu0
    %v264 = vadd.f32 %v91, %v263
    %v265 = vpop.f32.mrb[0].mxu0
    %266 = vdwg.mxu0
    %v267 = vmax.f32 %v204, 0.0
    %v268 = vmax.f32 %v209, 0.0
    %v269 = vmax.f32 %v214, 0.0
    %v270 = vmax.f32 %v219, 0.0
    %v271 = vmax.f32 %v224, 0.0
    %v272 = vmax.f32 %v229, 0.0
    %v273 = vmax.f32 %v234, 0.0
    %v274 = vmax.f32 %v239, 0.0
    %v275 = vmax.f32 %v244, 0.0
    %v276 = vmax.f32 %v249, 0.0
    %v277 = vmax.f32 %v254, 0.0
    %v278 = vmax.f32 %v259, 0.0
    %v279 = vmax.f32 %v264, 0.0
    %v293 = vrot.slane %v267, 1
    %v294 = vrot.slane %v268, 1
    %v295 = vsel %vm133, %v293, %v294
    %v296 = vrot.slane %v269, 1
    %v297 = vsel %vm133, %v294, %v296
    %v298 = vrot.slane %v270, 1
    %v299 = vsel %vm133, %v296, %v298
    %v300 = vrot.slane %v271, 1
    %v301 = vsel %vm133, %v298, %v300
    %v302 = vrot.slane %v272, 1
    %v303 = vsel %vm133, %v300, %v302
    %v304 = vrot.slane %v273, 1
    %v305 = vsel %vm133, %v302, %v304
    %v306 = vrot.slane %v274, 1
    %v307 = vsel %vm133, %v304, %v306
    %v308 = vrot.slane %v275, 1
    %v309 = vsel %vm133, %v306, %v308
    %v310 = vrot.slane %v276, 1
    %v311 = vsel %vm133, %v308, %v310
    %v312 = vrot.slane %v277, 1
    %v313 = vsel %vm133, %v310, %v312
    %v314 = vrot.slane %v278, 1
    %v315 = vsel %vm133, %v312, %v314
    %v316 = vrot.slane %v279, 1
    %v317 = vsel %vm133, %v314, %v316
    %v330 = vmax.f32 %v267, %v295
    %v331 = vmax.f32 %v268, %v297
    %v332 = vmax.f32 %v269, %v299
    %v333 = vmax.f32 %v270, %v301
    %v334 = vmax.f32 %v271, %v303
    %v335 = vmax.f32 %v272, %v305
    %v336 = vmax.f32 %v273, %v307
    %v337 = vmax.f32 %v274, %v309
    %v338 = vmax.f32 %v275, %v311
    %v339 = vmax.f32 %v276, %v313
    %v340 = vmax.f32 %v277, %v315
    %v341 = vmax.f32 %v278, %v317
    %vm342 = vcmask 1045504
    %v343 = vrot.slane %v267, 2
    %v344 = vrot.slane %v268, 2
    %v345 = vsel %vm342, %v343, %v344
    %v346 = vrot.slane %v269, 2
    %v347 = vsel %vm342, %v344, %v346
    %v348 = vrot.slane %v270, 2
    %v349 = vsel %vm342, %v346, %v348
    %v350 = vrot.slane %v271, 2
    %v351 = vsel %vm342, %v348, %v350
    %v352 = vrot.slane %v272, 2
    %v353 = vsel %vm342, %v350, %v352
    %v354 = vrot.slane %v273, 2
    %v355 = vsel %vm342, %v352, %v354
    %v356 = vrot.slane %v274, 2
    %v357 = vsel %vm342, %v354, %v356
    %v358 = vrot.slane %v275, 2
    %v359 = vsel %vm342, %v356, %v358
    %v360 = vrot.slane %v276, 2
    %v361 = vsel %vm342, %v358, %v360
    %v362 = vrot.slane %v277, 2
    %v363 = vsel %vm342, %v360, %v362
    %v364 = vrot.slane %v278, 2
    %v365 = vsel %vm342, %v362, %v364
    %v366 = vrot.slane %v279, 2
    %v367 = vsel %vm342, %v364, %v366
    %v380 = vmax.f32 %v330, %v345
    %v381 = vmax.f32 %v331, %v347
    %v382 = vmax.f32 %v332, %v349
    %v383 = vmax.f32 %v333, %v351
    %v384 = vmax.f32 %v334, %v353
    %v385 = vmax.f32 %v335, %v355
    %v386 = vmax.f32 %v336, %v357
    %v387 = vmax.f32 %v337, %v359
    %v388 = vmax.f32 %v338, %v361
    %v389 = vmax.f32 %v339, %v363
    %v390 = vmax.f32 %v340, %v365
    %v391 = vmax.f32 %v341, %v367
    %v392 = vld [vmem:[%s3] sm:$0xff]
    %v393 = vld [vmem:[%s3 + $0x8] sm:$0xff]
    %v394 = vld [vmem:[%s3 + $0x10] sm:$0xff]
    %v395 = vld [vmem:[%s3 + $0x18] sm:$0xff]
    %v396 = vld [vmem:[%s3 + $0x20] sm:$0xff]
    %v397 = vld [vmem:[%s3 + $0x28] sm:$0xff]
    %v398 = vld [vmem:[%s3 + $0x30] sm:$0xf]
    %vm399 = vcmask 785408
    %v401 = vsel %vm399, %v392, 0
    %v404 = vsel %vm399, %v393, 0
    %v407 = vsel %vm399, %v394, 0
    %v410 = vsel %vm399, %v395, 0
    %v413 = vsel %vm399, %v396, 0
    %v416 = vsel %vm399, %v397, 0
    %v419 = vsel %vm399, %v398, 0
    %421 = vmatprep.subr.mxu0 0.0
    %422 = vmatpush1.msra.mxu0 %v380
    %423 = vmatprep.subr.mxu0 0.0
    %424 = vmatpush1.msra.mxu0 %v381
    %425 = vmatprep.subr.mxu0 0.0
    %426 = vmatpush1.msra.mxu0 %v382
    %427 = vmatprep.subr.mxu0 0.0
    %428 = vmatpush1.msra.mxu0 %v383
    %429 = vmatprep.subr.mxu0 0.0
    %430 = vmatpush1.msra.mxu0 %v384
    %431 = vmatprep.subr.mxu0 0.0
    %432 = vmatpush1.msra.mxu0 %v385
    %433 = vmatprep.subr.mxu0 0.0
    %434 = vmatpush1.msra.mxu0 %v386
    %435 = vmatprep.subr.mxu0 0.0
    %436 = vmatpush1.msra.mxu0 %v387
    %437 = vmatprep.subr.mxu0 0.0
    %438 = vmatpush1.msra.mxu0 %v388
    %439 = vmatprep.subr.mxu0 0.0
    %440 = vmatpush1.msra.mxu0 %v389
    %441 = vmatprep.subr.mxu0 0.0
    %442 = vmatpush1.msra.mxu0 %v390
    %443 = vmatprep.subr.mxu0 0.0
    %444 = vmatpush1.msra.mxu0 %v391
    %445 = vmatprep.subr.mxu0 0.0
    %446 = vmatpush1.msra.mxu0 0.0
    %447 = vmatprep.subr.mxu0 0.0
    %448 = vmatpush1.msra.mxu0 0.0
    %449 = vmatprep.subr.mxu0 0.0
    %450 = vmatpush1.msra.mxu0 0.0
    %451 = vmatprep.subr.mxu0 0.0
    %452 = vmatpush1.msra.mxu0 0.0
    %453 = vmatprep.subr.mxu0 0.0
    %454 = vmatpush1.msra.mxu0 0.0
    %455 = vmatprep.subr.mxu0 0.0
    %456 = vmatpush1.msra.mxu0 0.0
    %457 = vmatprep.subr.mxu0 0.0
    %458 = vmatpush1.msra.mxu0 0.0
    %459 = vmatprep.subr.mxu0 0.0
    %460 = vmatpush1.msra.mxu0 0.0
    %461 = vmatprep.subr.mxu0 0.0
    %462 = vmatpush1.msra.mxu0 0.0
    %463 = vmatprep.subr.mxu0 0.0
    %464 = vmatpush1.msra.mxu0 0.0
    %465 = vmatprep.subr.mxu0 0.0
    %466 = vmatpush1.msra.mxu0 0.0
    %467 = vmatprep.subr.mxu0 0.0
    %468 = vmatpush1.msra.mxu0 0.0
    %469 = vmatprep.subr.mxu0 0.0
    %470 = vmatpush1.msra.mxu0 0.0
    %471 = vmatprep.subr.mxu0 0.0
    %472 = vmatpush1.msra.mxu0 0.0
    %473 = vmatprep.subr.mxu0 0.0
    %474 = vmatpush1.msra.mxu0 0.0
    %475 = vmatprep.subr.mxu0 0.0
    %476 = vmatpush1.msra.mxu0 0.0
    %477 = vmatprep.subr.mxu0 0.0
    %478 = vmatpush1.msra.mxu0 0.0
    %479 = vmatprep.subr.mxu0 0.0
    %480 = vmatpush1.msra.mxu0 0.0
    %481 = vmatprep.subr.mxu0 0.0
    %482 = vmatpush1.msra.mxu0 0.0
    %483 = vmatprep.subr.mxu0 0.0
    %484 = vmatpush1.msra.mxu0 0.0
    %485 = vmatprep.mubr.f32.mxu0 0.0
    %486 = vmatmul.mubr.f32.gmra.mrb[0].mxu0 %v401
    %v487 = vpop.f32.mrb[0].mxu0
    %v488 = vadd.f32 0.0, %v487
    %v489 = vpop.f32.mrb[0].mxu0
    %490 = vmatprep.mubr.f32.mxu0 0.0
    %491 = vmatmul.mubr.f32.gmra.mrb[0].mxu0 %v404
    %v492 = vpop.f32.mrb[0].mxu0
    %v493 = vadd.f32 0.0, %v492
    %v494 = vpop.f32.mrb[0].mxu0
    %495 = vmatprep.mubr.f32.mxu0 0.0
    %496 = vmatmul.mubr.f32.gmra.mrb[0].mxu0 %v407
    %v497 = vpop.f32.mrb[0].mxu0
    %v498 = vadd.f32 0.0, %v497
    %v499 = vpop.f32.mrb[0].mxu0
    %500 = vmatprep.mubr.f32.mxu0 0.0
    %501 = vmatmul.mubr.f32.gmra.mrb[0].mxu0 %v410
    %v502 = vpop.f32.mrb[0].mxu0
    %v503 = vadd.f32 0.0, %v502
    %v504 = vpop.f32.mrb[0].mxu0
    %505 = vmatprep.mubr.f32.mxu0 0.0
    %506 = vmatmul.mubr.f32.gmra.mrb[0].mxu0 %v413
    %v507 = vpop.f32.mrb[0].mxu0
    %v508 = vadd.f32 0.0, %v507
    %v509 = vpop.f32.mrb[0].mxu0
    %510 = vmatprep.mubr.f32.mxu0 0.0
    %511 = vmatmul.mubr.f32.gmra.mrb[0].mxu0 %v416
    %v512 = vpop.f32.mrb[0].mxu0
    %v513 = vadd.f32 0.0, %v512
    %v514 = vpop.f32.mrb[0].mxu0
    %515 = vmatprep.mubr.f32.mxu0 0.0
    %516 = vmatmul.mubr.f32.gmra.mrb[0].mxu0 %v419
    %v517 = vpop.f32.mrb[0].mxu0
    %v518 = vadd.f32 0.0, %v517
    %v519 = vpop.f32.mrb[0].mxu0
    %520 = vdwg.mxu0
    %v521 = vld [vmem:[#allocation3] sm:$0xff]
    %v522 = vld [vmem:[#allocation3 + $0x8] sm:$0xff]
    %v523 = vld [vmem:[#allocation3 + $0x10] sm:$0xff]
    %v524 = vld [vmem:[#allocation3 + $0x18] sm:$0xff]
    %v525 = vld [vmem:[#allocation3 + $0x20] sm:$0xff]
    %v526 = vld [vmem:[#allocation3 + $0x28] sm:$0xff]
    %v527 = vld [vmem:[#allocation3 + $0x30] sm:$0xff]
    %v528 = vld [vmem:[#allocation3 + $0x38] sm:$0xff]
    %s529 = scalar_lea.vmem [#allocation3], 64
    %v530 = vld [vmem:[%s529] sm:$0xff]
    %v531 = vld [vmem:[%s529 + $0x8] sm:$0xff]
    %v532 = vld [vmem:[%s529 + $0x10] sm:$0xff]
    %v533 = vld [vmem:[%s529 + $0x18] sm:$0xff]
    %v534 = vld [vmem:[%s529 + $0x20] sm:$0xff]
    %v535 = vld [vmem:[%s529 + $0x28] sm:$0xff]
    %v536 = vld [vmem:[%s529 + $0x30] sm:$0xff]
    %v537 = vld [vmem:[%s529 + $0x38] sm:$0xff]
    %v545 = vrot.slane %v488, 1
    %v546 = vrot.slane %v493, 1
    %v547 = vsel %vm133, %v545, %v546
    %v548 = vrot.slane %v498, 1
    %v549 = vsel %vm133, %v546, %v548
    %v550 = vrot.slane %v503, 1
    %v551 = vsel %vm133, %v548, %v550
    %v552 = vrot.slane %v508, 1
    %v553 = vsel %vm133, %v550, %v552
    %v554 = vrot.slane %v513, 1
    %v555 = vsel %vm133, %v552, %v554
    %v556 = vrot.slane %v518, 1
    %v557 = vsel %vm133, %v554, %v556
    %vm558 = vcmask 523264
    %v559 = vsel %vm558, %v547, 0
    %v561 = vsel %vm558, %v549, 0
    %v563 = vsel %vm558, %v551, 0
    %v565 = vsel %vm558, %v553, 0
    %v567 = vsel %vm558, %v555, 0
    %v569 = vsel %vm558, %v557, 0
    %v571 = vsel %vm558, %v556, 0
    %573 = vmatprep.subr.mxu0 0.0
    %574 = vmatpush1.msra.mxu0 %v530
    %575 = vmatprep.subr.mxu0 0.0
    %576 = vmatpush1.msra.mxu0 %v531
    %577 = vmatprep.subr.mxu0 0.0
    %578 = vmatpush1.msra.mxu0 %v532
    %579 = vmatprep.subr.mxu0 0.0
    %580 = vmatpush1.msra.mxu0 %v533
    %581 = vmatprep.subr.mxu0 0.0
    %582 = vmatpush1.msra.mxu0 %v534
    %583 = vmatprep.subr.mxu0 0.0
    %584 = vmatpush1.msra.mxu0 %v535
    %585 = vmatprep.subr.mxu0 0.0
    %586 = vmatpush1.msra.mxu0 %v536
    %587 = vmatprep.subr.mxu0 0.0
    %588 = vmatpush1.msra.mxu0 %v537
    %589 = vmatprep.subr.mxu0 0.0
    %590 = vmatpush1.msra.mxu0 0.0
    %591 = vmatprep.subr.mxu0 0.0
    %592 = vmatpush1.msra.mxu0 0.0
    %593 = vmatprep.subr.mxu0 0.0
    %594 = vmatpush1.msra.mxu0 0.0
    %595 = vmatprep.subr.mxu0 0.0
    %596 = vmatpush1.msra.mxu0 0.0
    %597 = vmatprep.subr.mxu0 0.0
    %598 = vmatpush1.msra.mxu0 0.0
    %599 = vmatprep.subr.mxu0 0.0
    %600 = vmatpush1.msra.mxu0 0.0
    %601 = vmatprep.subr.mxu0 0.0
    %602 = vmatpush1.msra.mxu0 0.0
    %603 = vmatprep.subr.mxu0 0.0
    %604 = vmatpush1.msra.mxu0 0.0
    %605 = vmatprep.subr.mxu0 0.0
    %606 = vmatpush1.msra.mxu0 0.0
    %607 = vmatprep.subr.mxu0 0.0
    %608 = vmatpush1.msra.mxu0 0.0
    %609 = vmatprep.subr.mxu0 0.0
    %610 = vmatpush1.msra.mxu0 0.0
    %611 = vmatprep.subr.mxu0 0.0
    %612 = vmatpush1.msra.mxu0 0.0
    %613 = vmatprep.subr.mxu0 0.0
    %614 = vmatpush1.msra.mxu0 0.0
    %615 = vmatprep.subr.mxu0 0.0
    %616 = vmatpush1.msra.mxu0 0.0
    %617 = vmatprep.subr.mxu0 0.0
    %618 = vmatpush1.msra.mxu0 0.0
    %619 = vmatprep.subr.mxu0 0.0
    %620 = vmatpush1.msra.mxu0 0.0
    %621 = vmatprep.subr.mxu0 0.0
    %622 = vmatpush1.msra.mxu0 0.0
    %623 = vmatprep.subr.mxu0 0.0
    %624 = vmatpush1.msra.mxu0 0.0
    %625 = vmatprep.subr.mxu0 0.0
    %626 = vmatpush1.msra.mxu0 0.0
    %627 = vmatprep.subr.mxu0 0.0
    %628 = vmatpush1.msra.mxu0 0.0
    %629 = vmatprep.subr.mxu0 0.0
    %630 = vmatpush1.msra.mxu0 0.0
    %631 = vmatprep.subr.mxu0 0.0
    %632 = vmatpush1.msra.mxu0 0.0
    %633 = vmatprep.subr.mxu0 0.0
    %634 = vmatpush1.msra.mxu0 0.0
    %635 = vmatprep.subr.mxu0 0.0
    %636 = vmatpush1.msra.mxu0 0.0
    %637 = vmatprep.mubr.f32.mxu0 0.0
    %638 = vmatmul.mubr.f32.gmra.mrb[0].mxu0 %v559
    %v639 = vpop.f32.mrb[0].mxu0
    %v640 = vadd.f32 0.0, %v639
    %v641 = vpop.f32.mrb[0].mxu0
    %642 = vmatprep.mubr.f32.mxu0 0.0
    %643 = vmatmul.mubr.f32.gmra.mrb[0].mxu0 %v561
    %v644 = vpop.f32.mrb[0].mxu0
    %v645 = vadd.f32 0.0, %v644
    %v646 = vpop.f32.mrb[0].mxu0
    %647 = vmatprep.mubr.f32.mxu0 0.0
    %648 = vmatmul.mubr.f32.gmra.mrb[0].mxu0 %v563
    %v649 = vpop.f32.mrb[0].mxu0
    %v650 = vadd.f32 0.0, %v649
    %v651 = vpop.f32.mrb[0].mxu0
    %652 = vmatprep.mubr.f32.mxu0 0.0
    %653 = vmatmul.mubr.f32.gmra.mrb[0].mxu0 %v565
    %v654 = vpop.f32.mrb[0].mxu0
    %v655 = vadd.f32 0.0, %v654
    %v656 = vpop.f32.mrb[0].mxu0
    %657 = vmatprep.mubr.f32.mxu0 0.0
    %658 = vmatmul.mubr.f32.gmra.mrb[0].mxu0 %v567
    %v659 = vpop.f32.mrb[0].mxu0
    %v660 = vadd.f32 0.0, %v659
    %v661 = vpop.f32.mrb[0].mxu0
    %662 = vmatprep.mubr.f32.mxu0 0.0
    %663 = vmatmul.mubr.f32.gmra.mrb[0].mxu0 %v569
    %v664 = vpop.f32.mrb[0].mxu0
    %v665 = vadd.f32 0.0, %v664
    %v666 = vpop.f32.mrb[0].mxu0
    %667 = vmatprep.mubr.f32.mxu0 0.0
    %668 = vmatmul.mubr.f32.gmra.mrb[0].mxu0 %v571
    %v669 = vpop.f32.mrb[0].mxu0
    %v670 = vadd.f32 0.0, %v669
    %v671 = vpop.f32.mrb[0].mxu0
    %672 = vdwg.mxu0
    %v673 = vsel %vm558, %v488, 0
    %v675 = vsel %vm558, %v493, 0
    %v677 = vsel %vm558, %v498, 0
    %v679 = vsel %vm558, %v503, 0
    %v681 = vsel %vm558, %v508, 0
    %v683 = vsel %vm558, %v513, 0
    %v685 = vsel %vm558, %v518, 0
    %687 = vmatprep.subr.mxu0 0.0
    %688 = vmatpush1.msra.mxu0 %v521
    %689 = vmatprep.subr.mxu0 0.0
    %690 = vmatpush1.msra.mxu0 %v522
    %691 = vmatprep.subr.mxu0 0.0
    %692 = vmatpush1.msra.mxu0 %v523
    %693 = vmatprep.subr.mxu0 0.0
    %694 = vmatpush1.msra.mxu0 %v524
    %695 = vmatprep.subr.mxu0 0.0
    %696 = vmatpush1.msra.mxu0 %v525
    %697 = vmatprep.subr.mxu0 0.0
    %698 = vmatpush1.msra.mxu0 %v526
    %699 = vmatprep.subr.mxu0 0.0
    %700 = vmatpush1.msra.mxu0 %v527
    %701 = vmatprep.subr.mxu0 0.0
    %702 = vmatpush1.msra.mxu0 %v528
    %703 = vmatprep.subr.mxu0 0.0
    %704 = vmatpush1.msra.mxu0 0.0
    %705 = vmatprep.subr.mxu0 0.0
    %706 = vmatpush1.msra.mxu0 0.0
    %707 = vmatprep.subr.mxu0 0.0
    %708 = vmatpush1.msra.mxu0 0.0
    %709 = vmatprep.subr.mxu0 0.0
    %710 = vmatpush1.msra.mxu0 0.0
    %711 = vmatprep.subr.mxu0 0.0
    %712 = vmatpush1.msra.mxu0 0.0
    %713 = vmatprep.subr.mxu0 0.0
    %714 = vmatpush1.msra.mxu0 0.0
    %715 = vmatprep.subr.mxu0 0.0
    %716 = vmatpush1.msra.mxu0 0.0
    %717 = vmatprep.subr.mxu0 0.0
    %718 = vmatpush1.msra.mxu0 0.0
    %719 = vmatprep.subr.mxu0 0.0
    %720 = vmatpush1.msra.mxu0 0.0
    %721 = vmatprep.subr.mxu0 0.0
    %722 = vmatpush1.msra.mxu0 0.0
    %723 = vmatprep.subr.mxu0 0.0
    %724 = vmatpush1.msra.mxu0 0.0
    %725 = vmatprep.subr.mxu0 0.0
    %726 = vmatpush1.msra.mxu0 0.0
    %727 = vmatprep.subr.mxu0 0.0
    %728 = vmatpush1.msra.mxu0 0.0
    %729 = vmatprep.subr.mxu0 0.0
    %730 = vmatpush1.msra.mxu0 0.0
    %731 = vmatprep.subr.mxu0 0.0
    %732 = vmatpush1.msra.mxu0 0.0
    %733 = vmatprep.subr.mxu0 0.0
    %734 = vmatpush1.msra.mxu0 0.0
    %735 = vmatprep.subr.mxu0 0.0
    %736 = vmatpush1.msra.mxu0 0.0
    %737 = vmatprep.subr.mxu0 0.0
    %738 = vmatpush1.msra.mxu0 0.0
    %739 = vmatprep.subr.mxu0 0.0
    %740 = vmatpush1.msra.mxu0 0.0
    %741 = vmatprep.subr.mxu0 0.0
    %742 = vmatpush1.msra.mxu0 0.0
    %743 = vmatprep.subr.mxu0 0.0
    %744 = vmatpush1.msra.mxu0 0.0
    %745 = vmatprep.subr.mxu0 0.0
    %746 = vmatpush1.msra.mxu0 0.0
    %747 = vmatprep.subr.mxu0 0.0
    %748 = vmatpush1.msra.mxu0 0.0
    %749 = vmatprep.subr.mxu0 0.0
    %750 = vmatpush1.msra.mxu0 0.0
    %751 = vmatprep.mubr.f32.mxu0 0.0
    %752 = vmatmul.mubr.f32.gmra.mrb[0].mxu0 %v673
    %v753 = vpop.f32.mrb[0].mxu0
    %v754 = vadd.f32 %v640, %v753
    %v755 = vpop.f32.mrb[0].mxu0
    %756 = vmatprep.mubr.f32.mxu0 0.0
    %757 = vmatmul.mubr.f32.gmra.mrb[0].mxu0 %v675
    %v758 = vpop.f32.mrb[0].mxu0
    %v759 = vadd.f32 %v645, %v758
    %v760 = vpop.f32.mrb[0].mxu0
    %761 = vmatprep.mubr.f32.mxu0 0.0
    %762 = vmatmul.mubr.f32.gmra.mrb[0].mxu0 %v677
    %v763 = vpop.f32.mrb[0].mxu0
    %v764 = vadd.f32 %v650, %v763
    %v765 = vpop.f32.mrb[0].mxu0
    %766 = vmatprep.mubr.f32.mxu0 0.0
    %767 = vmatmul.mubr.f32.gmra.mrb[0].mxu0 %v679
    %v768 = vpop.f32.mrb[0].mxu0
    %v769 = vadd.f32 %v655, %v768
    %v770 = vpop.f32.mrb[0].mxu0
    %771 = vmatprep.mubr.f32.mxu0 0.0
    %772 = vmatmul.mubr.f32.gmra.mrb[0].mxu0 %v681
    %v773 = vpop.f32.mrb[0].mxu0
    %v774 = vadd.f32 %v660, %v773
    %v775 = vpop.f32.mrb[0].mxu0
    %776 = vmatprep.mubr.f32.mxu0 0.0
    %777 = vmatmul.mubr.f32.gmra.mrb[0].mxu0 %v683
    %v778 = vpop.f32.mrb[0].mxu0
    %v779 = vadd.f32 %v665, %v778
    %v780 = vpop.f32.mrb[0].mxu0
    %781 = vmatprep.mubr.f32.mxu0 0.0
    %782 = vmatmul.mubr.f32.gmra.mrb[0].mxu0 %v685
    %v783 = vpop.f32.mrb[0].mxu0
    %v784 = vadd.f32 %v670, %v783
    %v785 = vpop.f32.mrb[0].mxu0
    %786 = vdwg.mxu0
    %s787 = scalar_lea.vmem [#allocation3], 128
    %v788 = vld [vmem:[%s787] sm:$0xff]
    %v789 = vld [vmem:[%s787 + $0x8] sm:$0xff]
    %v790 = vld [vmem:[%s787 + $0x10] sm:$0xff]
    %v791 = vld [vmem:[%s787 + $0x18] sm:$0xff]
    %v792 = vld [vmem:[%s787 + $0x20] sm:$0xff]
    %v793 = vld [vmem:[%s787 + $0x28] sm:$0xff]
    %v794 = vld [vmem:[%s787 + $0x30] sm:$0xff]
    %v795 = vld [vmem:[%s787 + $0x38] sm:$0xff]
    %v796 = vrot.slane %v488, 2
    %v797 = vrot.slane %v493, 2
    %v798 = vsel %vm342, %v796, %v797
    %v799 = vrot.slane %v498, 2
    %v800 = vsel %vm342, %v797, %v799
    %v801 = vrot.slane %v503, 2
    %v802 = vsel %vm342, %v799, %v801
    %v803 = vrot.slane %v508, 2
    %v804 = vsel %vm342, %v801, %v803
    %v805 = vrot.slane %v513, 2
    %v806 = vsel %vm342, %v803, %v805
    %v807 = vrot.slane %v518, 2
    %v808 = vsel %vm342, %v805, %v807
    %v809 = vsel %vm558, %v798, 0
    %v811 = vsel %vm558, %v800, 0
    %v813 = vsel %vm558, %v802, 0
    %v815 = vsel %vm558, %v804, 0
    %v817 = vsel %vm558, %v806, 0
    %v819 = vsel %vm558, %v808, 0
    %v821 = vsel %vm558, %v807, 0
    %823 = vmatprep.subr.mxu0 0.0
    %824 = vmatpush1.msra.mxu0 %v788
    %825 = vmatprep.subr.mxu0 0.0
    %826 = vmatpush1.msra.mxu0 %v789
    %827 = vmatprep.subr.mxu0 0.0
    %828 = vmatpush1.msra.mxu0 %v790
    %829 = vmatprep.subr.mxu0 0.0
    %830 = vmatpush1.msra.mxu0 %v791
    %831 = vmatprep.subr.mxu0 0.0
    %832 = vmatpush1.msra.mxu0 %v792
    %833 = vmatprep.subr.mxu0 0.0
    %834 = vmatpush1.msra.mxu0 %v793
    %835 = vmatprep.subr.mxu0 0.0
    %836 = vmatpush1.msra.mxu0 %v794
    %837 = vmatprep.subr.mxu0 0.0
    %838 = vmatpush1.msra.mxu0 %v795
    %839 = vmatprep.subr.mxu0 0.0
    %840 = vmatpush1.msra.mxu0 0.0
    %841 = vmatprep.subr.mxu0 0.0
    %842 = vmatpush1.msra.mxu0 0.0
    %843 = vmatprep.subr.mxu0 0.0
    %844 = vmatpush1.msra.mxu0 0.0
    %845 = vmatprep.subr.mxu0 0.0
    %846 = vmatpush1.msra.mxu0 0.0
    %847 = vmatprep.subr.mxu0 0.0
    %848 = vmatpush1.msra.mxu0 0.0
    %849 = vmatprep.subr.mxu0 0.0
    %850 = vmatpush1.msra.mxu0 0.0
    %851 = vmatprep.subr.mxu0 0.0
    %852 = vmatpush1.msra.mxu0 0.0
    %853 = vmatprep.subr.mxu0 0.0
    %854 = vmatpush1.msra.mxu0 0.0
    %855 = vmatprep.subr.mxu0 0.0
    %856 = vmatpush1.msra.mxu0 0.0
    %857 = vmatprep.subr.mxu0 0.0
    %858 = vmatpush1.msra.mxu0 0.0
    %859 = vmatprep.subr.mxu0 0.0
    %860 = vmatpush1.msra.mxu0 0.0
    %861 = vmatprep.subr.mxu0 0.0
    %862 = vmatpush1.msra.mxu0 0.0
    %863 = vmatprep.subr.mxu0 0.0
    %864 = vmatpush1.msra.mxu0 0.0
    %865 = vmatprep.subr.mxu0 0.0
    %866 = vmatpush1.msra.mxu0 0.0
    %867 = vmatprep.subr.mxu0 0.0
    %868 = vmatpush1.msra.mxu0 0.0
    %869 = vmatprep.subr.mxu0 0.0
    %870 = vmatpush1.msra.mxu0 0.0
    %871 = vmatprep.subr.mxu0 0.0
    %872 = vmatpush1.msra.mxu0 0.0
    %873 = vmatprep.subr.mxu0 0.0
    %874 = vmatpush1.msra.mxu0 0.0
    %875 = vmatprep.subr.mxu0 0.0
    %876 = vmatpush1.msra.mxu0 0.0
    %877 = vmatprep.subr.mxu0 0.0
    %878 = vmatpush1.msra.mxu0 0.0
    %879 = vmatprep.subr.mxu0 0.0
    %880 = vmatpush1.msra.mxu0 0.0
    %881 = vmatprep.subr.mxu0 0.0
    %882 = vmatpush1.msra.mxu0 0.0
    %883 = vmatprep.subr.mxu0 0.0
    %884 = vmatpush1.msra.mxu0 0.0
    %885 = vmatprep.subr.mxu0 0.0
    %886 = vmatpush1.msra.mxu0 0.0
    %887 = vmatprep.mubr.f32.mxu0 0.0
    %888 = vmatmul.mubr.f32.gmra.mrb[0].mxu0 %v809
    %v889 = vpop.f32.mrb[0].mxu0
    %v890 = vadd.f32 0.0, %v889
    %v891 = vpop.f32.mrb[0].mxu0
    %892 = vmatprep.mubr.f32.mxu0 0.0
    %893 = vmatmul.mubr.f32.gmra.mrb[0].mxu0 %v811
    %v894 = vpop.f32.mrb[0].mxu0
    %v895 = vadd.f32 0.0, %v894
    %v896 = vpop.f32.mrb[0].mxu0
    %897 = vmatprep.mubr.f32.mxu0 0.0
    %898 = vmatmul.mubr.f32.gmra.mrb[0].mxu0 %v813
    %v899 = vpop.f32.mrb[0].mxu0
    %v900 = vadd.f32 0.0, %v899
    %v901 = vpop.f32.mrb[0].mxu0
    %902 = vmatprep.mubr.f32.mxu0 0.0
    %903 = vmatmul.mubr.f32.gmra.mrb[0].mxu0 %v815
    %v904 = vpop.f32.mrb[0].mxu0
    %v905 = vadd.f32 0.0, %v904
    %v906 = vpop.f32.mrb[0].mxu0
    %907 = vmatprep.mubr.f32.mxu0 0.0
    %908 = vmatmul.mubr.f32.gmra.mrb[0].mxu0 %v817
    %v909 = vpop.f32.mrb[0].mxu0
    %v910 = vadd.f32 0.0, %v909
    %v911 = vpop.f32.mrb[0].mxu0
    %912 = vmatprep.mubr.f32.mxu0 0.0
    %913 = vmatmul.mubr.f32.gmra.mrb[0].mxu0 %v819
    %v914 = vpop.f32.mrb[0].mxu0
    %v915 = vadd.f32 0.0, %v914
    %v916 = vpop.f32.mrb[0].mxu0
    %917 = vmatprep.mubr.f32.mxu0 0.0
    %918 = vmatmul.mubr.f32.gmra.mrb[0].mxu0 %v821
    %v919 = vpop.f32.mrb[0].mxu0
    %v920 = vadd.f32 0.0, %v919
    %v921 = vpop.f32.mrb[0].mxu0
    %922 = vdwg.mxu0
    %v923 = vadd.f32 %v754, %v890
    %v924 = vadd.f32 %v759, %v895
    %v925 = vadd.f32 %v764, %v900
    %v926 = vadd.f32 %v769, %v905
    %v927 = vadd.f32 %v774, %v910
    %v928 = vadd.f32 %v779, %v915
    %v929 = vadd.f32 %v784, %v920
    %v930 = vld [vmem:[%s5] sm:$0x1]
    %v932 = vlaneseq
    %v933 = vshrl.u32 %v932, 7
    %v934 = vsub.s32 0, %v933
    %v935 = vrot.slane %v930, %v934
    %v937 = vadd.f32 %v923, %v935
    %v938 = vadd.f32 %v924, %v935
    %v939 = vadd.f32 %v925, %v935
    %v940 = vadd.f32 %v926, %v935
    %v941 = vadd.f32 %v927, %v935
    %v942 = vadd.f32 %v928, %v935
    %v943 = vadd.f32 %v929, %v935
    %v944 = vmax.f32 %v937, 0.0
    %v945 = vmax.f32 %v938, 0.0
    %v946 = vmax.f32 %v939, 0.0
    %v947 = vmax.f32 %v940, 0.0
    %v948 = vmax.f32 %v941, 0.0
    %v949 = vmax.f32 %v942, 0.0
    %v950 = vmax.f32 %v943, 0.0
    %v958 = vrot.slane %v944, 1
    %v959 = vrot.slane %v945, 1
    %v960 = vsel %vm133, %v958, %v959
    %v961 = vrot.slane %v946, 1
    %v962 = vsel %vm133, %v959, %v961
    %v963 = vrot.slane %v947, 1
    %v964 = vsel %vm133, %v961, %v963
    %v965 = vrot.slane %v948, 1
    %v966 = vsel %vm133, %v963, %v965
    %v967 = vrot.slane %v949, 1
    %v968 = vsel %vm133, %v965, %v967
    %v969 = vrot.slane %v950, 1
    %v970 = vsel %vm133, %v967, %v969
    %v977 = vmax.f32 %v944, %v960
    %v978 = vmax.f32 %v945, %v962
    %v979 = vmax.f32 %v946, %v964
    %v980 = vmax.f32 %v947, %v966
    %v981 = vmax.f32 %v948, %v968
    %v982 = vmax.f32 %v949, %v970
    %v983 = vrot.slane %v944, 2
    %v984 = vrot.slane %v945, 2
    %v985 = vsel %vm342, %v983, %v984
    %v986 = vrot.slane %v946, 2
    %v987 = vsel %vm342, %v984, %v986
    %v988 = vrot.slane %v947, 2
    %v989 = vsel %vm342, %v986, %v988
    %v990 = vrot.slane %v948, 2
    %v991 = vsel %vm342, %v988, %v990
    %v992 = vrot.slane %v949, 2
    %v993 = vsel %vm342, %v990, %v992
    %v994 = vrot.slane %v950, 2
    %v995 = vsel %vm342, %v992, %v994
    %v1002 = vmax.f32 %v977, %v985
    %v1003 = vmax.f32 %v978, %v987
    %v1004 = vmax.f32 %v979, %v989
    %v1005 = vmax.f32 %v980, %v991
    %v1006 = vmax.f32 %v981, %v993
    %v1007 = vmax.f32 %v982, %v995
    %v1008 = vld [vmem:[%s6] sm:$0x3]
    %vm1009 = vcmask 392192
    %v1011 = vsel %vm1009, %v1008, 0
    %1013 = vmatprep.subr.mxu0 0.0
    %1014 = vmatpush1.msra.mxu0 %v1002
    %1015 = vmatprep.subr.mxu0 0.0
    %1016 = vmatpush1.msra.mxu0 %v1003
    %1017 = vmatprep.subr.mxu0 0.0
    %1018 = vmatpush1.msra.mxu0 %v1004
    %1019 = vmatprep.subr.mxu0 0.0
    %1020 = vmatpush1.msra.mxu0 %v1005
    %1021 = vmatprep.subr.mxu0 0.0
    %1022 = vmatpush1.msra.mxu0 %v1006
    %1023 = vmatprep.subr.mxu0 0.0
    %1024 = vmatpush1.msra.mxu0 %v1007
    %1025 = vmatprep.subr.mxu0 0.0
    %1026 = vmatpush1.msra.mxu0 0.0
    %1027 = vmatprep.subr.mxu0 0.0
    %1028 = vmatpush1.msra.mxu0 0.0
    %1029 = vmatprep.subr.mxu0 0.0
    %1030 = vmatpush1.msra.mxu0 0.0
    %1031 = vmatprep.subr.mxu0 0.0
    %1032 = vmatpush1.msra.mxu0 0.0
    %1033 = vmatprep.subr.mxu0 0.0
    %1034 = vmatpush1.msra.mxu0 0.0
    %1035 = vmatprep.subr.mxu0 0.0
    %1036 = vmatpush1.msra.mxu0 0.0
    %1037 = vmatprep.subr.mxu0 0.0
    %1038 = vmatpush1.msra.mxu0 0.0
    %1039 = vmatprep.subr.mxu0 0.0
    %1040 = vmatpush1.msra.mxu0 0.0
    %1041 = vmatprep.subr.mxu0 0.0
    %1042 = vmatpush1.msra.mxu0 0.0
    %1043 = vmatprep.subr.mxu0 0.0
    %1044 = vmatpush1.msra.mxu0 0.0
    %1045 = vmatprep.subr.mxu0 0.0
    %1046 = vmatpush1.msra.mxu0 0.0
    %1047 = vmatprep.subr.mxu0 0.0
    %1048 = vmatpush1.msra.mxu0 0.0
    %1049 = vmatprep.subr.mxu0 0.0
    %1050 = vmatpush1.msra.mxu0 0.0
    %1051 = vmatprep.subr.mxu0 0.0
    %1052 = vmatpush1.msra.mxu0 0.0
    %1053 = vmatprep.subr.mxu0 0.0
    %1054 = vmatpush1.msra.mxu0 0.0
    %1055 = vmatprep.subr.mxu0 0.0
    %1056 = vmatpush1.msra.mxu0 0.0
    %1057 = vmatprep.subr.mxu0 0.0
    %1058 = vmatpush1.msra.mxu0 0.0
    %1059 = vmatprep.subr.mxu0 0.0
    %1060 = vmatpush1.msra.mxu0 0.0
    %1061 = vmatprep.subr.mxu0 0.0
    %1062 = vmatpush1.msra.mxu0 0.0
    %1063 = vmatprep.subr.mxu0 0.0
    %1064 = vmatpush1.msra.mxu0 0.0
    %1065 = vmatprep.subr.mxu0 0.0
    %1066 = vmatpush1.msra.mxu0 0.0
    %1067 = vmatprep.subr.mxu0 0.0
    %1068 = vmatpush1.msra.mxu0 0.0
    %1069 = vmatprep.subr.mxu0 0.0
    %1070 = vmatpush1.msra.mxu0 0.0
    %1071 = vmatprep.subr.mxu0 0.0
    %1072 = vmatpush1.msra.mxu0 0.0
    %1073 = vmatprep.subr.mxu0 0.0
    %1074 = vmatpush1.msra.mxu0 0.0
    %1075 = vmatprep.subr.mxu0 0.0
    %1076 = vmatpush1.msra.mxu0 0.0
    %1077 = vmatprep.mubr.f32.mxu0 0.0
    %1078 = vmatmul.mubr.f32.gmra.mrb[0].mxu0 %v1011
    %v1079 = vpop.f32.mrb[0].mxu0
    %v1080 = vadd.f32 0.0, %v1079
    %v1081 = vpop.f32.mrb[0].mxu0
    %1082 = vdwg.mxu0
    %v1083 = vld [vmem:[#allocation5] sm:$0xff]
    %v1084 = vld [vmem:[#allocation5 + $0x8] sm:$0xff]
    %v1085 = vld [vmem:[#allocation5 + $0x10] sm:$0xff]
    %v1086 = vld [vmem:[#allocation5 + $0x18] sm:$0xff]
    %v1087 = vld [vmem:[#allocation5 + $0x20] sm:$0xff]
    %v1088 = vld [vmem:[#allocation5 + $0x28] sm:$0xff]
    %v1089 = vld [vmem:[#allocation5 + $0x30] sm:$0xff]
    %v1090 = vld [vmem:[#allocation5 + $0x38] sm:$0xff]
    %s1091 = scalar_lea.vmem %s6, 2
    %v1092 = vld [vmem:[%s1091] sm:$0x3]
    %v1094 = vsel %vm1009, %v1092, 0
    %1096 = vmatprep.subr.mxu0 0.0
    %1097 = vmatpush1.msra.mxu0 %v1002
    %1098 = vmatprep.subr.mxu0 0.0
    %1099 = vmatpush1.msra.mxu0 %v1003
    %1100 = vmatprep.subr.mxu0 0.0
    %1101 = vmatpush1.msra.mxu0 %v1004
    %1102 = vmatprep.subr.mxu0 0.0
    %1103 = vmatpush1.msra.mxu0 %v1005
    %1104 = vmatprep.subr.mxu0 0.0
    %1105 = vmatpush1.msra.mxu0 %v1006
    %1106 = vmatprep.subr.mxu0 0.0
    %1107 = vmatpush1.msra.mxu0 %v1007
    %1108 = vmatprep.subr.mxu0 0.0
    %1109 = vmatpush1.msra.mxu0 0.0
    %1110 = vmatprep.subr.mxu0 0.0
    %1111 = vmatpush1.msra.mxu0 0.0
    %1112 = vmatprep.subr.mxu0 0.0
    %1113 = vmatpush1.msra.mxu0 0.0
    %1114 = vmatprep.subr.mxu0 0.0
    %1115 = vmatpush1.msra.mxu0 0.0
    %1116 = vmatprep.subr.mxu0 0.0
    %1117 = vmatpush1.msra.mxu0 0.0
    %1118 = vmatprep.subr.mxu0 0.0
    %1119 = vmatpush1.msra.mxu0 0.0
    %1120 = vmatprep.subr.mxu0 0.0
    %1121 = vmatpush1.msra.mxu0 0.0
    %1122 = vmatprep.subr.mxu0 0.0
    %1123 = vmatpush1.msra.mxu0 0.0
    %1124 = vmatprep.subr.mxu0 0.0
    %1125 = vmatpush1.msra.mxu0 0.0
    %1126 = vmatprep.subr.mxu0 0.0
    %1127 = vmatpush1.msra.mxu0 0.0
    %1128 = vmatprep.subr.mxu0 0.0
    %1129 = vmatpush1.msra.mxu0 0.0
    %1130 = vmatprep.subr.mxu0 0.0
    %1131 = vmatpush1.msra.mxu0 0.0
    %1132 = vmatprep.subr.mxu0 0.0
    %1133 = vmatpush1.msra.mxu0 0.0
    %1134 = vmatprep.subr.mxu0 0.0
    %1135 = vmatpush1.msra.mxu0 0.0
    %1136 = vmatprep.subr.mxu0 0.0
    %1137 = vmatpush1.msra.mxu0 0.0
    %1138 = vmatprep.subr.mxu0 0.0
    %1139 = vmatpush1.msra.mxu0 0.0
    %1140 = vmatprep.subr.mxu0 0.0
    %1141 = vmatpush1.msra.mxu0 0.0
    %1142 = vmatprep.subr.mxu0 0.0
    %1143 = vmatpush1.msra.mxu0 0.0
    %1144 = vmatprep.subr.mxu0 0.0
    %1145 = vmatpush1.msra.mxu0 0.0
    %1146 = vmatprep.subr.mxu0 0.0
    %1147 = vmatpush1.msra.mxu0 0.0
    %1148 = vmatprep.subr.mxu0 0.0
    %1149 = vmatpush1.msra.mxu0 0.0
    %1150 = vmatprep.subr.mxu0 0.0
    %1151 = vmatpush1.msra.mxu0 0.0
    %1152 = vmatprep.subr.mxu0 0.0
    %1153 = vmatpush1.msra.mxu0 0.0
    %1154 = vmatprep.subr.mxu0 0.0
    %1155 = vmatpush1.msra.mxu0 0.0
    %1156 = vmatprep.subr.mxu0 0.0
    %1157 = vmatpush1.msra.mxu0 0.0
    %1158 = vmatprep.subr.mxu0 0.0
    %1159 = vmatpush1.msra.mxu0 0.0
    %1160 = vmatprep.mubr.f32.mxu0 0.0
    %1161 = vmatmul.mubr.f32.gmra.mrb[0].mxu0 %v1094
    %v1162 = vpop.f32.mrb[0].mxu0
    %v1163 = vadd.f32 0.0, %v1162
    %v1164 = vpop.f32.mrb[0].mxu0
    %1165 = vdwg.mxu0
    %s1166 = scalar_lea.vmem [#allocation5], 64
    %v1167 = vld [vmem:[%s1166] sm:$0xff]
    %v1168 = vld [vmem:[%s1166 + $0x8] sm:$0xff]
    %v1169 = vld [vmem:[%s1166 + $0x10] sm:$0xff]
    %v1170 = vld [vmem:[%s1166 + $0x18] sm:$0xff]
    %v1171 = vld [vmem:[%s1166 + $0x20] sm:$0xff]
    %v1172 = vld [vmem:[%s1166 + $0x28] sm:$0xff]
    %v1173 = vld [vmem:[%s1166 + $0x30] sm:$0xff]
    %v1174 = vld [vmem:[%s1166 + $0x38] sm:$0xff]
    %v1176 = vsel %vm558, %v1163, 0
    %1178 = vmatprep.subr.mxu0 0.0
    %1179 = vmatpush1.msra.mxu0 %v1167
    %1180 = vmatprep.subr.mxu0 0.0
    %1181 = vmatpush1.msra.mxu0 %v1168
    %1182 = vmatprep.subr.mxu0 0.0
    %1183 = vmatpush1.msra.mxu0 %v1169
    %1184 = vmatprep.subr.mxu0 0.0
    %1185 = vmatpush1.msra.mxu0 %v1170
    %1186 = vmatprep.subr.mxu0 0.0
    %1187 = vmatpush1.msra.mxu0 %v1171
    %1188 = vmatprep.subr.mxu0 0.0
    %1189 = vmatpush1.msra.mxu0 %v1172
    %1190 = vmatprep.subr.mxu0 0.0
    %1191 = vmatpush1.msra.mxu0 %v1173
    %1192 = vmatprep.subr.mxu0 0.0
    %1193 = vmatpush1.msra.mxu0 %v1174
    %1194 = vmatprep.subr.mxu0 0.0
    %1195 = vmatpush1.msra.mxu0 0.0
    %1196 = vmatprep.subr.mxu0 0.0
    %1197 = vmatpush1.msra.mxu0 0.0
    %1198 = vmatprep.subr.mxu0 0.0
    %1199 = vmatpush1.msra.mxu0 0.0
    %1200 = vmatprep.subr.mxu0 0.0
    %1201 = vmatpush1.msra.mxu0 0.0
    %1202 = vmatprep.subr.mxu0 0.0
    %1203 = vmatpush1.msra.mxu0 0.0
    %1204 = vmatprep.subr.mxu0 0.0
    %1205 = vmatpush1.msra.mxu0 0.0
    %1206 = vmatprep.subr.mxu0 0.0
    %1207 = vmatpush1.msra.mxu0 0.0
    %1208 = vmatprep.subr.mxu0 0.0
    %1209 = vmatpush1.msra.mxu0 0.0
    %1210 = vmatprep.subr.mxu0 0.0
    %1211 = vmatpush1.msra.mxu0 0.0
    %1212 = vmatprep.subr.mxu0 0.0
    %1213 = vmatpush1.msra.mxu0 0.0
    %1214 = vmatprep.subr.mxu0 0.0
    %1215 = vmatpush1.msra.mxu0 0.0
    %1216 = vmatprep.subr.mxu0 0.0
    %1217 = vmatpush1.msra.mxu0 0.0
    %1218 = vmatprep.subr.mxu0 0.0
    %1219 = vmatpush1.msra.mxu0 0.0
    %1220 = vmatprep.subr.mxu0 0.0
    %1221 = vmatpush1.msra.mxu0 0.0
    %1222 = vmatprep.subr.mxu0 0.0
    %1223 = vmatpush1.msra.mxu0 0.0
    %1224 = vmatprep.subr.mxu0 0.0
    %1225 = vmatpush1.msra.mxu0 0.0
    %1226 = vmatprep.subr.mxu0 0.0
    %1227 = vmatpush1.msra.mxu0 0.0
    %1228 = vmatprep.subr.mxu0 0.0
    %1229 = vmatpush1.msra.mxu0 0.0
    %1230 = vmatprep.subr.mxu0 0.0
    %1231 = vmatpush1.msra.mxu0 0.0
    %1232 = vmatprep.subr.mxu0 0.0
    %1233 = vmatpush1.msra.mxu0 0.0
    %1234 = vmatprep.subr.mxu0 0.0
    %1235 = vmatpush1.msra.mxu0 0.0
    %1236 = vmatprep.subr.mxu0 0.0
    %1237 = vmatpush1.msra.mxu0 0.0
    %1238 = vmatprep.subr.mxu0 0.0
    %1239 = vmatpush1.msra.mxu0 0.0
    %1240 = vmatprep.subr.mxu0 0.0
    %1241 = vmatpush1.msra.mxu0 0.0
    %1242 = vmatprep.mubr.f32.mxu0 0.0
    %1243 = vmatmul.mubr.f32.gmra.mrb[0].mxu0 %v1176
    %v1244 = vpop.f32.mrb[0].mxu0
    %v1245 = vadd.f32 0.0, %v1244
    %v1246 = vpop.f32.mrb[0].mxu0
    %1247 = vdwg.mxu0
    %v1249 = vsel %vm558, %v1080, 0
    %1251 = vmatprep.subr.mxu0 0.0
    %1252 = vmatpush1.msra.mxu0 %v1083
    %1253 = vmatprep.subr.mxu0 0.0
    %1254 = vmatpush1.msra.mxu0 %v1084
    %1255 = vmatprep.subr.mxu0 0.0
    %1256 = vmatpush1.msra.mxu0 %v1085
    %1257 = vmatprep.subr.mxu0 0.0
    %1258 = vmatpush1.msra.mxu0 %v1086
    %1259 = vmatprep.subr.mxu0 0.0
    %1260 = vmatpush1.msra.mxu0 %v1087
    %1261 = vmatprep.subr.mxu0 0.0
    %1262 = vmatpush1.msra.mxu0 %v1088
    %1263 = vmatprep.subr.mxu0 0.0
    %1264 = vmatpush1.msra.mxu0 %v1089
    %1265 = vmatprep.subr.mxu0 0.0
    %1266 = vmatpush1.msra.mxu0 %v1090
    %1267 = vmatprep.subr.mxu0 0.0
    %1268 = vmatpush1.msra.mxu0 0.0
    %1269 = vmatprep.subr.mxu0 0.0
    %1270 = vmatpush1.msra.mxu0 0.0
    %1271 = vmatprep.subr.mxu0 0.0
    %1272 = vmatpush1.msra.mxu0 0.0
    %1273 = vmatprep.subr.mxu0 0.0
    %1274 = vmatpush1.msra.mxu0 0.0
    %1275 = vmatprep.subr.mxu0 0.0
    %1276 = vmatpush1.msra.mxu0 0.0
    %1277 = vmatprep.subr.mxu0 0.0
    %1278 = vmatpush1.msra.mxu0 0.0
    %1279 = vmatprep.subr.mxu0 0.0
    %1280 = vmatpush1.msra.mxu0 0.0
    %1281 = vmatprep.subr.mxu0 0.0
    %1282 = vmatpush1.msra.mxu0 0.0
    %1283 = vmatprep.subr.mxu0 0.0
    %1284 = vmatpush1.msra.mxu0 0.0
    %1285 = vmatprep.subr.mxu0 0.0
    %1286 = vmatpush1.msra.mxu0 0.0
    %1287 = vmatprep.subr.mxu0 0.0
    %1288 = vmatpush1.msra.mxu0 0.0
    %1289 = vmatprep.subr.mxu0 0.0
    %1290 = vmatpush1.msra.mxu0 0.0
    %1291 = vmatprep.subr.mxu0 0.0
    %1292 = vmatpush1.msra.mxu0 0.0
    %1293 = vmatprep.subr.mxu0 0.0
    %1294 = vmatpush1.msra.mxu0 0.0
    %1295 = vmatprep.subr.mxu0 0.0
    %1296 = vmatpush1.msra.mxu0 0.0
    %1297 = vmatprep.subr.mxu0 0.0
    %1298 = vmatpush1.msra.mxu0 0.0
    %1299 = vmatprep.subr.mxu0 0.0
    %1300 = vmatpush1.msra.mxu0 0.0
    %1301 = vmatprep.subr.mxu0 0.0
    %1302 = vmatpush1.msra.mxu0 0.0
    %1303 = vmatprep.subr.mxu0 0.0
    %1304 = vmatpush1.msra.mxu0 0.0
    %1305 = vmatprep.subr.mxu0 0.0
    %1306 = vmatpush1.msra.mxu0 0.0
    %1307 = vmatprep.subr.mxu0 0.0
    %1308 = vmatpush1.msra.mxu0 0.0
    %1309 = vmatprep.subr.mxu0 0.0
    %1310 = vmatpush1.msra.mxu0 0.0
    %1311 = vmatprep.subr.mxu0 0.0
    %1312 = vmatpush1.msra.mxu0 0.0
    %1313 = vmatprep.subr.mxu0 0.0
    %1314 = vmatpush1.msra.mxu0 0.0
    %1315 = vmatprep.mubr.f32.mxu0 0.0
    %1316 = vmatmul.mubr.f32.gmra.mrb[0].mxu0 %v1249
    %v1317 = vpop.f32.mrb[0].mxu0
    %v1318 = vadd.f32 %v1245, %v1317
    %v1319 = vpop.f32.mrb[0].mxu0
    %1320 = vdwg.mxu0
    %s1321 = scalar_lea.vmem %s6, 4
    %v1322 = vld [vmem:[%s1321] sm:$0x3]
    %v1324 = vsel %vm1009, %v1322, 0
    %1326 = vmatprep.subr.mxu0 0.0
    %1327 = vmatpush1.msra.mxu0 %v1002
    %1328 = vmatprep.subr.mxu0 0.0
    %1329 = vmatpush1.msra.mxu0 %v1003
    %1330 = vmatprep.subr.mxu0 0.0
    %1331 = vmatpush1.msra.mxu0 %v1004
    %1332 = vmatprep.subr.mxu0 0.0
    %1333 = vmatpush1.msra.mxu0 %v1005
    %1334 = vmatprep.subr.mxu0 0.0
    %1335 = vmatpush1.msra.mxu0 %v1006
    %1336 = vmatprep.subr.mxu0 0.0
    %1337 = vmatpush1.msra.mxu0 %v1007
    %1338 = vmatprep.subr.mxu0 0.0
    %1339 = vmatpush1.msra.mxu0 0.0
    %1340 = vmatprep.subr.mxu0 0.0
    %1341 = vmatpush1.msra.mxu0 0.0
    %1342 = vmatprep.subr.mxu0 0.0
    %1343 = vmatpush1.msra.mxu0 0.0
    %1344 = vmatprep.subr.mxu0 0.0
    %1345 = vmatpush1.msra.mxu0 0.0
    %1346 = vmatprep.subr.mxu0 0.0
    %1347 = vmatpush1.msra.mxu0 0.0
    %1348 = vmatprep.subr.mxu0 0.0
    %1349 = vmatpush1.msra.mxu0 0.0
    %1350 = vmatprep.subr.mxu0 0.0
    %1351 = vmatpush1.msra.mxu0 0.0
    %1352 = vmatprep.subr.mxu0 0.0
    %1353 = vmatpush1.msra.mxu0 0.0
    %1354 = vmatprep.subr.mxu0 0.0
    %1355 = vmatpush1.msra.mxu0 0.0
    %1356 = vmatprep.subr.mxu0 0.0
    %1357 = vmatpush1.msra.mxu0 0.0
    %1358 = vmatprep.subr.mxu0 0.0
    %1359 = vmatpush1.msra.mxu0 0.0
    %1360 = vmatprep.subr.mxu0 0.0
    %1361 = vmatpush1.msra.mxu0 0.0
    %1362 = vmatprep.subr.mxu0 0.0
    %1363 = vmatpush1.msra.mxu0 0.0
    %1364 = vmatprep.subr.mxu0 0.0
    %1365 = vmatpush1.msra.mxu0 0.0
    %1366 = vmatprep.subr.mxu0 0.0
    %1367 = vmatpush1.msra.mxu0 0.0
    %1368 = vmatprep.subr.mxu0 0.0
    %1369 = vmatpush1.msra.mxu0 0.0
    %1370 = vmatprep.subr.mxu0 0.0
    %1371 = vmatpush1.msra.mxu0 0.0
    %1372 = vmatprep.subr.mxu0 0.0
    %1373 = vmatpush1.msra.mxu0 0.0
    %1374 = vmatprep.subr.mxu0 0.0
    %1375 = vmatpush1.msra.mxu0 0.0
    %1376 = vmatprep.subr.mxu0 0.0
    %1377 = vmatpush1.msra.mxu0 0.0
    %1378 = vmatprep.subr.mxu0 0.0
    %1379 = vmatpush1.msra.mxu0 0.0
    %1380 = vmatprep.subr.mxu0 0.0
    %1381 = vmatpush1.msra.mxu0 0.0
    %1382 = vmatprep.subr.mxu0 0.0
    %1383 = vmatpush1.msra.mxu0 0.0
    %1384 = vmatprep.subr.mxu0 0.0
    %1385 = vmatpush1.msra.mxu0 0.0
    %1386 = vmatprep.subr.mxu0 0.0
    %1387 = vmatpush1.msra.mxu0 0.0
    %1388 = vmatprep.subr.mxu0 0.0
    %1389 = vmatpush1.msra.mxu0 0.0
    %1390 = vmatprep.mubr.f32.mxu0 0.0
    %1391 = vmatmul.mubr.f32.gmra.mrb[0].mxu0 %v1324
    %v1392 = vpop.f32.mrb[0].mxu0
    %v1393 = vadd.f32 0.0, %v1392
    %v1394 = vpop.f32.mrb[0].mxu0
    %1395 = vdwg.mxu0
    %s1396 = scalar_lea.vmem [#allocation5], 128
    %v1397 = vld [vmem:[%s1396] sm:$0xff]
    %v1398 = vld [vmem:[%s1396 + $0x8] sm:$0xff]
    %v1399 = vld [vmem:[%s1396 + $0x10] sm:$0xff]
    %v1400 = vld [vmem:[%s1396 + $0x18] sm:$0xff]
    %v1401 = vld [vmem:[%s1396 + $0x20] sm:$0xff]
    %v1402 = vld [vmem:[%s1396 + $0x28] sm:$0xff]
    %v1403 = vld [vmem:[%s1396 + $0x30] sm:$0xff]
    %v1404 = vld [vmem:[%s1396 + $0x38] sm:$0xff]
    %v1406 = vsel %vm558, %v1393, 0
    %1408 = vmatprep.subr.mxu0 0.0
    %1409 = vmatpush1.msra.mxu0 %v1397
    %1410 = vmatprep.subr.mxu0 0.0
    %1411 = vmatpush1.msra.mxu0 %v1398
    %1412 = vmatprep.subr.mxu0 0.0
    %1413 = vmatpush1.msra.mxu0 %v1399
    %1414 = vmatprep.subr.mxu0 0.0
    %1415 = vmatpush1.msra.mxu0 %v1400
    %1416 = vmatprep.subr.mxu0 0.0
    %1417 = vmatpush1.msra.mxu0 %v1401
    %1418 = vmatprep.subr.mxu0 0.0
    %1419 = vmatpush1.msra.mxu0 %v1402
    %1420 = vmatprep.subr.mxu0 0.0
    %1421 = vmatpush1.msra.mxu0 %v1403
    %1422 = vmatprep.subr.mxu0 0.0
    %1423 = vmatpush1.msra.mxu0 %v1404
    %1424 = vmatprep.subr.mxu0 0.0
    %1425 = vmatpush1.msra.mxu0 0.0
    %1426 = vmatprep.subr.mxu0 0.0
    %1427 = vmatpush1.msra.mxu0 0.0
    %1428 = vmatprep.subr.mxu0 0.0
    %1429 = vmatpush1.msra.mxu0 0.0
    %1430 = vmatprep.subr.mxu0 0.0
    %1431 = vmatpush1.msra.mxu0 0.0
    %1432 = vmatprep.subr.mxu0 0.0
    %1433 = vmatpush1.msra.mxu0 0.0
    %1434 = vmatprep.subr.mxu0 0.0
    %1435 = vmatpush1.msra.mxu0 0.0
    %1436 = vmatprep.subr.mxu0 0.0
    %1437 = vmatpush1.msra.mxu0 0.0
    %1438 = vmatprep.subr.mxu0 0.0
    %1439 = vmatpush1.msra.mxu0 0.0
    %1440 = vmatprep.subr.mxu0 0.0
    %1441 = vmatpush1.msra.mxu0 0.0
    %1442 = vmatprep.subr.mxu0 0.0
    %1443 = vmatpush1.msra.mxu0 0.0
    %1444 = vmatprep.subr.mxu0 0.0
    %1445 = vmatpush1.msra.mxu0 0.0
    %1446 = vmatprep.subr.mxu0 0.0
    %1447 = vmatpush1.msra.mxu0 0.0
    %1448 = vmatprep.subr.mxu0 0.0
    %1449 = vmatpush1.msra.mxu0 0.0
    %1450 = vmatprep.subr.mxu0 0.0
    %1451 = vmatpush1.msra.mxu0 0.0
    %1452 = vmatprep.subr.mxu0 0.0
    %1453 = vmatpush1.msra.mxu0 0.0
    %1454 = vmatprep.subr.mxu0 0.0
    %1455 = vmatpush1.msra.mxu0 0.0
    %1456 = vmatprep.subr.mxu0 0.0
    %1457 = vmatpush1.msra.mxu0 0.0
    %1458 = vmatprep.subr.mxu0 0.0
    %1459 = vmatpush1.msra.mxu0 0.0
    %1460 = vmatprep.subr.mxu0 0.0
    %1461 = vmatpush1.msra.mxu0 0.0
    %1462 = vmatprep.subr.mxu0 0.0
    %1463 = vmatpush1.msra.mxu0 0.0
    %1464 = vmatprep.subr.mxu0 0.0
    %1465 = vmatpush1.msra.mxu0 0.0
    %1466 = vmatprep.subr.mxu0 0.0
    %1467 = vmatpush1.msra.mxu0 0.0
    %1468 = vmatprep.subr.mxu0 0.0
    %1469 = vmatpush1.msra.mxu0 0.0
    %1470 = vmatprep.subr.mxu0 0.0
    %1471 = vmatpush1.msra.mxu0 0.0
    %1472 = vmatprep.mubr.f32.mxu0 0.0
    %1473 = vmatmul.mubr.f32.gmra.mrb[0].mxu0 %v1406
    %v1474 = vpop.f32.mrb[0].mxu0
    %v1475 = vadd.f32 0.0, %v1474
    %v1476 = vpop.f32.mrb[0].mxu0
    %1477 = vdwg.mxu0
    %v1478 = vadd.f32 %v1318, %v1475
    %s1479 = scalar_lea.vmem %s6, 6
    %v1480 = vld [vmem:[%s1479] sm:$0x3]
    %v1482 = vsel %vm1009, %v1480, 0
    %1484 = vmatprep.subr.mxu0 0.0
    %1485 = vmatpush1.msra.mxu0 %v1002
    %1486 = vmatprep.subr.mxu0 0.0
    %1487 = vmatpush1.msra.mxu0 %v1003
    %1488 = vmatprep.subr.mxu0 0.0
    %1489 = vmatpush1.msra.mxu0 %v1004
    %1490 = vmatprep.subr.mxu0 0.0
    %1491 = vmatpush1.msra.mxu0 %v1005
    %1492 = vmatprep.subr.mxu0 0.0
    %1493 = vmatpush1.msra.mxu0 %v1006
    %1494 = vmatprep.subr.mxu0 0.0
    %1495 = vmatpush1.msra.mxu0 %v1007
    %1496 = vmatprep.subr.mxu0 0.0
    %1497 = vmatpush1.msra.mxu0 0.0
    %1498 = vmatprep.subr.mxu0 0.0
    %1499 = vmatpush1.msra.mxu0 0.0
    %1500 = vmatprep.subr.mxu0 0.0
    %1501 = vmatpush1.msra.mxu0 0.0
    %1502 = vmatprep.subr.mxu0 0.0
    %1503 = vmatpush1.msra.mxu0 0.0
    %1504 = vmatprep.subr.mxu0 0.0
    %1505 = vmatpush1.msra.mxu0 0.0
    %1506 = vmatprep.subr.mxu0 0.0
    %1507 = vmatpush1.msra.mxu0 0.0
    %1508 = vmatprep.subr.mxu0 0.0
    %1509 = vmatpush1.msra.mxu0 0.0
    %1510 = vmatprep.subr.mxu0 0.0
    %1511 = vmatpush1.msra.mxu0 0.0
    %1512 = vmatprep.subr.mxu0 0.0
    %1513 = vmatpush1.msra.mxu0 0.0
    %1514 = vmatprep.subr.mxu0 0.0
    %1515 = vmatpush1.msra.mxu0 0.0
    %1516 = vmatprep.subr.mxu0 0.0
    %1517 = vmatpush1.msra.mxu0 0.0
    %1518 = vmatprep.subr.mxu0 0.0
    %1519 = vmatpush1.msra.mxu0 0.0
    %1520 = vmatprep.subr.mxu0 0.0
    %1521 = vmatpush1.msra.mxu0 0.0
    %1522 = vmatprep.subr.mxu0 0.0
    %1523 = vmatpush1.msra.mxu0 0.0
    %1524 = vmatprep.subr.mxu0 0.0
    %1525 = vmatpush1.msra.mxu0 0.0
    %1526 = vmatprep.subr.mxu0 0.0
    %1527 = vmatpush1.msra.mxu0 0.0
    %1528 = vmatprep.subr.mxu0 0.0
    %1529 = vmatpush1.msra.mxu0 0.0
    %1530 = vmatprep.subr.mxu0 0.0
    %1531 = vmatpush1.msra.mxu0 0.0
    %1532 = vmatprep.subr.mxu0 0.0
    %1533 = vmatpush1.msra.mxu0 0.0
    %1534 = vmatprep.subr.mxu0 0.0
    %1535 = vmatpush1.msra.mxu0 0.0
    %1536 = vmatprep.subr.mxu0 0.0
    %1537 = vmatpush1.msra.mxu0 0.0
    %1538 = vmatprep.subr.mxu0 0.0
    %1539 = vmatpush1.msra.mxu0 0.0
    %1540 = vmatprep.subr.mxu0 0.0
    %1541 = vmatpush1.msra.mxu0 0.0
    %1542 = vmatprep.subr.mxu0 0.0
    %1543 = vmatpush1.msra.mxu0 0.0
    %1544 = vmatprep.subr.mxu0 0.0
    %1545 = vmatpush1.msra.mxu0 0.0
    %1546 = vmatprep.subr.mxu0 0.0
    %1547 = vmatpush1.msra.mxu0 0.0
    %1548 = vmatprep.mubr.f32.mxu0 0.0
    %1549 = vmatmul.mubr.f32.gmra.mrb[0].mxu0 %v1482
    %v1550 = vpop.f32.mrb[0].mxu0
    %v1551 = vadd.f32 0.0, %v1550
    %v1552 = vpop.f32.mrb[0].mxu0
    %1553 = vdwg.mxu0
    %s1554 = scalar_lea.vmem [#allocation5], 192
    %v1555 = vld [vmem:[%s1554] sm:$0xff]
    %v1556 = vld [vmem:[%s1554 + $0x8] sm:$0xff]
    %v1557 = vld [vmem:[%s1554 + $0x10] sm:$0xff]
    %v1558 = vld [vmem:[%s1554 + $0x18] sm:$0xff]
    %v1559 = vld [vmem:[%s1554 + $0x20] sm:$0xff]
    %v1560 = vld [vmem:[%s1554 + $0x28] sm:$0xff]
    %v1561 = vld [vmem:[%s1554 + $0x30] sm:$0xff]
    %v1562 = vld [vmem:[%s1554 + $0x38] sm:$0xff]
    %v1564 = vsel %vm558, %v1551, 0
    %1566 = vmatprep.subr.mxu0 0.0
    %1567 = vmatpush1.msra.mxu0 %v1555
    %1568 = vmatprep.subr.mxu0 0.0
    %1569 = vmatpush1.msra.mxu0 %v1556
    %1570 = vmatprep.subr.mxu0 0.0
    %1571 = vmatpush1.msra.mxu0 %v1557
    %1572 = vmatprep.subr.mxu0 0.0
    %1573 = vmatpush1.msra.mxu0 %v1558
    %1574 = vmatprep.subr.mxu0 0.0
    %1575 = vmatpush1.msra.mxu0 %v1559
    %1576 = vmatprep.subr.mxu0 0.0
    %1577 = vmatpush1.msra.mxu0 %v1560
    %1578 = vmatprep.subr.mxu0 0.0
    %1579 = vmatpush1.msra.mxu0 %v1561
    %1580 = vmatprep.subr.mxu0 0.0
    %1581 = vmatpush1.msra.mxu0 %v1562
    %1582 = vmatprep.subr.mxu0 0.0
    %1583 = vmatpush1.msra.mxu0 0.0
    %1584 = vmatprep.subr.mxu0 0.0
    %1585 = vmatpush1.msra.mxu0 0.0
    %1586 = vmatprep.subr.mxu0 0.0
    %1587 = vmatpush1.msra.mxu0 0.0
    %1588 = vmatprep.subr.mxu0 0.0
    %1589 = vmatpush1.msra.mxu0 0.0
    %1590 = vmatprep.subr.mxu0 0.0
    %1591 = vmatpush1.msra.mxu0 0.0
    %1592 = vmatprep.subr.mxu0 0.0
    %1593 = vmatpush1.msra.mxu0 0.0
    %1594 = vmatprep.subr.mxu0 0.0
    %1595 = vmatpush1.msra.mxu0 0.0
    %1596 = vmatprep.subr.mxu0 0.0
    %1597 = vmatpush1.msra.mxu0 0.0
    %1598 = vmatprep.subr.mxu0 0.0
    %1599 = vmatpush1.msra.mxu0 0.0
    %1600 = vmatprep.subr.mxu0 0.0
    %1601 = vmatpush1.msra.mxu0 0.0
    %1602 = vmatprep.subr.mxu0 0.0
    %1603 = vmatpush1.msra.mxu0 0.0
    %1604 = vmatprep.subr.mxu0 0.0
    %1605 = vmatpush1.msra.mxu0 0.0
    %1606 = vmatprep.subr.mxu0 0.0
    %1607 = vmatpush1.msra.mxu0 0.0
    %1608 = vmatprep.subr.mxu0 0.0
    %1609 = vmatpush1.msra.mxu0 0.0
    %1610 = vmatprep.subr.mxu0 0.0
    %1611 = vmatpush1.msra.mxu0 0.0
    %1612 = vmatprep.subr.mxu0 0.0
    %1613 = vmatpush1.msra.mxu0 0.0
    %1614 = vmatprep.subr.mxu0 0.0
    %1615 = vmatpush1.msra.mxu0 0.0
    %1616 = vmatprep.subr.mxu0 0.0
    %1617 = vmatpush1.msra.mxu0 0.0
    %1618 = vmatprep.subr.mxu0 0.0
    %1619 = vmatpush1.msra.mxu0 0.0
    %1620 = vmatprep.subr.mxu0 0.0
    %1621 = vmatpush1.msra.mxu0 0.0
    %1622 = vmatprep.subr.mxu0 0.0
    %1623 = vmatpush1.msra.mxu0 0.0
    %1624 = vmatprep.subr.mxu0 0.0
    %1625 = vmatpush1.msra.mxu0 0.0
    %1626 = vmatprep.subr.mxu0 0.0
    %1627 = vmatpush1.msra.mxu0 0.0
    %1628 = vmatprep.subr.mxu0 0.0
    %1629 = vmatpush1.msra.mxu0 0.0
    %1630 = vmatprep.mubr.f32.mxu0 0.0
    %1631 = vmatmul.mubr.f32.gmra.mrb[0].mxu0 %v1564
    %v1632 = vpop.f32.mrb[0].mxu0
    %v1633 = vadd.f32 0.0, %v1632
    %v1634 = vpop.f32.mrb[0].mxu0
    %1635 = vdwg.mxu0
    %v1636 = vadd.f32 %v1478, %v1633
    %s1637 = scalar_lea.vmem %s6, 8
    %v1638 = vld [vmem:[%s1637] sm:$0x3]
    %v1640 = vsel %vm1009, %v1638, 0
    %1642 = vmatprep.subr.mxu0 0.0
    %1643 = vmatpush1.msra.mxu0 %v1002
    %1644 = vmatprep.subr.mxu0 0.0
    %1645 = vmatpush1.msra.mxu0 %v1003
    %1646 = vmatprep.subr.mxu0 0.0
    %1647 = vmatpush1.msra.mxu0 %v1004
    %1648 = vmatprep.subr.mxu0 0.0
    %1649 = vmatpush1.msra.mxu0 %v1005
    %1650 = vmatprep.subr.mxu0 0.0
    %1651 = vmatpush1.msra.mxu0 %v1006
    %1652 = vmatprep.subr.mxu0 0.0
    %1653 = vmatpush1.msra.mxu0 %v1007
    %1654 = vmatprep.subr.mxu0 0.0
    %1655 = vmatpush1.msra.mxu0 0.0
    %1656 = vmatprep.subr.mxu0 0.0
    %1657 = vmatpush1.msra.mxu0 0.0
    %1658 = vmatprep.subr.mxu0 0.0
    %1659 = vmatpush1.msra.mxu0 0.0
    %1660 = vmatprep.subr.mxu0 0.0
    %1661 = vmatpush1.msra.mxu0 0.0
    %1662 = vmatprep.subr.mxu0 0.0
    %1663 = vmatpush1.msra.mxu0 0.0
    %1664 = vmatprep.subr.mxu0 0.0
    %1665 = vmatpush1.msra.mxu0 0.0
    %1666 = vmatprep.subr.mxu0 0.0
    %1667 = vmatpush1.msra.mxu0 0.0
    %1668 = vmatprep.subr.mxu0 0.0
    %1669 = vmatpush1.msra.mxu0 0.0
    %1670 = vmatprep.subr.mxu0 0.0
    %1671 = vmatpush1.msra.mxu0 0.0
    %1672 = vmatprep.subr.mxu0 0.0
    %1673 = vmatpush1.msra.mxu0 0.0
    %1674 = vmatprep.subr.mxu0 0.0
    %1675 = vmatpush1.msra.mxu0 0.0
    %1676 = vmatprep.subr.mxu0 0.0
    %1677 = vmatpush1.msra.mxu0 0.0
    %1678 = vmatprep.subr.mxu0 0.0
    %1679 = vmatpush1.msra.mxu0 0.0
    %1680 = vmatprep.subr.mxu0 0.0
    %1681 = vmatpush1.msra.mxu0 0.0
    %1682 = vmatprep.subr.mxu0 0.0
    %1683 = vmatpush1.msra.mxu0 0.0
    %1684 = vmatprep.subr.mxu0 0.0
    %1685 = vmatpush1.msra.mxu0 0.0
    %1686 = vmatprep.subr.mxu0 0.0
    %1687 = vmatpush1.msra.mxu0 0.0
    %1688 = vmatprep.subr.mxu0 0.0
    %1689 = vmatpush1.msra.mxu0 0.0
    %1690 = vmatprep.subr.mxu0 0.0
    %1691 = vmatpush1.msra.mxu0 0.0
    %1692 = vmatprep.subr.mxu0 0.0
    %1693 = vmatpush1.msra.mxu0 0.0
    %1694 = vmatprep.subr.mxu0 0.0
    %1695 = vmatpush1.msra.mxu0 0.0
    %1696 = vmatprep.subr.mxu0 0.0
    %1697 = vmatpush1.msra.mxu0 0.0
    %1698 = vmatprep.subr.mxu0 0.0
    %1699 = vmatpush1.msra.mxu0 0.0
    %1700 = vmatprep.subr.mxu0 0.0
    %1701 = vmatpush1.msra.mxu0 0.0
    %1702 = vmatprep.subr.mxu0 0.0
    %1703 = vmatpush1.msra.mxu0 0.0
    %1704 = vmatprep.subr.mxu0 0.0
    %1705 = vmatpush1.msra.mxu0 0.0
    %1706 = vmatprep.mubr.f32.mxu0 0.0
    %1707 = vmatmul.mubr.f32.gmra.mrb[0].mxu0 %v1640
    %v1708 = vpop.f32.mrb[0].mxu0
    %v1709 = vadd.f32 0.0, %v1708
    %v1710 = vpop.f32.mrb[0].mxu0
    %1711 = vdwg.mxu0
    %s1712 = scalar_lea.vmem [#allocation5], 256
    %v1713 = vld [vmem:[%s1712] sm:$0xff]
    %v1714 = vld [vmem:[%s1712 + $0x8] sm:$0xff]
    %v1715 = vld [vmem:[%s1712 + $0x10] sm:$0xff]
    %v1716 = vld [vmem:[%s1712 + $0x18] sm:$0xff]
    %v1717 = vld [vmem:[%s1712 + $0x20] sm:$0xff]
    %v1718 = vld [vmem:[%s1712 + $0x28] sm:$0xff]
    %v1719 = vld [vmem:[%s1712 + $0x30] sm:$0xff]
    %v1720 = vld [vmem:[%s1712 + $0x38] sm:$0xff]
    %v1722 = vsel %vm558, %v1709, 0
    %1724 = vmatprep.subr.mxu0 0.0
    %1725 = vmatpush1.msra.mxu0 %v1713
    %1726 = vmatprep.subr.mxu0 0.0
    %1727 = vmatpush1.msra.mxu0 %v1714
    %1728 = vmatprep.subr.mxu0 0.0
    %1729 = vmatpush1.msra.mxu0 %v1715
    %1730 = vmatprep.subr.mxu0 0.0
    %1731 = vmatpush1.msra.mxu0 %v1716
    %1732 = vmatprep.subr.mxu0 0.0
    %1733 = vmatpush1.msra.mxu0 %v1717
    %1734 = vmatprep.subr.mxu0 0.0
    %1735 = vmatpush1.msra.mxu0 %v1718
    %1736 = vmatprep.subr.mxu0 0.0
    %1737 = vmatpush1.msra.mxu0 %v1719
    %1738 = vmatprep.subr.mxu0 0.0
    %1739 = vmatpush1.msra.mxu0 %v1720
    %1740 = vmatprep.subr.mxu0 0.0
    %1741 = vmatpush1.msra.mxu0 0.0
    %1742 = vmatprep.subr.mxu0 0.0
    %1743 = vmatpush1.msra.mxu0 0.0
    %1744 = vmatprep.subr.mxu0 0.0
    %1745 = vmatpush1.msra.mxu0 0.0
    %1746 = vmatprep.subr.mxu0 0.0
    %1747 = vmatpush1.msra.mxu0 0.0
    %1748 = vmatprep.subr.mxu0 0.0
    %1749 = vmatpush1.msra.mxu0 0.0
    %1750 = vmatprep.subr.mxu0 0.0
    %1751 = vmatpush1.msra.mxu0 0.0
    %1752 = vmatprep.subr.mxu0 0.0
    %1753 = vmatpush1.msra.mxu0 0.0
    %1754 = vmatprep.subr.mxu0 0.0
    %1755 = vmatpush1.msra.mxu0 0.0
    %1756 = vmatprep.subr.mxu0 0.0
    %1757 = vmatpush1.msra.mxu0 0.0
    %1758 = vmatprep.subr.mxu0 0.0
    %1759 = vmatpush1.msra.mxu0 0.0
    %1760 = vmatprep.subr.mxu0 0.0
    %1761 = vmatpush1.msra.mxu0 0.0
    %1762 = vmatprep.subr.mxu0 0.0
    %1763 = vmatpush1.msra.mxu0 0.0
    %1764 = vmatprep.subr.mxu0 0.0
    %1765 = vmatpush1.msra.mxu0 0.0
    %1766 = vmatprep.subr.mxu0 0.0
    %1767 = vmatpush1.msra.mxu0 0.0
    %1768 = vmatprep.subr.mxu0 0.0
    %1769 = vmatpush1.msra.mxu0 0.0
    %1770 = vmatprep.subr.mxu0 0.0
    %1771 = vmatpush1.msra.mxu0 0.0
    %1772 = vmatprep.subr.mxu0 0.0
    %1773 = vmatpush1.msra.mxu0 0.0
    %1774 = vmatprep.subr.mxu0 0.0
    %1775 = vmatpush1.msra.mxu0 0.0
    %1776 = vmatprep.subr.mxu0 0.0
    %1777 = vmatpush1.msra.mxu0 0.0
    %1778 = vmatprep.subr.mxu0 0.0
    %1779 = vmatpush1.msra.mxu0 0.0
    %1780 = vmatprep.subr.mxu0 0.0
    %1781 = vmatpush1.msra.mxu0 0.0
    %1782 = vmatprep.subr.mxu0 0.0
    %1783 = vmatpush1.msra.mxu0 0.0
    %1784 = vmatprep.subr.mxu0 0.0
    %1785 = vmatpush1.msra.mxu0 0.0
    %1786 = vmatprep.subr.mxu0 0.0
    %1787 = vmatpush1.msra.mxu0 0.0
    %1788 = vmatprep.mubr.f32.mxu0 0.0
    %1789 = vmatmul.mubr.f32.gmra.mrb[0].mxu0 %v1722
    %v1790 = vpop.f32.mrb[0].mxu0
    %v1791 = vadd.f32 0.0, %v1790
    %v1792 = vpop.f32.mrb[0].mxu0
    %1793 = vdwg.mxu0
    %v1794 = vadd.f32 %v1636, %v1791
    %s1795 = scalar_lea.vmem %s6, 10
    %v1796 = vld [vmem:[%s1795] sm:$0x3]
    %v1798 = vsel %vm1009, %v1796, 0
    %1800 = vmatprep.subr.mxu0 0.0
    %1801 = vmatpush1.msra.mxu0 %v1002
    %1802 = vmatprep.subr.mxu0 0.0
    %1803 = vmatpush1.msra.mxu0 %v1003
    %1804 = vmatprep.subr.mxu0 0.0
    %1805 = vmatpush1.msra.mxu0 %v1004
    %1806 = vmatprep.subr.mxu0 0.0
    %1807 = vmatpush1.msra.mxu0 %v1005
    %1808 = vmatprep.subr.mxu0 0.0
    %1809 = vmatpush1.msra.mxu0 %v1006
    %1810 = vmatprep.subr.mxu0 0.0
    %1811 = vmatpush1.msra.mxu0 %v1007
    %1812 = vmatprep.subr.mxu0 0.0
    %1813 = vmatpush1.msra.mxu0 0.0
    %1814 = vmatprep.subr.mxu0 0.0
    %1815 = vmatpush1.msra.mxu0 0.0
    %1816 = vmatprep.subr.mxu0 0.0
    %1817 = vmatpush1.msra.mxu0 0.0
    %1818 = vmatprep.subr.mxu0 0.0
    %1819 = vmatpush1.msra.mxu0 0.0
    %1820 = vmatprep.subr.mxu0 0.0
    %1821 = vmatpush1.msra.mxu0 0.0
    %1822 = vmatprep.subr.mxu0 0.0
    %1823 = vmatpush1.msra.mxu0 0.0
    %1824 = vmatprep.subr.mxu0 0.0
    %1825 = vmatpush1.msra.mxu0 0.0
    %1826 = vmatprep.subr.mxu0 0.0
    %1827 = vmatpush1.msra.mxu0 0.0
    %1828 = vmatprep.subr.mxu0 0.0
    %1829 = vmatpush1.msra.mxu0 0.0
    %1830 = vmatprep.subr.mxu0 0.0
    %1831 = vmatpush1.msra.mxu0 0.0
    %1832 = vmatprep.subr.mxu0 0.0
    %1833 = vmatpush1.msra.mxu0 0.0
    %1834 = vmatprep.subr.mxu0 0.0
    %1835 = vmatpush1.msra.mxu0 0.0
    %1836 = vmatprep.subr.mxu0 0.0
    %1837 = vmatpush1.msra.mxu0 0.0
    %1838 = vmatprep.subr.mxu0 0.0
    %1839 = vmatpush1.msra.mxu0 0.0
    %1840 = vmatprep.subr.mxu0 0.0
    %1841 = vmatpush1.msra.mxu0 0.0
    %1842 = vmatprep.subr.mxu0 0.0
    %1843 = vmatpush1.msra.mxu0 0.0
    %1844 = vmatprep.subr.mxu0 0.0
    %1845 = vmatpush1.msra.mxu0 0.0
    %1846 = vmatprep.subr.mxu0 0.0
    %1847 = vmatpush1.msra.mxu0 0.0
    %1848 = vmatprep.subr.mxu0 0.0
    %1849 = vmatpush1.msra.mxu0 0.0
    %1850 = vmatprep.subr.mxu0 0.0
    %1851 = vmatpush1.msra.mxu0 0.0
    %1852 = vmatprep.subr.mxu0 0.0
    %1853 = vmatpush1.msra.mxu0 0.0
    %1854 = vmatprep.subr.mxu0 0.0
    %1855 = vmatpush1.msra.mxu0 0.0
    %1856 = vmatprep.subr.mxu0 0.0
    %1857 = vmatpush1.msra.mxu0 0.0
    %1858 = vmatprep.subr.mxu0 0.0
    %1859 = vmatpush1.msra.mxu0 0.0
    %1860 = vmatprep.subr.mxu0 0.0
    %1861 = vmatpush1.msra.mxu0 0.0
    %1862 = vmatprep.subr.mxu0 0.0
    %1863 = vmatpush1.msra.mxu0 0.0
    %1864 = vmatprep.mubr.f32.mxu0 0.0
    %1865 = vmatmul.mubr.f32.gmra.mrb[0].mxu0 %v1798
    %v1866 = vpop.f32.mrb[0].mxu0
    %v1867 = vadd.f32 0.0, %v1866
    %v1868 = vpop.f32.mrb[0].mxu0
    %1869 = vdwg.mxu0
    %s1870 = scalar_lea.vmem [#allocation5], 320
    %v1871 = vld [vmem:[%s1870] sm:$0xff]
    %v1872 = vld [vmem:[%s1870 + $0x8] sm:$0xff]
    %v1873 = vld [vmem:[%s1870 + $0x10] sm:$0xff]
    %v1874 = vld [vmem:[%s1870 + $0x18] sm:$0xff]
    %v1875 = vld [vmem:[%s1870 + $0x20] sm:$0xff]
    %v1876 = vld [vmem:[%s1870 + $0x28] sm:$0xff]
    %v1877 = vld [vmem:[%s1870 + $0x30] sm:$0xff]
    %v1878 = vld [vmem:[%s1870 + $0x38] sm:$0xff]
    %v1880 = vsel %vm558, %v1867, 0
    %1882 = vmatprep.subr.mxu0 0.0
    %1883 = vmatpush1.msra.mxu0 %v1871
    %1884 = vmatprep.subr.mxu0 0.0
    %1885 = vmatpush1.msra.mxu0 %v1872
    %1886 = vmatprep.subr.mxu0 0.0
    %1887 = vmatpush1.msra.mxu0 %v1873
    %1888 = vmatprep.subr.mxu0 0.0
    %1889 = vmatpush1.msra.mxu0 %v1874
    %1890 = vmatprep.subr.mxu0 0.0
    %1891 = vmatpush1.msra.mxu0 %v1875
    %1892 = vmatprep.subr.mxu0 0.0
    %1893 = vmatpush1.msra.mxu0 %v1876
    %1894 = vmatprep.subr.mxu0 0.0
    %1895 = vmatpush1.msra.mxu0 %v1877
    %1896 = vmatprep.subr.mxu0 0.0
    %1897 = vmatpush1.msra.mxu0 %v1878
    %1898 = vmatprep.subr.mxu0 0.0
    %1899 = vmatpush1.msra.mxu0 0.0
    %1900 = vmatprep.subr.mxu0 0.0
    %1901 = vmatpush1.msra.mxu0 0.0
    %1902 = vmatprep.subr.mxu0 0.0
    %1903 = vmatpush1.msra.mxu0 0.0
    %1904 = vmatprep.subr.mxu0 0.0
    %1905 = vmatpush1.msra.mxu0 0.0
    %1906 = vmatprep.subr.mxu0 0.0
    %1907 = vmatpush1.msra.mxu0 0.0
    %1908 = vmatprep.subr.mxu0 0.0
    %1909 = vmatpush1.msra.mxu0 0.0
    %1910 = vmatprep.subr.mxu0 0.0
    %1911 = vmatpush1.msra.mxu0 0.0
    %1912 = vmatprep.subr.mxu0 0.0
    %1913 = vmatpush1.msra.mxu0 0.0
    %1914 = vmatprep.subr.mxu0 0.0
    %1915 = vmatpush1.msra.mxu0 0.0
    %1916 = vmatprep.subr.mxu0 0.0
    %1917 = vmatpush1.msra.mxu0 0.0
    %1918 = vmatprep.subr.mxu0 0.0
    %1919 = vmatpush1.msra.mxu0 0.0
    %1920 = vmatprep.subr.mxu0 0.0
    %1921 = vmatpush1.msra.mxu0 0.0
    %1922 = vmatprep.subr.mxu0 0.0
    %1923 = vmatpush1.msra.mxu0 0.0
    %1924 = vmatprep.subr.mxu0 0.0
    %1925 = vmatpush1.msra.mxu0 0.0
    %1926 = vmatprep.subr.mxu0 0.0
    %1927 = vmatpush1.msra.mxu0 0.0
    %1928 = vmatprep.subr.mxu0 0.0
    %1929 = vmatpush1.msra.mxu0 0.0
    %1930 = vmatprep.subr.mxu0 0.0
    %1931 = vmatpush1.msra.mxu0 0.0
    %1932 = vmatprep.subr.mxu0 0.0
    %1933 = vmatpush1.msra.mxu0 0.0
    %1934 = vmatprep.subr.mxu0 0.0
    %1935 = vmatpush1.msra.mxu0 0.0
    %1936 = vmatprep.subr.mxu0 0.0
    %1937 = vmatpush1.msra.mxu0 0.0
    %1938 = vmatprep.subr.mxu0 0.0
    %1939 = vmatpush1.msra.mxu0 0.0
    %1940 = vmatprep.subr.mxu0 0.0
    %1941 = vmatpush1.msra.mxu0 0.0
    %1942 = vmatprep.subr.mxu0 0.0
    %1943 = vmatpush1.msra.mxu0 0.0
    %1944 = vmatprep.subr.mxu0 0.0
    %1945 = vmatpush1.msra.mxu0 0.0
    %1946 = vmatprep.mubr.f32.mxu0 0.0
    %1947 = vmatmul.mubr.f32.gmra.mrb[0].mxu0 %v1880
    %v1948 = vpop.f32.mrb[0].mxu0
    %v1949 = vadd.f32 0.0, %v1948
    %v1950 = vpop.f32.mrb[0].mxu0
    %1951 = vdwg.mxu0
    %v1952 = vadd.f32 %v1794, %v1949
    %s1953 = scalar_lea.vmem %s6, 12
    %v1954 = vld [vmem:[%s1953] sm:$0x3]
    %v1956 = vsel %vm1009, %v1954, 0
    %1958 = vmatprep.subr.mxu0 0.0
    %1959 = vmatpush1.msra.mxu0 %v1002
    %1960 = vmatprep.subr.mxu0 0.0
    %1961 = vmatpush1.msra.mxu0 %v1003
    %1962 = vmatprep.subr.mxu0 0.0
    %1963 = vmatpush1.msra.mxu0 %v1004
    %1964 = vmatprep.subr.mxu0 0.0
    %1965 = vmatpush1.msra.mxu0 %v1005
    %1966 = vmatprep.subr.mxu0 0.0
    %1967 = vmatpush1.msra.mxu0 %v1006
    %1968 = vmatprep.subr.mxu0 0.0
    %1969 = vmatpush1.msra.mxu0 %v1007
    %1970 = vmatprep.subr.mxu0 0.0
    %1971 = vmatpush1.msra.mxu0 0.0
    %1972 = vmatprep.subr.mxu0 0.0
    %1973 = vmatpush1.msra.mxu0 0.0
    %1974 = vmatprep.subr.mxu0 0.0
    %1975 = vmatpush1.msra.mxu0 0.0
    %1976 = vmatprep.subr.mxu0 0.0
    %1977 = vmatpush1.msra.mxu0 0.0
    %1978 = vmatprep.subr.mxu0 0.0
    %1979 = vmatpush1.msra.mxu0 0.0
    %1980 = vmatprep.subr.mxu0 0.0
    %1981 = vmatpush1.msra.mxu0 0.0
    %1982 = vmatprep.subr.mxu0 0.0
    %1983 = vmatpush1.msra.mxu0 0.0
    %1984 = vmatprep.subr.mxu0 0.0
    %1985 = vmatpush1.msra.mxu0 0.0
    %1986 = vmatprep.subr.mxu0 0.0
    %1987 = vmatpush1.msra.mxu0 0.0
    %1988 = vmatprep.subr.mxu0 0.0
    %1989 = vmatpush1.msra.mxu0 0.0
    %1990 = vmatprep.subr.mxu0 0.0
    %1991 = vmatpush1.msra.mxu0 0.0
    %1992 = vmatprep.subr.mxu0 0.0
    %1993 = vmatpush1.msra.mxu0 0.0
    %1994 = vmatprep.subr.mxu0 0.0
    %1995 = vmatpush1.msra.mxu0 0.0
    %1996 = vmatprep.subr.mxu0 0.0
    %1997 = vmatpush1.msra.mxu0 0.0
    %1998 = vmatprep.subr.mxu0 0.0
    %1999 = vmatpush1.msra.mxu0 0.0
    %2000 = vmatprep.subr.mxu0 0.0
    %2001 = vmatpush1.msra.mxu0 0.0
    %2002 = vmatprep.subr.mxu0 0.0
    %2003 = vmatpush1.msra.mxu0 0.0
    %2004 = vmatprep.subr.mxu0 0.0
    %2005 = vmatpush1.msra.mxu0 0.0
    %2006 = vmatprep.subr.mxu0 0.0
    %2007 = vmatpush1.msra.mxu0 0.0
    %2008 = vmatprep.subr.mxu0 0.0
    %2009 = vmatpush1.msra.mxu0 0.0
    %2010 = vmatprep.subr.mxu0 0.0
    %2011 = vmatpush1.msra.mxu0 0.0
    %2012 = vmatprep.subr.mxu0 0.0
    %2013 = vmatpush1.msra.mxu0 0.0
    %2014 = vmatprep.subr.mxu0 0.0
    %2015 = vmatpush1.msra.mxu0 0.0
    %2016 = vmatprep.subr.mxu0 0.0
    %2017 = vmatpush1.msra.mxu0 0.0
    %2018 = vmatprep.subr.mxu0 0.0
    %2019 = vmatpush1.msra.mxu0 0.0
    %2020 = vmatprep.subr.mxu0 0.0
    %2021 = vmatpush1.msra.mxu0 0.0
    %2022 = vmatprep.mubr.f32.mxu0 0.0
    %2023 = vmatmul.mubr.f32.gmra.mrb[0].mxu0 %v1956
    %v2024 = vpop.f32.mrb[0].mxu0
    %v2025 = vadd.f32 0.0, %v2024
    %v2026 = vpop.f32.mrb[0].mxu0
    %2027 = vdwg.mxu0
    %s2028 = scalar_lea.vmem [#allocation5], 384
    %v2029 = vld [vmem:[%s2028] sm:$0xff]
    %v2030 = vld [vmem:[%s2028 + $0x8] sm:$0xff]
    %v2031 = vld [vmem:[%s2028 + $0x10] sm:$0xff]
    %v2032 = vld [vmem:[%s2028 + $0x18] sm:$0xff]
    %v2033 = vld [vmem:[%s2028 + $0x20] sm:$0xff]
    %v2034 = vld [vmem:[%s2028 + $0x28] sm:$0xff]
    %v2035 = vld [vmem:[%s2028 + $0x30] sm:$0xff]
    %v2036 = vld [vmem:[%s2028 + $0x38] sm:$0xff]
    %v2038 = vsel %vm558, %v2025, 0
    %2040 = vmatprep.subr.mxu0 0.0
    %2041 = vmatpush1.msra.mxu0 %v2029
    %2042 = vmatprep.subr.mxu0 0.0
    %2043 = vmatpush1.msra.mxu0 %v2030
    %2044 = vmatprep.subr.mxu0 0.0
    %2045 = vmatpush1.msra.mxu0 %v2031
    %2046 = vmatprep.subr.mxu0 0.0
    %2047 = vmatpush1.msra.mxu0 %v2032
    %2048 = vmatprep.subr.mxu0 0.0
    %2049 = vmatpush1.msra.mxu0 %v2033
    %2050 = vmatprep.subr.mxu0 0.0
    %2051 = vmatpush1.msra.mxu0 %v2034
    %2052 = vmatprep.subr.mxu0 0.0
    %2053 = vmatpush1.msra.mxu0 %v2035
    %2054 = vmatprep.subr.mxu0 0.0
    %2055 = vmatpush1.msra.mxu0 %v2036
    %2056 = vmatprep.subr.mxu0 0.0
    %2057 = vmatpush1.msra.mxu0 0.0
    %2058 = vmatprep.subr.mxu0 0.0
    %2059 = vmatpush1.msra.mxu0 0.0
    %2060 = vmatprep.subr.mxu0 0.0
    %2061 = vmatpush1.msra.mxu0 0.0
    %2062 = vmatprep.subr.mxu0 0.0
    %2063 = vmatpush1.msra.mxu0 0.0
    %2064 = vmatprep.subr.mxu0 0.0
    %2065 = vmatpush1.msra.mxu0 0.0
    %2066 = vmatprep.subr.mxu0 0.0
    %2067 = vmatpush1.msra.mxu0 0.0
    %2068 = vmatprep.subr.mxu0 0.0
    %2069 = vmatpush1.msra.mxu0 0.0
    %2070 = vmatprep.subr.mxu0 0.0
    %2071 = vmatpush1.msra.mxu0 0.0
    %2072 = vmatprep.subr.mxu0 0.0
    %2073 = vmatpush1.msra.mxu0 0.0
    %2074 = vmatprep.subr.mxu0 0.0
    %2075 = vmatpush1.msra.mxu0 0.0
    %2076 = vmatprep.subr.mxu0 0.0
    %2077 = vmatpush1.msra.mxu0 0.0
    %2078 = vmatprep.subr.mxu0 0.0
    %2079 = vmatpush1.msra.mxu0 0.0
    %2080 = vmatprep.subr.mxu0 0.0
    %2081 = vmatpush1.msra.mxu0 0.0
    %2082 = vmatprep.subr.mxu0 0.0
    %2083 = vmatpush1.msra.mxu0 0.0
    %2084 = vmatprep.subr.mxu0 0.0
    %2085 = vmatpush1.msra.mxu0 0.0
    %2086 = vmatprep.subr.mxu0 0.0
    %2087 = vmatpush1.msra.mxu0 0.0
    %2088 = vmatprep.subr.mxu0 0.0
    %2089 = vmatpush1.msra.mxu0 0.0
    %2090 = vmatprep.subr.mxu0 0.0
    %2091 = vmatpush1.msra.mxu0 0.0
    %2092 = vmatprep.subr.mxu0 0.0
    %2093 = vmatpush1.msra.mxu0 0.0
    %2094 = vmatprep.subr.mxu0 0.0
    %2095 = vmatpush1.msra.mxu0 0.0
    %2096 = vmatprep.subr.mxu0 0.0
    %2097 = vmatpush1.msra.mxu0 0.0
    %2098 = vmatprep.subr.mxu0 0.0
    %2099 = vmatpush1.msra.mxu0 0.0
    %2100 = vmatprep.subr.mxu0 0.0
    %2101 = vmatpush1.msra.mxu0 0.0
    %2102 = vmatprep.subr.mxu0 0.0
    %2103 = vmatpush1.msra.mxu0 0.0
    %2104 = vmatprep.mubr.f32.mxu0 0.0
    %2105 = vmatmul.mubr.f32.gmra.mrb[0].mxu0 %v2038
    %v2106 = vpop.f32.mrb[0].mxu0
    %v2107 = vadd.f32 0.0, %v2106
    %v2108 = vpop.f32.mrb[0].mxu0
    %2109 = vdwg.mxu0
    %v2110 = vadd.f32 %v1952, %v2107
    %s2111 = scalar_lea.vmem %s6, 14
    %v2112 = vld [vmem:[%s2111] sm:$0x3]
    %v2114 = vsel %vm1009, %v2112, 0
    %2116 = vmatprep.subr.mxu0 0.0
    %2117 = vmatpush1.msra.mxu0 %v1002
    %2118 = vmatprep.subr.mxu0 0.0
    %2119 = vmatpush1.msra.mxu0 %v1003
    %2120 = vmatprep.subr.mxu0 0.0
    %2121 = vmatpush1.msra.mxu0 %v1004
    %2122 = vmatprep.subr.mxu0 0.0
    %2123 = vmatpush1.msra.mxu0 %v1005
    %2124 = vmatprep.subr.mxu0 0.0
    %2125 = vmatpush1.msra.mxu0 %v1006
    %2126 = vmatprep.subr.mxu0 0.0
    %2127 = vmatpush1.msra.mxu0 %v1007
    %2128 = vmatprep.subr.mxu0 0.0
    %2129 = vmatpush1.msra.mxu0 0.0
    %2130 = vmatprep.subr.mxu0 0.0
    %2131 = vmatpush1.msra.mxu0 0.0
    %2132 = vmatprep.subr.mxu0 0.0
    %2133 = vmatpush1.msra.mxu0 0.0
    %2134 = vmatprep.subr.mxu0 0.0
    %2135 = vmatpush1.msra.mxu0 0.0
    %2136 = vmatprep.subr.mxu0 0.0
    %2137 = vmatpush1.msra.mxu0 0.0
    %2138 = vmatprep.subr.mxu0 0.0
    %2139 = vmatpush1.msra.mxu0 0.0
    %2140 = vmatprep.subr.mxu0 0.0
    %2141 = vmatpush1.msra.mxu0 0.0
    %2142 = vmatprep.subr.mxu0 0.0
    %2143 = vmatpush1.msra.mxu0 0.0
    %2144 = vmatprep.subr.mxu0 0.0
    %2145 = vmatpush1.msra.mxu0 0.0
    %2146 = vmatprep.subr.mxu0 0.0
    %2147 = vmatpush1.msra.mxu0 0.0
    %2148 = vmatprep.subr.mxu0 0.0
    %2149 = vmatpush1.msra.mxu0 0.0
    %2150 = vmatprep.subr.mxu0 0.0
    %2151 = vmatpush1.msra.mxu0 0.0
    %2152 = vmatprep.subr.mxu0 0.0
    %2153 = vmatpush1.msra.mxu0 0.0
    %2154 = vmatprep.subr.mxu0 0.0
    %2155 = vmatpush1.msra.mxu0 0.0
    %2156 = vmatprep.subr.mxu0 0.0
    %2157 = vmatpush1.msra.mxu0 0.0
    %2158 = vmatprep.subr.mxu0 0.0
    %2159 = vmatpush1.msra.mxu0 0.0
    %2160 = vmatprep.subr.mxu0 0.0
    %2161 = vmatpush1.msra.mxu0 0.0
    %2162 = vmatprep.subr.mxu0 0.0
    %2163 = vmatpush1.msra.mxu0 0.0
    %2164 = vmatprep.subr.mxu0 0.0
    %2165 = vmatpush1.msra.mxu0 0.0
    %2166 = vmatprep.subr.mxu0 0.0
    %2167 = vmatpush1.msra.mxu0 0.0
    %2168 = vmatprep.subr.mxu0 0.0
    %2169 = vmatpush1.msra.mxu0 0.0
    %2170 = vmatprep.subr.mxu0 0.0
    %2171 = vmatpush1.msra.mxu0 0.0
    %2172 = vmatprep.subr.mxu0 0.0
    %2173 = vmatpush1.msra.mxu0 0.0
    %2174 = vmatprep.subr.mxu0 0.0
    %2175 = vmatpush1.msra.mxu0 0.0
    %2176 = vmatprep.subr.mxu0 0.0
    %2177 = vmatpush1.msra.mxu0 0.0
    %2178 = vmatprep.subr.mxu0 0.0
    %2179 = vmatpush1.msra.mxu0 0.0
    %2180 = vmatprep.mubr.f32.mxu0 0.0
    %2181 = vmatmul.mubr.f32.gmra.mrb[0].mxu0 %v2114
    %v2182 = vpop.f32.mrb[0].mxu0
    %v2183 = vadd.f32 0.0, %v2182
    %v2184 = vpop.f32.mrb[0].mxu0
    %2185 = vdwg.mxu0
    %s2186 = scalar_lea.vmem [#allocation5], 448
    %v2187 = vld [vmem:[%s2186] sm:$0xff]
    %v2188 = vld [vmem:[%s2186 + $0x8] sm:$0xff]
    %v2189 = vld [vmem:[%s2186 + $0x10] sm:$0xff]
    %v2190 = vld [vmem:[%s2186 + $0x18] sm:$0xff]
    %v2191 = vld [vmem:[%s2186 + $0x20] sm:$0xff]
    %v2192 = vld [vmem:[%s2186 + $0x28] sm:$0xff]
    %v2193 = vld [vmem:[%s2186 + $0x30] sm:$0xff]
    %v2194 = vld [vmem:[%s2186 + $0x38] sm:$0xff]
    %v2196 = vsel %vm558, %v2183, 0
    %2198 = vmatprep.subr.mxu0 0.0
    %2199 = vmatpush1.msra.mxu0 %v2187
    %2200 = vmatprep.subr.mxu0 0.0
    %2201 = vmatpush1.msra.mxu0 %v2188
    %2202 = vmatprep.subr.mxu0 0.0
    %2203 = vmatpush1.msra.mxu0 %v2189
    %2204 = vmatprep.subr.mxu0 0.0
    %2205 = vmatpush1.msra.mxu0 %v2190
    %2206 = vmatprep.subr.mxu0 0.0
    %2207 = vmatpush1.msra.mxu0 %v2191
    %2208 = vmatprep.subr.mxu0 0.0
    %2209 = vmatpush1.msra.mxu0 %v2192
    %2210 = vmatprep.subr.mxu0 0.0
    %2211 = vmatpush1.msra.mxu0 %v2193
    %2212 = vmatprep.subr.mxu0 0.0
    %2213 = vmatpush1.msra.mxu0 %v2194
    %2214 = vmatprep.subr.mxu0 0.0
    %2215 = vmatpush1.msra.mxu0 0.0
    %2216 = vmatprep.subr.mxu0 0.0
    %2217 = vmatpush1.msra.mxu0 0.0
    %2218 = vmatprep.subr.mxu0 0.0
    %2219 = vmatpush1.msra.mxu0 0.0
    %2220 = vmatprep.subr.mxu0 0.0
    %2221 = vmatpush1.msra.mxu0 0.0
    %2222 = vmatprep.subr.mxu0 0.0
    %2223 = vmatpush1.msra.mxu0 0.0
    %2224 = vmatprep.subr.mxu0 0.0
    %2225 = vmatpush1.msra.mxu0 0.0
    %2226 = vmatprep.subr.mxu0 0.0
    %2227 = vmatpush1.msra.mxu0 0.0
    %2228 = vmatprep.subr.mxu0 0.0
    %2229 = vmatpush1.msra.mxu0 0.0
    %2230 = vmatprep.subr.mxu0 0.0
    %2231 = vmatpush1.msra.mxu0 0.0
    %2232 = vmatprep.subr.mxu0 0.0
    %2233 = vmatpush1.msra.mxu0 0.0
    %2234 = vmatprep.subr.mxu0 0.0
    %2235 = vmatpush1.msra.mxu0 0.0
    %2236 = vmatprep.subr.mxu0 0.0
    %2237 = vmatpush1.msra.mxu0 0.0
    %2238 = vmatprep.subr.mxu0 0.0
    %2239 = vmatpush1.msra.mxu0 0.0
    %2240 = vmatprep.subr.mxu0 0.0
    %2241 = vmatpush1.msra.mxu0 0.0
    %2242 = vmatprep.subr.mxu0 0.0
    %2243 = vmatpush1.msra.mxu0 0.0
    %2244 = vmatprep.subr.mxu0 0.0
    %2245 = vmatpush1.msra.mxu0 0.0
    %2246 = vmatprep.subr.mxu0 0.0
    %2247 = vmatpush1.msra.mxu0 0.0
    %2248 = vmatprep.subr.mxu0 0.0
    %2249 = vmatpush1.msra.mxu0 0.0
    %2250 = vmatprep.subr.mxu0 0.0
    %2251 = vmatpush1.msra.mxu0 0.0
    %2252 = vmatprep.subr.mxu0 0.0
    %2253 = vmatpush1.msra.mxu0 0.0
    %2254 = vmatprep.subr.mxu0 0.0
    %2255 = vmatpush1.msra.mxu0 0.0
    %2256 = vmatprep.subr.mxu0 0.0
    %2257 = vmatpush1.msra.mxu0 0.0
    %2258 = vmatprep.subr.mxu0 0.0
    %2259 = vmatpush1.msra.mxu0 0.0
    %2260 = vmatprep.subr.mxu0 0.0
    %2261 = vmatpush1.msra.mxu0 0.0
    %2262 = vmatprep.mubr.f32.mxu0 0.0
    %2263 = vmatmul.mubr.f32.gmra.mrb[0].mxu0 %v2196
    %v2264 = vpop.f32.mrb[0].mxu0
    %v2265 = vadd.f32 0.0, %v2264
    %v2266 = vpop.f32.mrb[0].mxu0
    %2267 = vdwg.mxu0
    %v2268 = vadd.f32 %v2110, %v2265
    %s2269 = scalar_lea.vmem %s6, 16
    %v2270 = vld [vmem:[%s2269] sm:$0x3]
    %v2272 = vsel %vm1009, %v2270, 0
    %2274 = vmatprep.subr.mxu0 0.0
    %2275 = vmatpush1.msra.mxu0 %v1002
    %2276 = vmatprep.subr.mxu0 0.0
    %2277 = vmatpush1.msra.mxu0 %v1003
    %2278 = vmatprep.subr.mxu0 0.0
    %2279 = vmatpush1.msra.mxu0 %v1004
    %2280 = vmatprep.subr.mxu0 0.0
    %2281 = vmatpush1.msra.mxu0 %v1005
    %2282 = vmatprep.subr.mxu0 0.0
    %2283 = vmatpush1.msra.mxu0 %v1006
    %2284 = vmatprep.subr.mxu0 0.0
    %2285 = vmatpush1.msra.mxu0 %v1007
    %2286 = vmatprep.subr.mxu0 0.0
    %2287 = vmatpush1.msra.mxu0 0.0
    %2288 = vmatprep.subr.mxu0 0.0
    %2289 = vmatpush1.msra.mxu0 0.0
    %2290 = vmatprep.subr.mxu0 0.0
    %2291 = vmatpush1.msra.mxu0 0.0
    %2292 = vmatprep.subr.mxu0 0.0
    %2293 = vmatpush1.msra.mxu0 0.0
    %2294 = vmatprep.subr.mxu0 0.0
    %2295 = vmatpush1.msra.mxu0 0.0
    %2296 = vmatprep.subr.mxu0 0.0
    %2297 = vmatpush1.msra.mxu0 0.0
    %2298 = vmatprep.subr.mxu0 0.0
    %2299 = vmatpush1.msra.mxu0 0.0
    %2300 = vmatprep.subr.mxu0 0.0
    %2301 = vmatpush1.msra.mxu0 0.0
    %2302 = vmatprep.subr.mxu0 0.0
    %2303 = vmatpush1.msra.mxu0 0.0
    %2304 = vmatprep.subr.mxu0 0.0
    %2305 = vmatpush1.msra.mxu0 0.0
    %2306 = vmatprep.subr.mxu0 0.0
    %2307 = vmatpush1.msra.mxu0 0.0
    %2308 = vmatprep.subr.mxu0 0.0
    %2309 = vmatpush1.msra.mxu0 0.0
    %2310 = vmatprep.subr.mxu0 0.0
    %2311 = vmatpush1.msra.mxu0 0.0
    %2312 = vmatprep.subr.mxu0 0.0
    %2313 = vmatpush1.msra.mxu0 0.0
    %2314 = vmatprep.subr.mxu0 0.0
    %2315 = vmatpush1.msra.mxu0 0.0
    %2316 = vmatprep.subr.mxu0 0.0
    %2317 = vmatpush1.msra.mxu0 0.0
    %2318 = vmatprep.subr.mxu0 0.0
    %2319 = vmatpush1.msra.mxu0 0.0
    %2320 = vmatprep.subr.mxu0 0.0
    %2321 = vmatpush1.msra.mxu0 0.0
    %2322 = vmatprep.subr.mxu0 0.0
    %2323 = vmatpush1.msra.mxu0 0.0
    %2324 = vmatprep.subr.mxu0 0.0
    %2325 = vmatpush1.msra.mxu0 0.0
    %2326 = vmatprep.subr.mxu0 0.0
    %2327 = vmatpush1.msra.mxu0 0.0
    %2328 = vmatprep.subr.mxu0 0.0
    %2329 = vmatpush1.msra.mxu0 0.0
    %2330 = vmatprep.subr.mxu0 0.0
    %2331 = vmatpush1.msra.mxu0 0.0
    %2332 = vmatprep.subr.mxu0 0.0
    %2333 = vmatpush1.msra.mxu0 0.0
    %2334 = vmatprep.subr.mxu0 0.0
    %2335 = vmatpush1.msra.mxu0 0.0
    %2336 = vmatprep.subr.mxu0 0.0
    %2337 = vmatpush1.msra.mxu0 0.0
    %2338 = vmatprep.mubr.f32.mxu0 0.0
    %2339 = vmatmul.mubr.f32.gmra.mrb[0].mxu0 %v2272
    %v2340 = vpop.f32.mrb[0].mxu0
    %v2341 = vadd.f32 0.0, %v2340
    %v2342 = vpop.f32.mrb[0].mxu0
    %2343 = vdwg.mxu0
    %s2344 = scalar_lea.vmem [#allocation5], 512
    %v2345 = vld [vmem:[%s2344] sm:$0xff]
    %v2346 = vld [vmem:[%s2344 + $0x8] sm:$0xff]
    %v2347 = vld [vmem:[%s2344 + $0x10] sm:$0xff]
    %v2348 = vld [vmem:[%s2344 + $0x18] sm:$0xff]
    %v2349 = vld [vmem:[%s2344 + $0x20] sm:$0xff]
    %v2350 = vld [vmem:[%s2344 + $0x28] sm:$0xff]
    %v2351 = vld [vmem:[%s2344 + $0x30] sm:$0xff]
    %v2352 = vld [vmem:[%s2344 + $0x38] sm:$0xff]
    %v2354 = vsel %vm558, %v2341, 0
    %2356 = vmatprep.subr.mxu0 0.0
    %2357 = vmatpush1.msra.mxu0 %v2345
    %2358 = vmatprep.subr.mxu0 0.0
    %2359 = vmatpush1.msra.mxu0 %v2346
    %2360 = vmatprep.subr.mxu0 0.0
    %2361 = vmatpush1.msra.mxu0 %v2347
    %2362 = vmatprep.subr.mxu0 0.0
    %2363 = vmatpush1.msra.mxu0 %v2348
    %2364 = vmatprep.subr.mxu0 0.0
    %2365 = vmatpush1.msra.mxu0 %v2349
    %2366 = vmatprep.subr.mxu0 0.0
    %2367 = vmatpush1.msra.mxu0 %v2350
    %2368 = vmatprep.subr.mxu0 0.0
    %2369 = vmatpush1.msra.mxu0 %v2351
    %2370 = vmatprep.subr.mxu0 0.0
    %2371 = vmatpush1.msra.mxu0 %v2352
    %2372 = vmatprep.subr.mxu0 0.0
    %2373 = vmatpush1.msra.mxu0 0.0
    %2374 = vmatprep.subr.mxu0 0.0
    %2375 = vmatpush1.msra.mxu0 0.0
    %2376 = vmatprep.subr.mxu0 0.0
    %2377 = vmatpush1.msra.mxu0 0.0
    %2378 = vmatprep.subr.mxu0 0.0
    %2379 = vmatpush1.msra.mxu0 0.0
    %2380 = vmatprep.subr.mxu0 0.0
    %2381 = vmatpush1.msra.mxu0 0.0
    %2382 = vmatprep.subr.mxu0 0.0
    %2383 = vmatpush1.msra.mxu0 0.0
    %2384 = vmatprep.subr.mxu0 0.0
    %2385 = vmatpush1.msra.mxu0 0.0
    %2386 = vmatprep.subr.mxu0 0.0
    %2387 = vmatpush1.msra.mxu0 0.0
    %2388 = vmatprep.subr.mxu0 0.0
    %2389 = vmatpush1.msra.mxu0 0.0
    %2390 = vmatprep.subr.mxu0 0.0
    %2391 = vmatpush1.msra.mxu0 0.0
    %2392 = vmatprep.subr.mxu0 0.0
    %2393 = vmatpush1.msra.mxu0 0.0
    %2394 = vmatprep.subr.mxu0 0.0
    %2395 = vmatpush1.msra.mxu0 0.0
    %2396 = vmatprep.subr.mxu0 0.0
    %2397 = vmatpush1.msra.mxu0 0.0
    %2398 = vmatprep.subr.mxu0 0.0
    %2399 = vmatpush1.msra.mxu0 0.0
    %2400 = vmatprep.subr.mxu0 0.0
    %2401 = vmatpush1.msra.mxu0 0.0
    %2402 = vmatprep.subr.mxu0 0.0
    %2403 = vmatpush1.msra.mxu0 0.0
    %2404 = vmatprep.subr.mxu0 0.0
    %2405 = vmatpush1.msra.mxu0 0.0
    %2406 = vmatprep.subr.mxu0 0.0
    %2407 = vmatpush1.msra.mxu0 0.0
    %2408 = vmatprep.subr.mxu0 0.0
    %2409 = vmatpush1.msra.mxu0 0.0
    %2410 = vmatprep.subr.mxu0 0.0
    %2411 = vmatpush1.msra.mxu0 0.0
    %2412 = vmatprep.subr.mxu0 0.0
    %2413 = vmatpush1.msra.mxu0 0.0
    %2414 = vmatprep.subr.mxu0 0.0
    %2415 = vmatpush1.msra.mxu0 0.0
    %2416 = vmatprep.subr.mxu0 0.0
    %2417 = vmatpush1.msra.mxu0 0.0
    %2418 = vmatprep.subr.mxu0 0.0
    %2419 = vmatpush1.msra.mxu0 0.0
    %2420 = vmatprep.mubr.f32.mxu0 0.0
    %2421 = vmatmul.mubr.f32.gmra.mrb[0].mxu0 %v2354
    %v2422 = vpop.f32.mrb[0].mxu0
    %v2423 = vadd.f32 0.0, %v2422
    %v2424 = vpop.f32.mrb[0].mxu0
    %2425 = vdwg.mxu0
    %v2426 = vadd.f32 %v2268, %v2423
    %s2427 = scalar_lea.vmem %s6, 18
    %v2428 = vld [vmem:[%s2427] sm:$0x3]
    %v2430 = vsel %vm1009, %v2428, 0
    %2432 = vmatprep.subr.mxu0 0.0
    %2433 = vmatpush1.msra.mxu0 %v1002
    %2434 = vmatprep.subr.mxu0 0.0
    %2435 = vmatpush1.msra.mxu0 %v1003
    %2436 = vmatprep.subr.mxu0 0.0
    %2437 = vmatpush1.msra.mxu0 %v1004
    %2438 = vmatprep.subr.mxu0 0.0
    %2439 = vmatpush1.msra.mxu0 %v1005
    %2440 = vmatprep.subr.mxu0 0.0
    %2441 = vmatpush1.msra.mxu0 %v1006
    %2442 = vmatprep.subr.mxu0 0.0
    %2443 = vmatpush1.msra.mxu0 %v1007
    %2444 = vmatprep.subr.mxu0 0.0
    %2445 = vmatpush1.msra.mxu0 0.0
    %2446 = vmatprep.subr.mxu0 0.0
    %2447 = vmatpush1.msra.mxu0 0.0
    %2448 = vmatprep.subr.mxu0 0.0
    %2449 = vmatpush1.msra.mxu0 0.0
    %2450 = vmatprep.subr.mxu0 0.0
    %2451 = vmatpush1.msra.mxu0 0.0
    %2452 = vmatprep.subr.mxu0 0.0
    %2453 = vmatpush1.msra.mxu0 0.0
    %2454 = vmatprep.subr.mxu0 0.0
    %2455 = vmatpush1.msra.mxu0 0.0
    %2456 = vmatprep.subr.mxu0 0.0
    %2457 = vmatpush1.msra.mxu0 0.0
    %2458 = vmatprep.subr.mxu0 0.0
    %2459 = vmatpush1.msra.mxu0 0.0
    %2460 = vmatprep.subr.mxu0 0.0
    %2461 = vmatpush1.msra.mxu0 0.0
    %2462 = vmatprep.subr.mxu0 0.0
    %2463 = vmatpush1.msra.mxu0 0.0
    %2464 = vmatprep.subr.mxu0 0.0
    %2465 = vmatpush1.msra.mxu0 0.0
    %2466 = vmatprep.subr.mxu0 0.0
    %2467 = vmatpush1.msra.mxu0 0.0
    %2468 = vmatprep.subr.mxu0 0.0
    %2469 = vmatpush1.msra.mxu0 0.0
    %2470 = vmatprep.subr.mxu0 0.0
    %2471 = vmatpush1.msra.mxu0 0.0
    %2472 = vmatprep.subr.mxu0 0.0
    %2473 = vmatpush1.msra.mxu0 0.0
    %2474 = vmatprep.subr.mxu0 0.0
    %2475 = vmatpush1.msra.mxu0 0.0
    %2476 = vmatprep.subr.mxu0 0.0
    %2477 = vmatpush1.msra.mxu0 0.0
    %2478 = vmatprep.subr.mxu0 0.0
    %2479 = vmatpush1.msra.mxu0 0.0
    %2480 = vmatprep.subr.mxu0 0.0
    %2481 = vmatpush1.msra.mxu0 0.0
    %2482 = vmatprep.subr.mxu0 0.0
    %2483 = vmatpush1.msra.mxu0 0.0
    %2484 = vmatprep.subr.mxu0 0.0
    %2485 = vmatpush1.msra.mxu0 0.0
    %2486 = vmatprep.subr.mxu0 0.0
    %2487 = vmatpush1.msra.mxu0 0.0
    %2488 = vmatprep.subr.mxu0 0.0
    %2489 = vmatpush1.msra.mxu0 0.0
    %2490 = vmatprep.subr.mxu0 0.0
    %2491 = vmatpush1.msra.mxu0 0.0
    %2492 = vmatprep.subr.mxu0 0.0
    %2493 = vmatpush1.msra.mxu0 0.0
    %2494 = vmatprep.subr.mxu0 0.0
    %2495 = vmatpush1.msra.mxu0 0.0
    %2496 = vmatprep.mubr.f32.mxu0 0.0
    %2497 = vmatmul.mubr.f32.gmra.mrb[0].mxu0 %v2430
    %v2498 = vpop.f32.mrb[0].mxu0
    %v2499 = vadd.f32 0.0, %v2498
    %v2500 = vpop.f32.mrb[0].mxu0
    %2501 = vdwg.mxu0
    %s2502 = scalar_lea.vmem [#allocation5], 576
    %v2503 = vld [vmem:[%s2502] sm:$0xff]
    %v2504 = vld [vmem:[%s2502 + $0x8] sm:$0xff]
    %v2505 = vld [vmem:[%s2502 + $0x10] sm:$0xff]
    %v2506 = vld [vmem:[%s2502 + $0x18] sm:$0xff]
    %v2507 = vld [vmem:[%s2502 + $0x20] sm:$0xff]
    %v2508 = vld [vmem:[%s2502 + $0x28] sm:$0xff]
    %v2509 = vld [vmem:[%s2502 + $0x30] sm:$0xff]
    %v2510 = vld [vmem:[%s2502 + $0x38] sm:$0xff]
    %v2512 = vsel %vm558, %v2499, 0
    %2514 = vmatprep.subr.mxu0 0.0
    %2515 = vmatpush1.msra.mxu0 %v2503
    %2516 = vmatprep.subr.mxu0 0.0
    %2517 = vmatpush1.msra.mxu0 %v2504
    %2518 = vmatprep.subr.mxu0 0.0
    %2519 = vmatpush1.msra.mxu0 %v2505
    %2520 = vmatprep.subr.mxu0 0.0
    %2521 = vmatpush1.msra.mxu0 %v2506
    %2522 = vmatprep.subr.mxu0 0.0
    %2523 = vmatpush1.msra.mxu0 %v2507
    %2524 = vmatprep.subr.mxu0 0.0
    %2525 = vmatpush1.msra.mxu0 %v2508
    %2526 = vmatprep.subr.mxu0 0.0
    %2527 = vmatpush1.msra.mxu0 %v2509
    %2528 = vmatprep.subr.mxu0 0.0
    %2529 = vmatpush1.msra.mxu0 %v2510
    %2530 = vmatprep.subr.mxu0 0.0
    %2531 = vmatpush1.msra.mxu0 0.0
    %2532 = vmatprep.subr.mxu0 0.0
    %2533 = vmatpush1.msra.mxu0 0.0
    %2534 = vmatprep.subr.mxu0 0.0
    %2535 = vmatpush1.msra.mxu0 0.0
    %2536 = vmatprep.subr.mxu0 0.0
    %2537 = vmatpush1.msra.mxu0 0.0
    %2538 = vmatprep.subr.mxu0 0.0
    %2539 = vmatpush1.msra.mxu0 0.0
    %2540 = vmatprep.subr.mxu0 0.0
    %2541 = vmatpush1.msra.mxu0 0.0
    %2542 = vmatprep.subr.mxu0 0.0
    %2543 = vmatpush1.msra.mxu0 0.0
    %2544 = vmatprep.subr.mxu0 0.0
    %2545 = vmatpush1.msra.mxu0 0.0
    %2546 = vmatprep.subr.mxu0 0.0
    %2547 = vmatpush1.msra.mxu0 0.0
    %2548 = vmatprep.subr.mxu0 0.0
    %2549 = vmatpush1.msra.mxu0 0.0
    %2550 = vmatprep.subr.mxu0 0.0
    %2551 = vmatpush1.msra.mxu0 0.0
    %2552 = vmatprep.subr.mxu0 0.0
    %2553 = vmatpush1.msra.mxu0 0.0
    %2554 = vmatprep.subr.mxu0 0.0
    %2555 = vmatpush1.msra.mxu0 0.0
    %2556 = vmatprep.subr.mxu0 0.0
    %2557 = vmatpush1.msra.mxu0 0.0
    %2558 = vmatprep.subr.mxu0 0.0
    %2559 = vmatpush1.msra.mxu0 0.0
    %2560 = vmatprep.subr.mxu0 0.0
    %2561 = vmatpush1.msra.mxu0 0.0
    %2562 = vmatprep.subr.mxu0 0.0
    %2563 = vmatpush1.msra.mxu0 0.0
    %2564 = vmatprep.subr.mxu0 0.0
    %2565 = vmatpush1.msra.mxu0 0.0
    %2566 = vmatprep.subr.mxu0 0.0
    %2567 = vmatpush1.msra.mxu0 0.0
    %2568 = vmatprep.subr.mxu0 0.0
    %2569 = vmatpush1.msra.mxu0 0.0
    %2570 = vmatprep.subr.mxu0 0.0
    %2571 = vmatpush1.msra.mxu0 0.0
    %2572 = vmatprep.subr.mxu0 0.0
    %2573 = vmatpush1.msra.mxu0 0.0
    %2574 = vmatprep.subr.mxu0 0.0
    %2575 = vmatpush1.msra.mxu0 0.0
    %2576 = vmatprep.subr.mxu0 0.0
    %2577 = vmatpush1.msra.mxu0 0.0
    %2578 = vmatprep.mubr.f32.mxu0 0.0
    %2579 = vmatmul.mubr.f32.gmra.mrb[0].mxu0 %v2512
    %v2580 = vpop.f32.mrb[0].mxu0
    %v2581 = vadd.f32 0.0, %v2580
    %v2582 = vpop.f32.mrb[0].mxu0
    %2583 = vdwg.mxu0
    %v2584 = vadd.f32 %v2426, %v2581
    %s2585 = scalar_lea.vmem %s6, 20
    %v2586 = vld [vmem:[%s2585] sm:$0x3]
    %v2588 = vsel %vm1009, %v2586, 0
    %2590 = vmatprep.subr.mxu0 0.0
    %2591 = vmatpush1.msra.mxu0 %v1002
    %2592 = vmatprep.subr.mxu0 0.0
    %2593 = vmatpush1.msra.mxu0 %v1003
    %2594 = vmatprep.subr.mxu0 0.0
    %2595 = vmatpush1.msra.mxu0 %v1004
    %2596 = vmatprep.subr.mxu0 0.0
    %2597 = vmatpush1.msra.mxu0 %v1005
    %2598 = vmatprep.subr.mxu0 0.0
    %2599 = vmatpush1.msra.mxu0 %v1006
    %2600 = vmatprep.subr.mxu0 0.0
    %2601 = vmatpush1.msra.mxu0 %v1007
    %2602 = vmatprep.subr.mxu0 0.0
    %2603 = vmatpush1.msra.mxu0 0.0
    %2604 = vmatprep.subr.mxu0 0.0
    %2605 = vmatpush1.msra.mxu0 0.0
    %2606 = vmatprep.subr.mxu0 0.0
    %2607 = vmatpush1.msra.mxu0 0.0
    %2608 = vmatprep.subr.mxu0 0.0
    %2609 = vmatpush1.msra.mxu0 0.0
    %2610 = vmatprep.subr.mxu0 0.0
    %2611 = vmatpush1.msra.mxu0 0.0
    %2612 = vmatprep.subr.mxu0 0.0
    %2613 = vmatpush1.msra.mxu0 0.0
    %2614 = vmatprep.subr.mxu0 0.0
    %2615 = vmatpush1.msra.mxu0 0.0
    %2616 = vmatprep.subr.mxu0 0.0
    %2617 = vmatpush1.msra.mxu0 0.0
    %2618 = vmatprep.subr.mxu0 0.0
    %2619 = vmatpush1.msra.mxu0 0.0
    %2620 = vmatprep.subr.mxu0 0.0
    %2621 = vmatpush1.msra.mxu0 0.0
    %2622 = vmatprep.subr.mxu0 0.0
    %2623 = vmatpush1.msra.mxu0 0.0
    %2624 = vmatprep.subr.mxu0 0.0
    %2625 = vmatpush1.msra.mxu0 0.0
    %2626 = vmatprep.subr.mxu0 0.0
    %2627 = vmatpush1.msra.mxu0 0.0
    %2628 = vmatprep.subr.mxu0 0.0
    %2629 = vmatpush1.msra.mxu0 0.0
    %2630 = vmatprep.subr.mxu0 0.0
    %2631 = vmatpush1.msra.mxu0 0.0
    %2632 = vmatprep.subr.mxu0 0.0
    %2633 = vmatpush1.msra.mxu0 0.0
    %2634 = vmatprep.subr.mxu0 0.0
    %2635 = vmatpush1.msra.mxu0 0.0
    %2636 = vmatprep.subr.mxu0 0.0
    %2637 = vmatpush1.msra.mxu0 0.0
    %2638 = vmatprep.subr.mxu0 0.0
    %2639 = vmatpush1.msra.mxu0 0.0
    %2640 = vmatprep.subr.mxu0 0.0
    %2641 = vmatpush1.msra.mxu0 0.0
    %2642 = vmatprep.subr.mxu0 0.0
    %2643 = vmatpush1.msra.mxu0 0.0
    %2644 = vmatprep.subr.mxu0 0.0
    %2645 = vmatpush1.msra.mxu0 0.0
    %2646 = vmatprep.subr.mxu0 0.0
    %2647 = vmatpush1.msra.mxu0 0.0
    %2648 = vmatprep.subr.mxu0 0.0
    %2649 = vmatpush1.msra.mxu0 0.0
    %2650 = vmatprep.subr.mxu0 0.0
    %2651 = vmatpush1.msra.mxu0 0.0
    %2652 = vmatprep.subr.mxu0 0.0
    %2653 = vmatpush1.msra.mxu0 0.0
    %2654 = vmatprep.mubr.f32.mxu0 0.0
    %2655 = vmatmul.mubr.f32.gmra.mrb[0].mxu0 %v2588
    %v2656 = vpop.f32.mrb[0].mxu0
    %v2657 = vadd.f32 0.0, %v2656
    %v2658 = vpop.f32.mrb[0].mxu0
    %2659 = vdwg.mxu0
    %s2660 = scalar_lea.vmem [#allocation5], 640
    %v2661 = vld [vmem:[%s2660] sm:$0xff]
    %v2662 = vld [vmem:[%s2660 + $0x8] sm:$0xff]
    %v2663 = vld [vmem:[%s2660 + $0x10] sm:$0xff]
    %v2664 = vld [vmem:[%s2660 + $0x18] sm:$0xff]
    %v2665 = vld [vmem:[%s2660 + $0x20] sm:$0xff]
    %v2666 = vld [vmem:[%s2660 + $0x28] sm:$0xff]
    %v2667 = vld [vmem:[%s2660 + $0x30] sm:$0xff]
    %v2668 = vld [vmem:[%s2660 + $0x38] sm:$0xff]
    %v2670 = vsel %vm558, %v2657, 0
    %2672 = vmatprep.subr.mxu0 0.0
    %2673 = vmatpush1.msra.mxu0 %v2661
    %2674 = vmatprep.subr.mxu0 0.0
    %2675 = vmatpush1.msra.mxu0 %v2662
    %2676 = vmatprep.subr.mxu0 0.0
    %2677 = vmatpush1.msra.mxu0 %v2663
    %2678 = vmatprep.subr.mxu0 0.0
    %2679 = vmatpush1.msra.mxu0 %v2664
    %2680 = vmatprep.subr.mxu0 0.0
    %2681 = vmatpush1.msra.mxu0 %v2665
    %2682 = vmatprep.subr.mxu0 0.0
    %2683 = vmatpush1.msra.mxu0 %v2666
    %2684 = vmatprep.subr.mxu0 0.0
    %2685 = vmatpush1.msra.mxu0 %v2667
    %2686 = vmatprep.subr.mxu0 0.0
    %2687 = vmatpush1.msra.mxu0 %v2668
    %2688 = vmatprep.subr.mxu0 0.0
    %2689 = vmatpush1.msra.mxu0 0.0
    %2690 = vmatprep.subr.mxu0 0.0
    %2691 = vmatpush1.msra.mxu0 0.0
    %2692 = vmatprep.subr.mxu0 0.0
    %2693 = vmatpush1.msra.mxu0 0.0
    %2694 = vmatprep.subr.mxu0 0.0
    %2695 = vmatpush1.msra.mxu0 0.0
    %2696 = vmatprep.subr.mxu0 0.0
    %2697 = vmatpush1.msra.mxu0 0.0
    %2698 = vmatprep.subr.mxu0 0.0
    %2699 = vmatpush1.msra.mxu0 0.0
    %2700 = vmatprep.subr.mxu0 0.0
    %2701 = vmatpush1.msra.mxu0 0.0
    %2702 = vmatprep.subr.mxu0 0.0
    %2703 = vmatpush1.msra.mxu0 0.0
    %2704 = vmatprep.subr.mxu0 0.0
    %2705 = vmatpush1.msra.mxu0 0.0
    %2706 = vmatprep.subr.mxu0 0.0
    %2707 = vmatpush1.msra.mxu0 0.0
    %2708 = vmatprep.subr.mxu0 0.0
    %2709 = vmatpush1.msra.mxu0 0.0
    %2710 = vmatprep.subr.mxu0 0.0
    %2711 = vmatpush1.msra.mxu0 0.0
    %2712 = vmatprep.subr.mxu0 0.0
    %2713 = vmatpush1.msra.mxu0 0.0
    %2714 = vmatprep.subr.mxu0 0.0
    %2715 = vmatpush1.msra.mxu0 0.0
    %2716 = vmatprep.subr.mxu0 0.0
    %2717 = vmatpush1.msra.mxu0 0.0
    %2718 = vmatprep.subr.mxu0 0.0
    %2719 = vmatpush1.msra.mxu0 0.0
    %2720 = vmatprep.subr.mxu0 0.0
    %2721 = vmatpush1.msra.mxu0 0.0
    %2722 = vmatprep.subr.mxu0 0.0
    %2723 = vmatpush1.msra.mxu0 0.0
    %2724 = vmatprep.subr.mxu0 0.0
    %2725 = vmatpush1.msra.mxu0 0.0
    %2726 = vmatprep.subr.mxu0 0.0
    %2727 = vmatpush1.msra.mxu0 0.0
    %2728 = vmatprep.subr.mxu0 0.0
    %2729 = vmatpush1.msra.mxu0 0.0
    %2730 = vmatprep.subr.mxu0 0.0
    %2731 = vmatpush1.msra.mxu0 0.0
    %2732 = vmatprep.subr.mxu0 0.0
    %2733 = vmatpush1.msra.mxu0 0.0
    %2734 = vmatprep.subr.mxu0 0.0
    %2735 = vmatpush1.msra.mxu0 0.0
    %2736 = vmatprep.mubr.f32.mxu0 0.0
    %2737 = vmatmul.mubr.f32.gmra.mrb[0].mxu0 %v2670
    %v2738 = vpop.f32.mrb[0].mxu0
    %v2739 = vadd.f32 0.0, %v2738
    %v2740 = vpop.f32.mrb[0].mxu0
    %2741 = vdwg.mxu0
    %v2742 = vadd.f32 %v2584, %v2739
    %v2743 = vld [vmem:[%s8] sm:$0x1]
    %v2745 = vlaneseq
    %v2746 = vshrl.u32 %v2745, 7
    %v2747 = vsub.s32 0, %v2746
    %v2748 = vrot.slane %v2743, %v2747
    %v2750 = vadd.f32 %v2742, %v2748
    %v2751 = vmax.f32 %v2750, 0.0
    %v2752 = vld [vmem:[%s9] sm:$0x1]
    %v2754 = vlaneseq
    %v2755 = vshrl.u32 %v2754, 7
    %v2756 = vsub.s32 0, %v2755
    %v2757 = vrot.slane %v2752, %v2756
    %v2759 = vmul.f32 %v2751, %v2757
    %vm2760 = vcmask 1041408
    %v2761 = vsel %vm2760, %v2759, 0.0
    %2762 = vadd.xlane.f32.xlu0 %v2761
    %v2763 = vpop.xlane.xlu0 %2762
    %v2764 = vld [vmem:[#allocation2] sm:$0x1]
    %v2766 = vlaneseq
    %v2767 = vshrl.u32 %v2766, 7
    %v2768 = vsub.s32 0, %v2767
    %v2769 = vrot.slane %v2764, %v2768
    %v2771 = vadd.f32 %v2763, %v2769
    %v2772 = vsub.f32 0.0, %v2771
    %v2773 = vmul.f32 %v2772, 1.442695
    %v2774 = vpow.pop %v2773
    %v2775 = vadd.f32 %v2774, 1.0
    %v2776 = vrcp.pop %v2775
    %v2777 = vmul.f32 1.0, %v2776
    %vm2778 = vcmask 1024
    %2779 = vst.msk [vmem:[%s11] sm:$0x3] %vm2778, %v2777
    // Predicated region
    $region54: #{tpu_custom_call.1} parent=1 // pred_check
      _
    $region55: #{tpu_custom_call.1} parent=1 // pred_check_branch
      %2781 = sbr.rel (0) target = $region57
    $region56: #{tpu_custom_call.1} parent=1 // pred_region
      _
    $region57: #{tpu_custom_call.1} parent=1 // pred_fallthru
      _
    // Predicated region
    $region58: #{tpu_custom_call.1} parent=1 // pred_check
      _
    $region59: #{tpu_custom_call.1} parent=1 // pred_check_branch
      %2783 = sbr.rel (0) target = $region61
    $region60: #{tpu_custom_call.1} parent=1 // pred_region
      _
    $region61: #{tpu_custom_call.1} parent=1 // pred_fallthru
      _
    %2784 = vsyncpa [#allocation4], 1
    %2785 = vsyncpa [#allocation6], 1

</llo_original>
